<compile_context>
chip_gen: v7x
topology: tpu7x:2x2x1
jax: 0.10.0
libtpu: 0.0.40
codegen_flags: <defaults>
</compile_context>

<pallas_src>
import functools
import math

import jax
import jax.numpy as jnp
from jax.experimental import pallas as pl
from jax.experimental.pallas import tpu as pltpu


# ----------------------------------------------------------------------------
# Fused decoder stack + after_norm + output_layer: grid = (batch_block, layer)
# ----------------------------------------------------------------------------
def _decoder_stack_kernel(
    x_ref, mem_ref, tbias_ref, tmul_ref, mbias_ref, mmul_ref,
    sa_qkv_w_ref, sa_qkv_b_ref, sa_o_w_ref, sa_o_b_ref,
    ca_q_w_ref, ca_q_b_ref, ca_kv_w_ref, ca_kv_b_ref, ca_o_w_ref, ca_o_b_ref,
    ffn_w1_ref, ffn_b1_ref, ffn_w2_ref, ffn_b2_ref, ln_ref,
    after_gb_ref, out_w_ref, out_b_ref,
    logits_ref,
    x_state,
    *, num_heads, num_layers, bb, eps_layer, eps_final, compute_dtype):
    layer = pl.program_id(1)

    Tq = x_ref.shape[1]
    Tk = mem_ref.shape[1]
    D = x_ref.shape[2]
    dk = D // num_heads
    M = bb * Tq                      # fused (batch * time) matmul rows

    # Seed the VMEM-resident residual stream once per batch block.
    @pl.when(layer == 0)
    def _():
        x_state[...] = x_ref[...].astype(jnp.float32).reshape(M, D)

    ln = ln_ref[0]                   # (8, D): ln1_g, ln1_b, ln2_g, ln2_b, ln3_g, ln3_b, 0, 0
    tbias = tbias_ref[...]           # (Bb, 1, Tq) additive: 0 valid, -1e30 invalid
    tmul = tmul_ref[...]             # (Bb, 1, Tq) {0, 1}
    mbias = mbias_ref[...]           # (Bb, 1, Tk)
    mmul = mmul_ref[...]             # (Bb, 1, Tk)

    def layer_norm(x, g, b, eps):    # x (M, D) f32; g, b (1, D) f32
        mean = jnp.mean(x, axis=-1, keepdims=True)
        xc = x - mean
        var = jnp.mean(xc * xc, axis=-1, keepdims=True)
        return xc * jax.lax.rsqrt(var + eps) * g + b

    def attention(q, k, v, bias, mul, Tkv):
        # q: (M, D); k, v: (Bb*Tkv, D) in compute_dtype. bias/mul: (Bb, 1, Tkv) f32.
        # Per-head context built in vregs and concatenated along lanes
        # (no VMEM scratch round trip); score matmul contracts dim 1 of both
        # operands (no explicit transpose).
        ctx_rows = []
        for b in range(bb):
            qb = q[b * Tq:(b + 1) * Tq]                       # (Tq, D)
            kb = k[b * Tkv:(b + 1) * Tkv]                     # (Tkv, D)
            vb = v[b * Tkv:(b + 1) * Tkv]
            bias_b = jnp.broadcast_to(bias[b], (Tq, Tkv))     # one broadcast / batch
            mul_b = jnp.broadcast_to(mul[b], (Tq, Tkv))
            head_ctx = []
            for h in range(num_heads):
                sl = slice(h * dk, (h + 1) * dk)
                s = jax.lax.dot_general(
                    qb[:, sl], kb[:, sl],
                    dimension_numbers=(((1,), (1,)), ((), ())),
                    preferred_element_type=jnp.float32)       # (Tq, Tkv)
                s = s + bias_b                                 # key-padding mask
                mx = jnp.max(s, axis=-1, keepdims=True)
                p = jnp.exp(s - mx)
                denom = jnp.sum(p, axis=-1, keepdims=True)    # >= 1, always finite
                p = p * pl.reciprocal(denom, approx=True) * mul_b
                head_ctx.append(jnp.dot(p.astype(compute_dtype), vb[:, sl],
                                        preferred_element_type=jnp.float32))
            ctx_rows.append(jnp.concatenate(head_ctx, axis=-1))   # (Tq, D)
        return jnp.concatenate(ctx_rows, axis=0)                  # (M, D) f32

    x = x_state[...]                                               # (M, D) f32

    # ---- self-attention sub-layer (pre-norm, residual) ----------------------
    xn = layer_norm(x, ln[0:1], ln[1:2], eps_layer).astype(compute_dtype)
    qkv = (jnp.dot(xn, sa_qkv_w_ref[0], preferred_element_type=jnp.float32)
           + sa_qkv_b_ref[0])                                      # (M, 3D) f32
    qkv_c = qkv.astype(compute_dtype)
    ctx = attention(qkv_c[:, :D], qkv_c[:, D:2 * D], qkv_c[:, 2 * D:],
                    tbias, tmul, Tq)
    x = x + (jnp.dot(ctx.astype(compute_dtype), sa_o_w_ref[0],
                     preferred_element_type=jnp.float32) + sa_o_b_ref[0])

    # ---- cross-attention sub-layer ------------------------------------------
    xn = layer_norm(x, ln[2:3], ln[3:4], eps_layer).astype(compute_dtype)
    q = (jnp.dot(xn, ca_q_w_ref[0], preferred_element_type=jnp.float32)
         + ca_q_b_ref[0])                                          # (M, D) f32
    mem = mem_ref[...].reshape(bb * Tk, D)                         # (Bb*Tk, D) bf16
    kv = (jnp.dot(mem, ca_kv_w_ref[0], preferred_element_type=jnp.float32)
          + ca_kv_b_ref[0])                                        # (Bb*Tk, 2D) f32
    kv_c = kv.astype(compute_dtype)
    ctx = attention(q.astype(compute_dtype), kv_c[:, :D], kv_c[:, D:],
                    mbias, mmul, Tk)
    x = x + (jnp.dot(ctx.astype(compute_dtype), ca_o_w_ref[0],
                     preferred_element_type=jnp.float32) + ca_o_b_ref[0])

    # ---- position-wise feed-forward (hidden never leaves VMEM) --------------
    xn = layer_norm(x, ln[4:5], ln[5:6], eps_layer).astype(compute_dtype)
    h = (jnp.dot(xn, ffn_w1_ref[0], preferred_element_type=jnp.float32)
         + ffn_b1_ref[0])
    h = jnp.maximum(h, 0.0).astype(compute_dtype)
    x = x + (jnp.dot(h, ffn_w2_ref[0], preferred_element_type=jnp.float32)
             + ffn_b2_ref[0])

    x_state[...] = x

    # ---- fused after_norm + output_layer on the last layer -------------------
    # TODO(synk): for very large vocabularies split this projection into its own
    # pallas_call with an N-tiled grid instead of keeping (D, Vpad) resident.
    @pl.when(layer == num_layers - 1)
    def _():
        g = after_gb_ref[0:1]
        bta = after_gb_ref[1:2]
        xf = layer_norm(x, g, bta, eps_final).astype(compute_dtype)
        logits = (jnp.dot(xf, out_w_ref[...], preferred_element_type=jnp.float32)
                  + out_b_ref[...])                                # (M, Vpad) f32
        logits_ref[...] = logits.reshape(bb, Tq, -1).astype(logits_ref.dtype)


# ----------------------------------------------------------------------------
# Parameters
# ----------------------------------------------------------------------------
def _init_linear(key, din, dout):
    k1, k2 = jax.random.split(key)
    w = jax.random.normal(k1, (din, dout), jnp.float32) * (1.0 / math.sqrt(din))
    b = jax.random.normal(k2, (dout,), jnp.float32) * 0.01
    return w, b


def init_raw_params(key, vocab_size, attention_dim, linear_units, num_blocks):
    """Per-layer f32 parameters mirroring the torch module structure."""
    D, F = attention_dim, linear_units
    keys = jax.random.split(key, num_blocks + 1)
    layers = []
    for lk in keys[:-1]:
        ks = jax.random.split(lk, 10)
        sa = dict(zip(("wq", "bq"), _init_linear(ks[0], D, D)))
        sa.update(dict(zip(("wk", "bk"), _init_linear(ks[1], D, D))))
        sa.update(dict(zip(("wv", "bv"), _init_linear(ks[2], D, D))))
        sa.update(dict(zip(("wo", "bo"), _init_linear(ks[3], D, D))))
        ca = dict(zip(("wq", "bq"), _init_linear(ks[4], D, D)))
        ca.update(dict(zip(("wk", "bk"), _init_linear(ks[5], D, D))))
        ca.update(dict(zip(("wv", "bv"), _init_linear(ks[6], D, D))))
        ca.update(dict(zip(("wo", "bo"), _init_linear(ks[7], D, D))))
        w1, b1 = _init_linear(ks[8], D, F)
        w2, b2 = _init_linear(ks[9], F, D)
        layers.append(dict(
            self_attn=sa, src_attn=ca,
            ffn_w1=w1, ffn_b1=b1, ffn_w2=w2, ffn_b2=b2,
            ln1_g=jnp.ones((D,), jnp.float32), ln1_b=jnp.zeros((D,), jnp.float32),
            ln2_g=jnp.ones((D,), jnp.float32), ln2_b=jnp.zeros((D,), jnp.float32),
            ln3_g=jnp.ones((D,), jnp.float32), ln3_b=jnp.zeros((D,), jnp.float32),
        ))
    out_w, out_b = _init_linear(keys[-1], D, vocab_size)
    return dict(
        layers=layers,
        after_g=jnp.ones((D,), jnp.float32), after_b=jnp.zeros((D,), jnp.float32),
        out_w=out_w, out_b=out_b,
    )


def prepare_params(raw, num_heads, lane=128):
    """Stack per-layer weights, fold 1/sqrt(dk) into Wq/bq, cast weight matrices
    to bf16 (biases / LN params stay f32), pad vocab to a multiple of 128."""
    layers = raw["layers"]
    D = layers[0]["ffn_w1"].shape[0]
    dk = D // num_heads
    scale = 1.0 / math.sqrt(dk)
    wdt = jnp.bfloat16

    def stack(fn, dtype):
        return jnp.stack([fn(lp) for lp in layers], axis=0).astype(dtype)

    p = dict(
        sa_qkv_w=stack(lambda lp: jnp.concatenate(
            [lp["self_attn"]["wq"] * scale, lp["self_attn"]["wk"],
             lp["self_attn"]["wv"]], axis=1), wdt),
        sa_qkv_b=stack(lambda lp: jnp.concatenate(
            [lp["self_attn"]["bq"] * scale, lp["self_attn"]["bk"],
             lp["self_attn"]["bv"]])[None, :], jnp.float32),
        sa_o_w=stack(lambda lp: lp["self_attn"]["wo"], wdt),
        sa_o_b=stack(lambda lp: lp["self_attn"]["bo"][None, :], jnp.float32),
        ca_q_w=stack(lambda lp: lp["src_attn"]["wq"] * scale, wdt),
        ca_q_b=stack(lambda lp: lp["src_attn"]["bq"][None, :] * scale, jnp.float32),
        ca_kv_w=stack(lambda lp: jnp.concatenate(
            [lp["src_attn"]["wk"], lp["src_attn"]["wv"]], axis=1), wdt),
        ca_kv_b=stack(lambda lp: jnp.concatenate(
            [lp["src_attn"]["bk"], lp["src_attn"]["bv"]])[None, :], jnp.float32),
        ca_o_w=stack(lambda lp: lp["src_attn"]["wo"], wdt),
        ca_o_b=stack(lambda lp: lp["src_attn"]["bo"][None, :], jnp.float32),
        ffn_w1=stack(lambda lp: lp["ffn_w1"], wdt),
        ffn_b1=stack(lambda lp: lp["ffn_b1"][None, :], jnp.float32),
        ffn_w2=stack(lambda lp: lp["ffn_w2"], wdt),
        ffn_b2=stack(lambda lp: lp["ffn_b2"][None, :], jnp.float32),
        ln_gb=stack(lambda lp: jnp.stack(
            [lp["ln1_g"], lp["ln1_b"], lp["ln2_g"], lp["ln2_b"],
             lp["ln3_g"], lp["ln3_b"],
             jnp.zeros_like(lp["ln1_g"]), jnp.zeros_like(lp["ln1_g"])]),
            jnp.float32),
    )

    vocab = raw["out_w"].shape[1]
    vpad = ((vocab + lane - 1) // lane) * lane
    out_w = jnp.zeros((D, vpad), jnp.float32).at[:, :vocab].set(raw["out_w"])
    out_b = jnp.zeros((1, vpad), jnp.float32).at[:, :vocab].set(raw["out_b"][None, :])
    p.update(
        after_gb=jnp.stack([raw["after_g"], raw["after_b"]], axis=0).astype(jnp.float32),
        out_w=out_w.astype(wdt), out_b=out_b,
    )
    return p


def _pick_batch_block(batch, t_out, t_in):
    """Largest divisor of batch targeting >=128 fused-M rows while keeping the
    per-block activations modest.  (On v7x one may prefer batch//Bb >= 2 so both
    TensorCores get work on the 'parallel' axis.)"""
    best = 1
    for bb in range(1, batch + 1):
        if batch % bb:
            continue
        if bb * max(t_out, t_in) > 1024:
            break
        best = bb
        if bb * t_out >= 128:
            break
    return best


# ----------------------------------------------------------------------------
# Forward (mirrors CIFDecoderSAN.forward, embeds_id=-1, use_output_layer=True)
# ----------------------------------------------------------------------------
def cif_decoder_san_forward(params, hs_pad, hlens, ys_in_pad, ys_in_lens,
                            *, num_heads, vocab_size):
    B, Tin, D = hs_pad.shape
    Tout = ys_in_pad.shape[1]
    L = params["sa_qkv_w"].shape[0]
    F = params["ffn_w1"].shape[2]
    Vpad = params["out_w"].shape[1]

    # ~make_pad_mask(...)[:, None, :]  (True = valid position)
    tgt_valid = jnp.arange(Tout)[None, :] < ys_in_lens[:, None]     # (B, Tout)
    mem_valid = jnp.arange(Tin)[None, :] < hlens[:, None]           # (B, Tin)
    # additive bias (0 valid, -1e30 invalid) + {0,1} multiplicative mask
    t_bias = ((tgt_valid.astype(jnp.float32) - 1.0) * 1e30)[:, None, :]
    t_mul = tgt_valid.astype(jnp.float32)[:, None, :]
    m_bias = ((mem_valid.astype(jnp.float32) - 1.0) * 1e30)[:, None, :]
    m_mul = mem_valid.astype(jnp.float32)[:, None, :]

    # CIFDecoderSAN: x = tgt (no embed layer applied); bf16 storage for HBM traffic.
    x_bf = ys_in_pad.astype(jnp.bfloat16)
    mem_bf = hs_pad.astype(jnp.bfloat16)

    Bb = _pick_batch_block(B, Tout, Tin)
    nb = B // Bb

    per_bblk = lambda b, l: (b, 0, 0)
    per_layer = lambda b, l: (l, 0, 0)
    const2d = lambda b, l: (0, 0)

    kernel = functools.partial(
        _decoder_stack_kernel,
        num_heads=num_heads, num_layers=L, bb=Bb,
        eps_layer=1e-5, eps_final=1e-12, compute_dtype=jnp.bfloat16)

    logits_pad = pl.pallas_call(
        kernel,
        grid=(nb, L),
        in_specs=[
            pl.BlockSpec((Bb, Tout, D), per_bblk),        # x (tgt acoustic embeds)
            pl.BlockSpec((Bb, Tin, D), per_bblk),         # memory
            pl.BlockSpec((Bb, 1, Tout), per_bblk),        # tgt additive mask bias
            pl.BlockSpec((Bb, 1, Tout), per_bblk),        # tgt {0,1} mask
            pl.BlockSpec((Bb, 1, Tin), per_bblk),         # mem additive mask bias
            pl.BlockSpec((Bb, 1, Tin), per_bblk),         # mem {0,1} mask
            pl.BlockSpec((1, D, 3 * D), per_layer),       # sa_qkv_w
            pl.BlockSpec((1, 1, 3 * D), per_layer),       # sa_qkv_b
            pl.BlockSpec((1, D, D), per_layer),           # sa_o_w
            pl.BlockSpec((1, 1, D), per_layer),           # sa_o_b
            pl.BlockSpec((1, D, D), per_layer),           # ca_q_w
            pl.BlockSpec((1, 1, D), per_layer),           # ca_q_b
            pl.BlockSpec((1, D, 2 * D), per_layer),       # ca_kv_w
            pl.BlockSpec((1, 1, 2 * D), per_layer),       # ca_kv_b
            pl.BlockSpec((1, D, D), per_layer),           # ca_o_w
            pl.BlockSpec((1, 1, D), per_layer),           # ca_o_b
            pl.BlockSpec((1, D, F), per_layer),           # ffn_w1
            pl.BlockSpec((1, 1, F), per_layer),           # ffn_b1
            pl.BlockSpec((1, F, D), per_layer),           # ffn_w2
            pl.BlockSpec((1, 1, D), per_layer),           # ffn_b2
            pl.BlockSpec((1, 8, D), per_layer),           # ln params
            pl.BlockSpec((2, D), const2d),                # after_norm gamma/beta
            pl.BlockSpec((D, Vpad), const2d),             # output weight (lane-padded)
            pl.BlockSpec((1, Vpad), const2d),             # output bias
        ],
        out_specs=pl.BlockSpec((Bb, Tout, Vpad), per_bblk),
        out_shape=jax.ShapeDtypeStruct((B, Tout, Vpad), jnp.float32),
        scratch_shapes=[pltpu.VMEM((Bb * Tout, D), jnp.float32)],   # residual stream
        compiler_params=pltpu.CompilerParams(
            dimension_semantics=("parallel", "arbitrary"),
            vmem_limit_bytes=48 * 1024 * 1024),           # fits v7x's 64 MiB budget
    )(x_bf, mem_bf, t_bias, t_mul, m_bias, m_mul,
      params["sa_qkv_w"], params["sa_qkv_b"], params["sa_o_w"], params["sa_o_b"],
      params["ca_q_w"], params["ca_q_b"], params["ca_kv_w"], params["ca_kv_b"],
      params["ca_o_w"], params["ca_o_b"],
      params["ffn_w1"], params["ffn_b1"], params["ffn_w2"], params["ffn_b2"],
      params["ln_gb"], params["after_gb"], params["out_w"], params["out_b"])

    logits = logits_pad if Vpad == vocab_size else logits_pad[:, :, :vocab_size]

    # olens = tgt_mask.sum(1): (B, 1, Tout) bool summed over dim 1 -> (B, Tout)
    olens = jnp.sum(tgt_valid[:, None, :].astype(jnp.int32), axis=1)
    return logits, olens


# ----------------------------------------------------------------------------
# main
# ----------------------------------------------------------------------------
if __name__ == "__main__":
    # small config consistent with the module
    B, Tin, Tout = 2, 16, 8
    D = 32                 # encoder_output_size / attention_dim
    H = 4                  # attention_heads
    F = 64                 # linear_units
    VOCAB = 50
    NUM_BLOCKS = 2

    key = jax.random.PRNGKey(0)
    kp, kh, ky = jax.random.split(key, 3)

    raw = init_raw_params(kp, VOCAB, D, F, NUM_BLOCKS)
    params = prepare_params(raw, num_heads=H)

    hs_pad = jax.random.normal(kh, (B, Tin, D), jnp.float32)        # encoded memory
    ys_in_pad = jax.random.normal(ky, (B, Tout, D), jnp.float32)    # CIF acoustic embeds
    hlens = jnp.array([16, 11], jnp.int32)
    ys_in_lens = jnp.array([8, 5], jnp.int32)

    fwd = jax.jit(functools.partial(cif_decoder_san_forward,
                                    num_heads=H, vocab_size=VOCAB))
    logits, olens = fwd(params, hs_pad, hlens, ys_in_pad, ys_in_lens)
    jax.block_until_ready((logits, olens))

    assert logits.shape == (B, Tout, VOCAB), logits.shape
    assert olens.shape == (B, Tout), olens.shape
    assert bool(jnp.all(jnp.isfinite(logits)))
    print("KERNEL_OK")
</pallas_src>

<mosaic_0001>
module attributes {stable_mosaic.version = 11 : i64} {
  func.func @_decoder_stack_kernel(%arg0: i32, %arg1: i32, %arg2: memref<2x8x32xbf16, #tpu.memory_space<vmem>>, %arg3: memref<2x16x32xbf16, #tpu.memory_space<vmem>>, %arg4: memref<2x1x8xf32, #tpu.memory_space<vmem>>, %arg5: memref<2x1x8xf32, #tpu.memory_space<vmem>>, %arg6: memref<2x1x16xf32, #tpu.memory_space<vmem>>, %arg7: memref<2x1x16xf32, #tpu.memory_space<vmem>>, %arg8: memref<1x32x96xbf16, #tpu.memory_space<vmem>>, %arg9: memref<1x1x96xf32, #tpu.memory_space<vmem>>, %arg10: memref<1x32x32xbf16, #tpu.memory_space<vmem>>, %arg11: memref<1x1x32xf32, #tpu.memory_space<vmem>>, %arg12: memref<1x32x32xbf16, #tpu.memory_space<vmem>>, %arg13: memref<1x1x32xf32, #tpu.memory_space<vmem>>, %arg14: memref<1x32x64xbf16, #tpu.memory_space<vmem>>, %arg15: memref<1x1x64xf32, #tpu.memory_space<vmem>>, %arg16: memref<1x32x32xbf16, #tpu.memory_space<vmem>>, %arg17: memref<1x1x32xf32, #tpu.memory_space<vmem>>, %arg18: memref<1x32x64xbf16, #tpu.memory_space<vmem>>, %arg19: memref<1x1x64xf32, #tpu.memory_space<vmem>>, %arg20: memref<1x64x32xbf16, #tpu.memory_space<vmem>>, %arg21: memref<1x1x32xf32, #tpu.memory_space<vmem>>, %arg22: memref<1x8x32xf32, #tpu.memory_space<vmem>>, %arg23: memref<2x32xf32, #tpu.memory_space<vmem>>, %arg24: memref<32x128xbf16, #tpu.memory_space<vmem>>, %arg25: memref<1x128xf32, #tpu.memory_space<vmem>>, %arg26: memref<2x8x128xf32, #tpu.memory_space<vmem>>, %arg27: memref<16x32xf32, #tpu.memory_space<vmem>>) attributes {dimension_semantics = [#tpu.dimension_semantics<parallel>, #tpu.dimension_semantics<arbitrary>], iteration_bounds = array<i64: 1, 2>, scalar_prefetch = 0 : i64, scratch_operands = 1 : i64, tpu.core_type = #tpu.core_type<tc>, window_params = [{transform_indices = @transform_0, window_bounds = array<i64: 2, 8, 32>}, {transform_indices = @transform_1, window_bounds = array<i64: 2, 16, 32>}, {transform_indices = @transform_2, window_bounds = array<i64: 2, 1, 8>}, {transform_indices = @transform_3, window_bounds = array<i64: 2, 1, 8>}, {transform_indices = @transform_4, window_bounds = array<i64: 2, 1, 16>}, {transform_indices = @transform_5, window_bounds = array<i64: 2, 1, 16>}, {transform_indices = @transform_6, window_bounds = array<i64: 1, 32, 96>}, {transform_indices = @transform_7, window_bounds = array<i64: 1, 1, 96>}, {transform_indices = @transform_8, window_bounds = array<i64: 1, 32, 32>}, {transform_indices = @transform_9, window_bounds = array<i64: 1, 1, 32>}, {transform_indices = @transform_10, window_bounds = array<i64: 1, 32, 32>}, {transform_indices = @transform_11, window_bounds = array<i64: 1, 1, 32>}, {transform_indices = @transform_12, window_bounds = array<i64: 1, 32, 64>}, {transform_indices = @transform_13, window_bounds = array<i64: 1, 1, 64>}, {transform_indices = @transform_14, window_bounds = array<i64: 1, 32, 32>}, {transform_indices = @transform_15, window_bounds = array<i64: 1, 1, 32>}, {transform_indices = @transform_16, window_bounds = array<i64: 1, 32, 64>}, {transform_indices = @transform_17, window_bounds = array<i64: 1, 1, 64>}, {transform_indices = @transform_18, window_bounds = array<i64: 1, 64, 32>}, {transform_indices = @transform_19, window_bounds = array<i64: 1, 1, 32>}, {transform_indices = @transform_20, window_bounds = array<i64: 1, 8, 32>}, {pipeline_mode = #tpu.pipeline_mode<synchronous>, transform_indices = @transform_21, window_bounds = array<i64: 2, 32>}, {pipeline_mode = #tpu.pipeline_mode<synchronous>, transform_indices = @transform_22, window_bounds = array<i64: 32, 128>}, {pipeline_mode = #tpu.pipeline_mode<synchronous>, transform_indices = @transform_23, window_bounds = array<i64: 1, 128>}, {transform_indices = @transform_24, window_bounds = array<i64: 2, 8, 128>}]} {
    %c0_i32 = arith.constant 0 : i32
    %0 = arith.cmpi eq, %arg1, %c0_i32 : i32
    %1 = arith.extui %0 : i1 to i32
    %c0_i32_0 = arith.constant 0 : i32
    %2 = arith.cmpi ne, %1, %c0_i32_0 : i32
    scf.if %2 {
      %c0_151 = arith.constant 0 : index
      %c0_152 = arith.constant 0 : index
      %c0_153 = arith.constant 0 : index
      %488 = vector.load %arg2[%c0_151, %c0_152, %c0_153] : memref<2x8x32xbf16, #tpu.memory_space<vmem>>, vector<2x8x32xbf16>
      %489 = arith.extf %488 : vector<2x8x32xbf16> to vector<2x8x32xf32>
      %490 = vector.shape_cast %489 : vector<2x8x32xf32> to vector<16x32xf32>
      %c0_154 = arith.constant 0 : index
      %c0_155 = arith.constant 0 : index
      %491 = vector.load %arg27[%c0_154, %c0_155] : memref<16x32xf32, #tpu.memory_space<vmem>>, vector<16x32xf32>
      tpu.vector_store %arg27[%c0_154, %c0_155], %490 {strides = array<i32>} : memref<16x32xf32, #tpu.memory_space<vmem>>, vector<16x32xf32>,
    } else {
    }
    %c0 = arith.constant 0 : index
    %c0_1 = arith.constant 0 : index
    %c0_2 = arith.constant 0 : index
    %3 = vector.load %arg22[%c0, %c0_1, %c0_2] : memref<1x8x32xf32, #tpu.memory_space<vmem>>, vector<1x8x32xf32>
    %4 = vector.shape_cast %3 : vector<1x8x32xf32> to vector<8x32xf32>
    %c0_3 = arith.constant 0 : index
    %c0_4 = arith.constant 0 : index
    %c0_5 = arith.constant 0 : index
    %5 = vector.load %arg4[%c0_3, %c0_4, %c0_5] : memref<2x1x8xf32, #tpu.memory_space<vmem>>, vector<2x1x8xf32>
    %c0_6 = arith.constant 0 : index
    %c0_7 = arith.constant 0 : index
    %c0_8 = arith.constant 0 : index
    %6 = vector.load %arg5[%c0_6, %c0_7, %c0_8] : memref<2x1x8xf32, #tpu.memory_space<vmem>>, vector<2x1x8xf32>
    %c0_9 = arith.constant 0 : index
    %c0_10 = arith.constant 0 : index
    %c0_11 = arith.constant 0 : index
    %7 = vector.load %arg6[%c0_9, %c0_10, %c0_11] : memref<2x1x16xf32, #tpu.memory_space<vmem>>, vector<2x1x16xf32>
    %c0_12 = arith.constant 0 : index
    %c0_13 = arith.constant 0 : index
    %c0_14 = arith.constant 0 : index
    %8 = vector.load %arg7[%c0_12, %c0_13, %c0_14] : memref<2x1x16xf32, #tpu.memory_space<vmem>>, vector<2x1x16xf32>
    %c0_15 = arith.constant 0 : index
    %c0_16 = arith.constant 0 : index
    %9 = vector.load %arg27[%c0_15, %c0_16] : memref<16x32xf32, #tpu.memory_space<vmem>>, vector<16x32xf32>
    %10 = vector.extract_strided_slice %4 {offsets = [0, 0], sizes = [1, 32], strides = [1, 1]} : vector<8x32xf32> to vector<1x32xf32>
    %11 = vector.extract_strided_slice %4 {offsets = [1, 0], sizes = [1, 32], strides = [1, 1]} : vector<8x32xf32> to vector<1x32xf32>
    %cst = arith.constant dense<0.000000e+00> : vector<16xf32>
    %12 = vector.multi_reduction <add>, %9, %cst [1] : vector<16x32xf32> to vector<16xf32>
    %13 = vector.shape_cast %12 : vector<16xf32> to vector<16x1xf32>
    %cst_17 = arith.constant 3.200000e+01 : f32
    %14 = vector.broadcast %cst_17 : f32 to vector<16x1xf32>
    %15 = arith.divf %13, %14 : vector<16x1xf32>
    %16 = vector.broadcast %15 : vector<16x1xf32> to vector<16x32xf32>
    %17 = arith.subf %9, %16 : vector<16x32xf32>
    %18 = arith.mulf %17, %17 : vector<16x32xf32>
    %cst_18 = arith.constant dense<0.000000e+00> : vector<16xf32>
    %19 = vector.multi_reduction <add>, %18, %cst_18 [1] : vector<16x32xf32> to vector<16xf32>
    %20 = vector.shape_cast %19 : vector<16xf32> to vector<16x1xf32>
    %cst_19 = arith.constant 3.200000e+01 : f32
    %21 = vector.broadcast %cst_19 : f32 to vector<16x1xf32>
    %22 = arith.divf %20, %21 : vector<16x1xf32>
    %cst_20 = arith.constant 9.99999974E-6 : f32
    %23 = vector.broadcast %cst_20 : f32 to vector<16x1xf32>
    %24 = arith.addf %22, %23 : vector<16x1xf32>
    %25 = math.rsqrt %24 : vector<16x1xf32>
    %26 = vector.broadcast %25 : vector<16x1xf32> to vector<16x32xf32>
    %27 = arith.mulf %17, %26 : vector<16x32xf32>
    %28 = vector.broadcast %10 : vector<1x32xf32> to vector<16x32xf32>
    %29 = arith.mulf %27, %28 : vector<16x32xf32>
    %30 = vector.broadcast %11 : vector<1x32xf32> to vector<16x32xf32>
    %31 = arith.addf %29, %30 : vector<16x32xf32>
    %32 = arith.truncf %31 : vector<16x32xf32> to vector<16x32xbf16>
    %c0_21 = arith.constant 0 : index
    %c0_22 = arith.constant 0 : index
    %c0_23 = arith.constant 0 : index
    %33 = vector.load %arg8[%c0_21, %c0_22, %c0_23] : memref<1x32x96xbf16, #tpu.memory_space<vmem>>, vector<1x32x96xbf16>
    %34 = vector.shape_cast %33 : vector<1x32x96xbf16> to vector<32x96xbf16>
    %cst_24 = arith.constant dense<0.000000e+00> : vector<16x96xf32>
    %35 = tpu.matmul %32, %34, %cst_24 {dimension_numbers = #tpu.dot_dimension_numbers<[1], [0], [0], [1], [0, 0, 1, 1], [], []>} : vector<16x32xbf16>, vector<32x96xbf16>, vector<16x96xf32> -> vector<16x96xf32>
    %c0_25 = arith.constant 0 : index
    %c0_26 = arith.constant 0 : index
    %c0_27 = arith.constant 0 : index
    %36 = vector.load %arg9[%c0_25, %c0_26, %c0_27] : memref<1x1x96xf32, #tpu.memory_space<vmem>>, vector<1x1x96xf32>
    %37 = vector.shape_cast %36 : vector<1x1x96xf32> to vector<1x96xf32>
    %38 = vector.broadcast %37 : vector<1x96xf32> to vector<16x96xf32>
    %39 = arith.addf %35, %38 : vector<16x96xf32>
    %40 = arith.truncf %39 : vector<16x96xf32> to vector<16x96xbf16>
    %41 = vector.extract_strided_slice %40 {offsets = [0, 0], sizes = [16, 32], strides = [1, 1]} : vector<16x96xbf16> to vector<16x32xbf16>
    %42 = vector.extract_strided_slice %40 {offsets = [0, 32], sizes = [16, 32], strides = [1, 1]} : vector<16x96xbf16> to vector<16x32xbf16>
    %43 = vector.extract_strided_slice %40 {offsets = [0, 64], sizes = [16, 32], strides = [1, 1]} : vector<16x96xbf16> to vector<16x32xbf16>
    %44 = vector.extract_strided_slice %41 {offsets = [0, 0], sizes = [8, 32], strides = [1, 1]} : vector<16x32xbf16> to vector<8x32xbf16>
    %45 = vector.extract_strided_slice %42 {offsets = [0, 0], sizes = [8, 32], strides = [1, 1]} : vector<16x32xbf16> to vector<8x32xbf16>
    %46 = vector.extract_strided_slice %43 {offsets = [0, 0], sizes = [8, 32], strides = [1, 1]} : vector<16x32xbf16> to vector<8x32xbf16>
    %47 = vector.extract_strided_slice %5 {offsets = [0, 0, 0], sizes = [1, 1, 8], strides = [1, 1, 1]} : vector<2x1x8xf32> to vector<1x1x8xf32>
    %48 = vector.shape_cast %47 : vector<1x1x8xf32> to vector<1x8xf32>
    %49 = vector.shape_cast %48 : vector<1x8xf32> to vector<1x8xf32>
    %50 = vector.broadcast %49 : vector<1x8xf32> to vector<8x8xf32>
    %51 = vector.extract_strided_slice %6 {offsets = [0, 0, 0], sizes = [1, 1, 8], strides = [1, 1, 1]} : vector<2x1x8xf32> to vector<1x1x8xf32>
    %52 = vector.shape_cast %51 : vector<1x1x8xf32> to vector<1x8xf32>
    %53 = vector.shape_cast %52 : vector<1x8xf32> to vector<1x8xf32>
    %54 = vector.broadcast %53 : vector<1x8xf32> to vector<8x8xf32>
    %55 = vector.extract_strided_slice %44 {offsets = [0, 0], sizes = [8, 8], strides = [1, 1]} : vector<8x32xbf16> to vector<8x8xbf16>
    %56 = vector.extract_strided_slice %45 {offsets = [0, 0], sizes = [8, 8], strides = [1, 1]} : vector<8x32xbf16> to vector<8x8xbf16>
    %cst_28 = arith.constant dense<0.000000e+00> : vector<8x8xf32>
    %57 = tpu.matmul %55, %56, %cst_28 {dimension_numbers = #tpu.dot_dimension_numbers<[1], [1], [0], [0], [0, 0, 1, 0], [], []>} : vector<8x8xbf16>, vector<8x8xbf16>, vector<8x8xf32> -> vector<8x8xf32>
    %58 = arith.addf %57, %50 : vector<8x8xf32>
    %cst_29 = arith.constant dense<0xFF800000> : vector<8xf32>
    %59 = vector.multi_reduction <maximumf>, %58, %cst_29 [1] : vector<8x8xf32> to vector<8xf32>
    %60 = vector.shape_cast %59 : vector<8xf32> to vector<8x1xf32>
    %61 = vector.broadcast %60 : vector<8x1xf32> to vector<8x8xf32>
    %62 = arith.subf %58, %61 : vector<8x8xf32>
    %63 = math.exp %62 : vector<8x8xf32>
    %cst_30 = arith.constant dense<0.000000e+00> : vector<8xf32>
    %64 = vector.multi_reduction <add>, %63, %cst_30 [1] : vector<8x8xf32> to vector<8xf32>
    %65 = vector.shape_cast %64 : vector<8xf32> to vector<8x1xf32>
    %66 = tpu.reciprocal %65 {approx = true} : vector<8x1xf32> -> vector<8x1xf32>
    %67 = vector.broadcast %66 : vector<8x1xf32> to vector<8x8xf32>
    %68 = arith.mulf %63, %67 : vector<8x8xf32>
    %69 = arith.mulf %68, %54 : vector<8x8xf32>
    %70 = arith.truncf %69 : vector<8x8xf32> to vector<8x8xbf16>
    %71 = vector.extract_strided_slice %46 {offsets = [0, 0], sizes = [8, 8], strides = [1, 1]} : vector<8x32xbf16> to vector<8x8xbf16>
    %cst_31 = arith.constant dense<0.000000e+00> : vector<8x8xf32>
    %72 = tpu.matmul %70, %71, %cst_31 {dimension_numbers = #tpu.dot_dimension_numbers<[1], [0], [0], [1], [0, 0, 1, 1], [], []>} : vector<8x8xbf16>, vector<8x8xbf16>, vector<8x8xf32> -> vector<8x8xf32>
    %73 = vector.extract_strided_slice %44 {offsets = [0, 8], sizes = [8, 8], strides = [1, 1]} : vector<8x32xbf16> to vector<8x8xbf16>
    %74 = vector.extract_strided_slice %45 {offsets = [0, 8], sizes = [8, 8], strides = [1, 1]} : vector<8x32xbf16> to vector<8x8xbf16>
    %cst_32 = arith.constant dense<0.000000e+00> : vector<8x8xf32>
    %75 = tpu.matmul %73, %74, %cst_32 {dimension_numbers = #tpu.dot_dimension_numbers<[1], [1], [0], [0], [0, 0, 1, 0], [], []>} : vector<8x8xbf16>, vector<8x8xbf16>, vector<8x8xf32> -> vector<8x8xf32>
    %76 = arith.addf %75, %50 : vector<8x8xf32>
    %cst_33 = arith.constant dense<0xFF800000> : vector<8xf32>
    %77 = vector.multi_reduction <maximumf>, %76, %cst_33 [1] : vector<8x8xf32> to vector<8xf32>
    %78 = vector.shape_cast %77 : vector<8xf32> to vector<8x1xf32>
    %79 = vector.broadcast %78 : vector<8x1xf32> to vector<8x8xf32>
    %80 = arith.subf %76, %79 : vector<8x8xf32>
    %81 = math.exp %80 : vector<8x8xf32>
    %cst_34 = arith.constant dense<0.000000e+00> : vector<8xf32>
    %82 = vector.multi_reduction <add>, %81, %cst_34 [1] : vector<8x8xf32> to vector<8xf32>
    %83 = vector.shape_cast %82 : vector<8xf32> to vector<8x1xf32>
    %84 = tpu.reciprocal %83 {approx = true} : vector<8x1xf32> -> vector<8x1xf32>
    %85 = vector.broadcast %84 : vector<8x1xf32> to vector<8x8xf32>
    %86 = arith.mulf %81, %85 : vector<8x8xf32>
    %87 = arith.mulf %86, %54 : vector<8x8xf32>
    %88 = arith.truncf %87 : vector<8x8xf32> to vector<8x8xbf16>
    %89 = vector.extract_strided_slice %46 {offsets = [0, 8], sizes = [8, 8], strides = [1, 1]} : vector<8x32xbf16> to vector<8x8xbf16>
    %cst_35 = arith.constant dense<0.000000e+00> : vector<8x8xf32>
    %90 = tpu.matmul %88, %89, %cst_35 {dimension_numbers = #tpu.dot_dimension_numbers<[1], [0], [0], [1], [0, 0, 1, 1], [], []>} : vector<8x8xbf16>, vector<8x8xbf16>, vector<8x8xf32> -> vector<8x8xf32>
    %91 = vector.extract_strided_slice %44 {offsets = [0, 16], sizes = [8, 8], strides = [1, 1]} : vector<8x32xbf16> to vector<8x8xbf16>
    %92 = vector.extract_strided_slice %45 {offsets = [0, 16], sizes = [8, 8], strides = [1, 1]} : vector<8x32xbf16> to vector<8x8xbf16>
    %cst_36 = arith.constant dense<0.000000e+00> : vector<8x8xf32>
    %93 = tpu.matmul %91, %92, %cst_36 {dimension_numbers = #tpu.dot_dimension_numbers<[1], [1], [0], [0], [0, 0, 1, 0], [], []>} : vector<8x8xbf16>, vector<8x8xbf16>, vector<8x8xf32> -> vector<8x8xf32>
    %94 = arith.addf %93, %50 : vector<8x8xf32>
    %cst_37 = arith.constant dense<0xFF800000> : vector<8xf32>
    %95 = vector.multi_reduction <maximumf>, %94, %cst_37 [1] : vector<8x8xf32> to vector<8xf32>
    %96 = vector.shape_cast %95 : vector<8xf32> to vector<8x1xf32>
    %97 = vector.broadcast %96 : vector<8x1xf32> to vector<8x8xf32>
    %98 = arith.subf %94, %97 : vector<8x8xf32>
    %99 = math.exp %98 : vector<8x8xf32>
    %cst_38 = arith.constant dense<0.000000e+00> : vector<8xf32>
    %100 = vector.multi_reduction <add>, %99, %cst_38 [1] : vector<8x8xf32> to vector<8xf32>
    %101 = vector.shape_cast %100 : vector<8xf32> to vector<8x1xf32>
    %102 = tpu.reciprocal %101 {approx = true} : vector<8x1xf32> -> vector<8x1xf32>
    %103 = vector.broadcast %102 : vector<8x1xf32> to vector<8x8xf32>
    %104 = arith.mulf %99, %103 : vector<8x8xf32>
    %105 = arith.mulf %104, %54 : vector<8x8xf32>
    %106 = arith.truncf %105 : vector<8x8xf32> to vector<8x8xbf16>
    %107 = vector.extract_strided_slice %46 {offsets = [0, 16], sizes = [8, 8], strides = [1, 1]} : vector<8x32xbf16> to vector<8x8xbf16>
    %cst_39 = arith.constant dense<0.000000e+00> : vector<8x8xf32>
    %108 = tpu.matmul %106, %107, %cst_39 {dimension_numbers = #tpu.dot_dimension_numbers<[1], [0], [0], [1], [0, 0, 1, 1], [], []>} : vector<8x8xbf16>, vector<8x8xbf16>, vector<8x8xf32> -> vector<8x8xf32>
    %109 = vector.extract_strided_slice %44 {offsets = [0, 24], sizes = [8, 8], strides = [1, 1]} : vector<8x32xbf16> to vector<8x8xbf16>
    %110 = vector.extract_strided_slice %45 {offsets = [0, 24], sizes = [8, 8], strides = [1, 1]} : vector<8x32xbf16> to vector<8x8xbf16>
    %cst_40 = arith.constant dense<0.000000e+00> : vector<8x8xf32>
    %111 = tpu.matmul %109, %110, %cst_40 {dimension_numbers = #tpu.dot_dimension_numbers<[1], [1], [0], [0], [0, 0, 1, 0], [], []>} : vector<8x8xbf16>, vector<8x8xbf16>, vector<8x8xf32> -> vector<8x8xf32>
    %112 = arith.addf %111, %50 : vector<8x8xf32>
    %cst_41 = arith.constant dense<0xFF800000> : vector<8xf32>
    %113 = vector.multi_reduction <maximumf>, %112, %cst_41 [1] : vector<8x8xf32> to vector<8xf32>
    %114 = vector.shape_cast %113 : vector<8xf32> to vector<8x1xf32>
    %115 = vector.broadcast %114 : vector<8x1xf32> to vector<8x8xf32>
    %116 = arith.subf %112, %115 : vector<8x8xf32>
    %117 = math.exp %116 : vector<8x8xf32>
    %cst_42 = arith.constant dense<0.000000e+00> : vector<8xf32>
    %118 = vector.multi_reduction <add>, %117, %cst_42 [1] : vector<8x8xf32> to vector<8xf32>
    %119 = vector.shape_cast %118 : vector<8xf32> to vector<8x1xf32>
    %120 = tpu.reciprocal %119 {approx = true} : vector<8x1xf32> -> vector<8x1xf32>
    %121 = vector.broadcast %120 : vector<8x1xf32> to vector<8x8xf32>
    %122 = arith.mulf %117, %121 : vector<8x8xf32>
    %123 = arith.mulf %122, %54 : vector<8x8xf32>
    %124 = arith.truncf %123 : vector<8x8xf32> to vector<8x8xbf16>
    %125 = vector.extract_strided_slice %46 {offsets = [0, 24], sizes = [8, 8], strides = [1, 1]} : vector<8x32xbf16> to vector<8x8xbf16>
    %cst_43 = arith.constant dense<0.000000e+00> : vector<8x8xf32>
    %126 = tpu.matmul %124, %125, %cst_43 {dimension_numbers = #tpu.dot_dimension_numbers<[1], [0], [0], [1], [0, 0, 1, 1], [], []>} : vector<8x8xbf16>, vector<8x8xbf16>, vector<8x8xf32> -> vector<8x8xf32>
    %127 = tpu.concatenate %72, %90, %108, %126 in 1 : vector<8x8xf32>, vector<8x8xf32>, vector<8x8xf32>, vector<8x8xf32> -> vector<8x32xf32>
    %128 = vector.extract_strided_slice %41 {offsets = [8, 0], sizes = [8, 32], strides = [1, 1]} : vector<16x32xbf16> to vector<8x32xbf16>
    %129 = vector.extract_strided_slice %42 {offsets = [8, 0], sizes = [8, 32], strides = [1, 1]} : vector<16x32xbf16> to vector<8x32xbf16>
    %130 = vector.extract_strided_slice %43 {offsets = [8, 0], sizes = [8, 32], strides = [1, 1]} : vector<16x32xbf16> to vector<8x32xbf16>
    %131 = vector.extract_strided_slice %5 {offsets = [1, 0, 0], sizes = [1, 1, 8], strides = [1, 1, 1]} : vector<2x1x8xf32> to vector<1x1x8xf32>
    %132 = vector.shape_cast %131 : vector<1x1x8xf32> to vector<1x8xf32>
    %133 = vector.shape_cast %132 : vector<1x8xf32> to vector<1x8xf32>
    %134 = vector.broadcast %133 : vector<1x8xf32> to vector<8x8xf32>
    %135 = vector.extract_strided_slice %6 {offsets = [1, 0, 0], sizes = [1, 1, 8], strides = [1, 1, 1]} : vector<2x1x8xf32> to vector<1x1x8xf32>
    %136 = vector.shape_cast %135 : vector<1x1x8xf32> to vector<1x8xf32>
    %137 = vector.shape_cast %136 : vector<1x8xf32> to vector<1x8xf32>
    %138 = vector.broadcast %137 : vector<1x8xf32> to vector<8x8xf32>
    %139 = vector.extract_strided_slice %128 {offsets = [0, 0], sizes = [8, 8], strides = [1, 1]} : vector<8x32xbf16> to vector<8x8xbf16>
    %140 = vector.extract_strided_slice %129 {offsets = [0, 0], sizes = [8, 8], strides = [1, 1]} : vector<8x32xbf16> to vector<8x8xbf16>
    %cst_44 = arith.constant dense<0.000000e+00> : vector<8x8xf32>
    %141 = tpu.matmul %139, %140, %cst_44 {dimension_numbers = #tpu.dot_dimension_numbers<[1], [1], [0], [0], [0, 0, 1, 0], [], []>} : vector<8x8xbf16>, vector<8x8xbf16>, vector<8x8xf32> -> vector<8x8xf32>
    %142 = arith.addf %141, %134 : vector<8x8xf32>
    %cst_45 = arith.constant dense<0xFF800000> : vector<8xf32>
    %143 = vector.multi_reduction <maximumf>, %142, %cst_45 [1] : vector<8x8xf32> to vector<8xf32>
    %144 = vector.shape_cast %143 : vector<8xf32> to vector<8x1xf32>
    %145 = vector.broadcast %144 : vector<8x1xf32> to vector<8x8xf32>
    %146 = arith.subf %142, %145 : vector<8x8xf32>
    %147 = math.exp %146 : vector<8x8xf32>
    %cst_46 = arith.constant dense<0.000000e+00> : vector<8xf32>
    %148 = vector.multi_reduction <add>, %147, %cst_46 [1] : vector<8x8xf32> to vector<8xf32>
    %149 = vector.shape_cast %148 : vector<8xf32> to vector<8x1xf32>
    %150 = tpu.reciprocal %149 {approx = true} : vector<8x1xf32> -> vector<8x1xf32>
    %151 = vector.broadcast %150 : vector<8x1xf32> to vector<8x8xf32>
    %152 = arith.mulf %147, %151 : vector<8x8xf32>
    %153 = arith.mulf %152, %138 : vector<8x8xf32>
    %154 = arith.truncf %153 : vector<8x8xf32> to vector<8x8xbf16>
    %155 = vector.extract_strided_slice %130 {offsets = [0, 0], sizes = [8, 8], strides = [1, 1]} : vector<8x32xbf16> to vector<8x8xbf16>
    %cst_47 = arith.constant dense<0.000000e+00> : vector<8x8xf32>
    %156 = tpu.matmul %154, %155, %cst_47 {dimension_numbers = #tpu.dot_dimension_numbers<[1], [0], [0], [1], [0, 0, 1, 1], [], []>} : vector<8x8xbf16>, vector<8x8xbf16>, vector<8x8xf32> -> vector<8x8xf32>
    %157 = vector.extract_strided_slice %128 {offsets = [0, 8], sizes = [8, 8], strides = [1, 1]} : vector<8x32xbf16> to vector<8x8xbf16>
    %158 = vector.extract_strided_slice %129 {offsets = [0, 8], sizes = [8, 8], strides = [1, 1]} : vector<8x32xbf16> to vector<8x8xbf16>
    %cst_48 = arith.constant dense<0.000000e+00> : vector<8x8xf32>
    %159 = tpu.matmul %157, %158, %cst_48 {dimension_numbers = #tpu.dot_dimension_numbers<[1], [1], [0], [0], [0, 0, 1, 0], [], []>} : vector<8x8xbf16>, vector<8x8xbf16>, vector<8x8xf32> -> vector<8x8xf32>
    %160 = arith.addf %159, %134 : vector<8x8xf32>
    %cst_49 = arith.constant dense<0xFF800000> : vector<8xf32>
    %161 = vector.multi_reduction <maximumf>, %160, %cst_49 [1] : vector<8x8xf32> to vector<8xf32>
    %162 = vector.shape_cast %161 : vector<8xf32> to vector<8x1xf32>
    %163 = vector.broadcast %162 : vector<8x1xf32> to vector<8x8xf32>
    %164 = arith.subf %160, %163 : vector<8x8xf32>
    %165 = math.exp %164 : vector<8x8xf32>
    %cst_50 = arith.constant dense<0.000000e+00> : vector<8xf32>
    %166 = vector.multi_reduction <add>, %165, %cst_50 [1] : vector<8x8xf32> to vector<8xf32>
    %167 = vector.shape_cast %166 : vector<8xf32> to vector<8x1xf32>
    %168 = tpu.reciprocal %167 {approx = true} : vector<8x1xf32> -> vector<8x1xf32>
    %169 = vector.broadcast %168 : vector<8x1xf32> to vector<8x8xf32>
    %170 = arith.mulf %165, %169 : vector<8x8xf32>
    %171 = arith.mulf %170, %138 : vector<8x8xf32>
    %172 = arith.truncf %171 : vector<8x8xf32> to vector<8x8xbf16>
    %173 = vector.extract_strided_slice %130 {offsets = [0, 8], sizes = [8, 8], strides = [1, 1]} : vector<8x32xbf16> to vector<8x8xbf16>
    %cst_51 = arith.constant dense<0.000000e+00> : vector<8x8xf32>
    %174 = tpu.matmul %172, %173, %cst_51 {dimension_numbers = #tpu.dot_dimension_numbers<[1], [0], [0], [1], [0, 0, 1, 1], [], []>} : vector<8x8xbf16>, vector<8x8xbf16>, vector<8x8xf32> -> vector<8x8xf32>
    %175 = vector.extract_strided_slice %128 {offsets = [0, 16], sizes = [8, 8], strides = [1, 1]} : vector<8x32xbf16> to vector<8x8xbf16>
    %176 = vector.extract_strided_slice %129 {offsets = [0, 16], sizes = [8, 8], strides = [1, 1]} : vector<8x32xbf16> to vector<8x8xbf16>
    %cst_52 = arith.constant dense<0.000000e+00> : vector<8x8xf32>
    %177 = tpu.matmul %175, %176, %cst_52 {dimension_numbers = #tpu.dot_dimension_numbers<[1], [1], [0], [0], [0, 0, 1, 0], [], []>} : vector<8x8xbf16>, vector<8x8xbf16>, vector<8x8xf32> -> vector<8x8xf32>
    %178 = arith.addf %177, %134 : vector<8x8xf32>
    %cst_53 = arith.constant dense<0xFF800000> : vector<8xf32>
    %179 = vector.multi_reduction <maximumf>, %178, %cst_53 [1] : vector<8x8xf32> to vector<8xf32>
    %180 = vector.shape_cast %179 : vector<8xf32> to vector<8x1xf32>
    %181 = vector.broadcast %180 : vector<8x1xf32> to vector<8x8xf32>
    %182 = arith.subf %178, %181 : vector<8x8xf32>
    %183 = math.exp %182 : vector<8x8xf32>
    %cst_54 = arith.constant dense<0.000000e+00> : vector<8xf32>
    %184 = vector.multi_reduction <add>, %183, %cst_54 [1] : vector<8x8xf32> to vector<8xf32>
    %185 = vector.shape_cast %184 : vector<8xf32> to vector<8x1xf32>
    %186 = tpu.reciprocal %185 {approx = true} : vector<8x1xf32> -> vector<8x1xf32>
    %187 = vector.broadcast %186 : vector<8x1xf32> to vector<8x8xf32>
    %188 = arith.mulf %183, %187 : vector<8x8xf32>
    %189 = arith.mulf %188, %138 : vector<8x8xf32>
    %190 = arith.truncf %189 : vector<8x8xf32> to vector<8x8xbf16>
    %191 = vector.extract_strided_slice %130 {offsets = [0, 16], sizes = [8, 8], strides = [1, 1]} : vector<8x32xbf16> to vector<8x8xbf16>
    %cst_55 = arith.constant dense<0.000000e+00> : vector<8x8xf32>
    %192 = tpu.matmul %190, %191, %cst_55 {dimension_numbers = #tpu.dot_dimension_numbers<[1], [0], [0], [1], [0, 0, 1, 1], [], []>} : vector<8x8xbf16>, vector<8x8xbf16>, vector<8x8xf32> -> vector<8x8xf32>
    %193 = vector.extract_strided_slice %128 {offsets = [0, 24], sizes = [8, 8], strides = [1, 1]} : vector<8x32xbf16> to vector<8x8xbf16>
    %194 = vector.extract_strided_slice %129 {offsets = [0, 24], sizes = [8, 8], strides = [1, 1]} : vector<8x32xbf16> to vector<8x8xbf16>
    %cst_56 = arith.constant dense<0.000000e+00> : vector<8x8xf32>
    %195 = tpu.matmul %193, %194, %cst_56 {dimension_numbers = #tpu.dot_dimension_numbers<[1], [1], [0], [0], [0, 0, 1, 0], [], []>} : vector<8x8xbf16>, vector<8x8xbf16>, vector<8x8xf32> -> vector<8x8xf32>
    %196 = arith.addf %195, %134 : vector<8x8xf32>
    %cst_57 = arith.constant dense<0xFF800000> : vector<8xf32>
    %197 = vector.multi_reduction <maximumf>, %196, %cst_57 [1] : vector<8x8xf32> to vector<8xf32>
    %198 = vector.shape_cast %197 : vector<8xf32> to vector<8x1xf32>
    %199 = vector.broadcast %198 : vector<8x1xf32> to vector<8x8xf32>
    %200 = arith.subf %196, %199 : vector<8x8xf32>
    %201 = math.exp %200 : vector<8x8xf32>
    %cst_58 = arith.constant dense<0.000000e+00> : vector<8xf32>
    %202 = vector.multi_reduction <add>, %201, %cst_58 [1] : vector<8x8xf32> to vector<8xf32>
    %203 = vector.shape_cast %202 : vector<8xf32> to vector<8x1xf32>
    %204 = tpu.reciprocal %203 {approx = true} : vector<8x1xf32> -> vector<8x1xf32>
    %205 = vector.broadcast %204 : vector<8x1xf32> to vector<8x8xf32>
    %206 = arith.mulf %201, %205 : vector<8x8xf32>
    %207 = arith.mulf %206, %138 : vector<8x8xf32>
    %208 = arith.truncf %207 : vector<8x8xf32> to vector<8x8xbf16>
    %209 = vector.extract_strided_slice %130 {offsets = [0, 24], sizes = [8, 8], strides = [1, 1]} : vector<8x32xbf16> to vector<8x8xbf16>
    %cst_59 = arith.constant dense<0.000000e+00> : vector<8x8xf32>
    %210 = tpu.matmul %208, %209, %cst_59 {dimension_numbers = #tpu.dot_dimension_numbers<[1], [0], [0], [1], [0, 0, 1, 1], [], []>} : vector<8x8xbf16>, vector<8x8xbf16>, vector<8x8xf32> -> vector<8x8xf32>
    %211 = tpu.concatenate %156, %174, %192, %210 in 1 : vector<8x8xf32>, vector<8x8xf32>, vector<8x8xf32>, vector<8x8xf32> -> vector<8x32xf32>
    %212 = tpu.concatenate %127, %211 in 0 : vector<8x32xf32>, vector<8x32xf32> -> vector<16x32xf32>
    %213 = arith.truncf %212 : vector<16x32xf32> to vector<16x32xbf16>
    %c0_60 = arith.constant 0 : index
    %c0_61 = arith.constant 0 : index
    %c0_62 = arith.constant 0 : index
    %214 = vector.load %arg10[%c0_60, %c0_61, %c0_62] : memref<1x32x32xbf16, #tpu.memory_space<vmem>>, vector<1x32x32xbf16>
    %215 = vector.shape_cast %214 : vector<1x32x32xbf16> to vector<32x32xbf16>
    %cst_63 = arith.constant dense<0.000000e+00> : vector<16x32xf32>
    %216 = tpu.matmul %213, %215, %cst_63 {dimension_numbers = #tpu.dot_dimension_numbers<[1], [0], [0], [1], [0, 0, 1, 1], [], []>} : vector<16x32xbf16>, vector<32x32xbf16>, vector<16x32xf32> -> vector<16x32xf32>
    %c0_64 = arith.constant 0 : index
    %c0_65 = arith.constant 0 : index
    %c0_66 = arith.constant 0 : index
    %217 = vector.load %arg11[%c0_64, %c0_65, %c0_66] : memref<1x1x32xf32, #tpu.memory_space<vmem>>, vector<1x1x32xf32>
    %218 = vector.shape_cast %217 : vector<1x1x32xf32> to vector<1x32xf32>
    %219 = vector.broadcast %218 : vector<1x32xf32> to vector<16x32xf32>
    %220 = arith.addf %216, %219 : vector<16x32xf32>
    %221 = arith.addf %9, %220 : vector<16x32xf32>
    %222 = vector.extract_strided_slice %4 {offsets = [2, 0], sizes = [1, 32], strides = [1, 1]} : vector<8x32xf32> to vector<1x32xf32>
    %223 = vector.extract_strided_slice %4 {offsets = [3, 0], sizes = [1, 32], strides = [1, 1]} : vector<8x32xf32> to vector<1x32xf32>
    %cst_67 = arith.constant dense<0.000000e+00> : vector<16xf32>
    %224 = vector.multi_reduction <add>, %221, %cst_67 [1] : vector<16x32xf32> to vector<16xf32>
    %225 = vector.shape_cast %224 : vector<16xf32> to vector<16x1xf32>
    %cst_68 = arith.constant 3.200000e+01 : f32
    %226 = vector.broadcast %cst_68 : f32 to vector<16x1xf32>
    %227 = arith.divf %225, %226 : vector<16x1xf32>
    %228 = vector.broadcast %227 : vector<16x1xf32> to vector<16x32xf32>
    %229 = arith.subf %221, %228 : vector<16x32xf32>
    %230 = arith.mulf %229, %229 : vector<16x32xf32>
    %cst_69 = arith.constant dense<0.000000e+00> : vector<16xf32>
    %231 = vector.multi_reduction <add>, %230, %cst_69 [1] : vector<16x32xf32> to vector<16xf32>
    %232 = vector.shape_cast %231 : vector<16xf32> to vector<16x1xf32>
    %cst_70 = arith.constant 3.200000e+01 : f32
    %233 = vector.broadcast %cst_70 : f32 to vector<16x1xf32>
    %234 = arith.divf %232, %233 : vector<16x1xf32>
    %cst_71 = arith.constant 9.99999974E-6 : f32
    %235 = vector.broadcast %cst_71 : f32 to vector<16x1xf32>
    %236 = arith.addf %234, %235 : vector<16x1xf32>
    %237 = math.rsqrt %236 : vector<16x1xf32>
    %238 = vector.broadcast %237 : vector<16x1xf32> to vector<16x32xf32>
    %239 = arith.mulf %229, %238 : vector<16x32xf32>
    %240 = vector.broadcast %222 : vector<1x32xf32> to vector<16x32xf32>
    %241 = arith.mulf %239, %240 : vector<16x32xf32>
    %242 = vector.broadcast %223 : vector<1x32xf32> to vector<16x32xf32>
    %243 = arith.addf %241, %242 : vector<16x32xf32>
    %244 = arith.truncf %243 : vector<16x32xf32> to vector<16x32xbf16>
    %c0_72 = arith.constant 0 : index
    %c0_73 = arith.constant 0 : index
    %c0_74 = arith.constant 0 : index
    %245 = vector.load %arg12[%c0_72, %c0_73, %c0_74] : memref<1x32x32xbf16, #tpu.memory_space<vmem>>, vector<1x32x32xbf16>
    %246 = vector.shape_cast %245 : vector<1x32x32xbf16> to vector<32x32xbf16>
    %cst_75 = arith.constant dense<0.000000e+00> : vector<16x32xf32>
    %247 = tpu.matmul %244, %246, %cst_75 {dimension_numbers = #tpu.dot_dimension_numbers<[1], [0], [0], [1], [0, 0, 1, 1], [], []>} : vector<16x32xbf16>, vector<32x32xbf16>, vector<16x32xf32> -> vector<16x32xf32>
    %c0_76 = arith.constant 0 : index
    %c0_77 = arith.constant 0 : index
    %c0_78 = arith.constant 0 : index
    %248 = vector.load %arg13[%c0_76, %c0_77, %c0_78] : memref<1x1x32xf32, #tpu.memory_space<vmem>>, vector<1x1x32xf32>
    %249 = vector.shape_cast %248 : vector<1x1x32xf32> to vector<1x32xf32>
    %250 = vector.broadcast %249 : vector<1x32xf32> to vector<16x32xf32>
    %251 = arith.addf %247, %250 : vector<16x32xf32>
    %c0_79 = arith.constant 0 : index
    %c0_80 = arith.constant 0 : index
    %c0_81 = arith.constant 0 : index
    %252 = vector.load %arg3[%c0_79, %c0_80, %c0_81] : memref<2x16x32xbf16, #tpu.memory_space<vmem>>, vector<2x16x32xbf16>
    %253 = vector.shape_cast %252 : vector<2x16x32xbf16> to vector<32x32xbf16>
    %c0_82 = arith.constant 0 : index
    %c0_83 = arith.constant 0 : index
    %c0_84 = arith.constant 0 : index
    %254 = vector.load %arg14[%c0_82, %c0_83, %c0_84] : memref<1x32x64xbf16, #tpu.memory_space<vmem>>, vector<1x32x64xbf16>
    %255 = vector.shape_cast %254 : vector<1x32x64xbf16> to vector<32x64xbf16>
    %cst_85 = arith.constant dense<0.000000e+00> : vector<32x64xf32>
    %256 = tpu.matmul %253, %255, %cst_85 {dimension_numbers = #tpu.dot_dimension_numbers<[1], [0], [0], [1], [0, 0, 1, 1], [], []>} : vector<32x32xbf16>, vector<32x64xbf16>, vector<32x64xf32> -> vector<32x64xf32>
    %c0_86 = arith.constant 0 : index
    %c0_87 = arith.constant 0 : index
    %c0_88 = arith.constant 0 : index
    %257 = vector.load %arg15[%c0_86, %c0_87, %c0_88] : memref<1x1x64xf32, #tpu.memory_space<vmem>>, vector<1x1x64xf32>
    %258 = vector.shape_cast %257 : vector<1x1x64xf32> to vector<1x64xf32>
    %259 = vector.broadcast %258 : vector<1x64xf32> to vector<32x64xf32>
    %260 = arith.addf %256, %259 : vector<32x64xf32>
    %261 = arith.truncf %260 : vector<32x64xf32> to vector<32x64xbf16>
    %262 = arith.truncf %251 : vector<16x32xf32> to vector<16x32xbf16>
    %263 = vector.extract_strided_slice %261 {offsets = [0, 0], sizes = [32, 32], strides = [1, 1]} : vector<32x64xbf16> to vector<32x32xbf16>
    %264 = vector.extract_strided_slice %261 {offsets = [0, 32], sizes = [32, 32], strides = [1, 1]} : vector<32x64xbf16> to vector<32x32xbf16>
    %265 = vector.extract_strided_slice %262 {offsets = [0, 0], sizes = [8, 32], strides = [1, 1]} : vector<16x32xbf16> to vector<8x32xbf16>
    %266 = vector.extract_strided_slice %263 {offsets = [0, 0], sizes = [16, 32], strides = [1, 1]} : vector<32x32xbf16> to vector<16x32xbf16>
    %267 = vector.extract_strided_slice %264 {offsets = [0, 0], sizes = [16, 32], strides = [1, 1]} : vector<32x32xbf16> to vector<16x32xbf16>
    %268 = vector.extract_strided_slice %7 {offsets = [0, 0, 0], sizes = [1, 1, 16], strides = [1, 1, 1]} : vector<2x1x16xf32> to vector<1x1x16xf32>
    %269 = vector.shape_cast %268 : vector<1x1x16xf32> to vector<1x16xf32>
    %270 = vector.shape_cast %269 : vector<1x16xf32> to vector<1x16xf32>
    %271 = vector.broadcast %270 : vector<1x16xf32> to vector<8x16xf32>
    %272 = vector.extract_strided_slice %8 {offsets = [0, 0, 0], sizes = [1, 1, 16], strides = [1, 1, 1]} : vector<2x1x16xf32> to vector<1x1x16xf32>
    %273 = vector.shape_cast %272 : vector<1x1x16xf32> to vector<1x16xf32>
    %274 = vector.shape_cast %273 : vector<1x16xf32> to vector<1x16xf32>
    %275 = vector.broadcast %274 : vector<1x16xf32> to vector<8x16xf32>
    %276 = vector.extract_strided_slice %265 {offsets = [0, 0], sizes = [8, 8], strides = [1, 1]} : vector<8x32xbf16> to vector<8x8xbf16>
    %277 = vector.extract_strided_slice %266 {offsets = [0, 0], sizes = [16, 8], strides = [1, 1]} : vector<16x32xbf16> to vector<16x8xbf16>
    %cst_89 = arith.constant dense<0.000000e+00> : vector<8x16xf32>
    %278 = tpu.matmul %276, %277, %cst_89 {dimension_numbers = #tpu.dot_dimension_numbers<[1], [1], [0], [0], [0, 0, 1, 0], [], []>} : vector<8x8xbf16>, vector<16x8xbf16>, vector<8x16xf32> -> vector<8x16xf32>
    %279 = arith.addf %278, %271 : vector<8x16xf32>
    %cst_90 = arith.constant dense<0xFF800000> : vector<8xf32>
    %280 = vector.multi_reduction <maximumf>, %279, %cst_90 [1] : vector<8x16xf32> to vector<8xf32>
    %281 = vector.shape_cast %280 : vector<8xf32> to vector<8x1xf32>
    %282 = vector.broadcast %281 : vector<8x1xf32> to vector<8x16xf32>
    %283 = arith.subf %279, %282 : vector<8x16xf32>
    %284 = math.exp %283 : vector<8x16xf32>
    %cst_91 = arith.constant dense<0.000000e+00> : vector<8xf32>
    %285 = vector.multi_reduction <add>, %284, %cst_91 [1] : vector<8x16xf32> to vector<8xf32>
    %286 = vector.shape_cast %285 : vector<8xf32> to vector<8x1xf32>
    %287 = tpu.reciprocal %286 {approx = true} : vector<8x1xf32> -> vector<8x1xf32>
    %288 = vector.broadcast %287 : vector<8x1xf32> to vector<8x16xf32>
    %289 = arith.mulf %284, %288 : vector<8x16xf32>
    %290 = arith.mulf %289, %275 : vector<8x16xf32>
    %291 = arith.truncf %290 : vector<8x16xf32> to vector<8x16xbf16>
    %292 = vector.extract_strided_slice %267 {offsets = [0, 0], sizes = [16, 8], strides = [1, 1]} : vector<16x32xbf16> to vector<16x8xbf16>
    %cst_92 = arith.constant dense<0.000000e+00> : vector<8x8xf32>
    %293 = tpu.matmul %291, %292, %cst_92 {dimension_numbers = #tpu.dot_dimension_numbers<[1], [0], [0], [1], [0, 0, 1, 1], [], []>} : vector<8x16xbf16>, vector<16x8xbf16>, vector<8x8xf32> -> vector<8x8xf32>
    %294 = vector.extract_strided_slice %265 {offsets = [0, 8], sizes = [8, 8], strides = [1, 1]} : vector<8x32xbf16> to vector<8x8xbf16>
    %295 = vector.extract_strided_slice %266 {offsets = [0, 8], sizes = [16, 8], strides = [1, 1]} : vector<16x32xbf16> to vector<16x8xbf16>
    %cst_93 = arith.constant dense<0.000000e+00> : vector<8x16xf32>
    %296 = tpu.matmul %294, %295, %cst_93 {dimension_numbers = #tpu.dot_dimension_numbers<[1], [1], [0], [0], [0, 0, 1, 0], [], []>} : vector<8x8xbf16>, vector<16x8xbf16>, vector<8x16xf32> -> vector<8x16xf32>
    %297 = arith.addf %296, %271 : vector<8x16xf32>
    %cst_94 = arith.constant dense<0xFF800000> : vector<8xf32>
    %298 = vector.multi_reduction <maximumf>, %297, %cst_94 [1] : vector<8x16xf32> to vector<8xf32>
    %299 = vector.shape_cast %298 : vector<8xf32> to vector<8x1xf32>
    %300 = vector.broadcast %299 : vector<8x1xf32> to vector<8x16xf32>
    %301 = arith.subf %297, %300 : vector<8x16xf32>
    %302 = math.exp %301 : vector<8x16xf32>
    %cst_95 = arith.constant dense<0.000000e+00> : vector<8xf32>
    %303 = vector.multi_reduction <add>, %302, %cst_95 [1] : vector<8x16xf32> to vector<8xf32>
    %304 = vector.shape_cast %303 : vector<8xf32> to vector<8x1xf32>
    %305 = tpu.reciprocal %304 {approx = true} : vector<8x1xf32> -> vector<8x1xf32>
    %306 = vector.broadcast %305 : vector<8x1xf32> to vector<8x16xf32>
    %307 = arith.mulf %302, %306 : vector<8x16xf32>
    %308 = arith.mulf %307, %275 : vector<8x16xf32>
    %309 = arith.truncf %308 : vector<8x16xf32> to vector<8x16xbf16>
    %310 = vector.extract_strided_slice %267 {offsets = [0, 8], sizes = [16, 8], strides = [1, 1]} : vector<16x32xbf16> to vector<16x8xbf16>
    %cst_96 = arith.constant dense<0.000000e+00> : vector<8x8xf32>
    %311 = tpu.matmul %309, %310, %cst_96 {dimension_numbers = #tpu.dot_dimension_numbers<[1], [0], [0], [1], [0, 0, 1, 1], [], []>} : vector<8x16xbf16>, vector<16x8xbf16>, vector<8x8xf32> -> vector<8x8xf32>
    %312 = vector.extract_strided_slice %265 {offsets = [0, 16], sizes = [8, 8], strides = [1, 1]} : vector<8x32xbf16> to vector<8x8xbf16>
    %313 = vector.extract_strided_slice %266 {offsets = [0, 16], sizes = [16, 8], strides = [1, 1]} : vector<16x32xbf16> to vector<16x8xbf16>
    %cst_97 = arith.constant dense<0.000000e+00> : vector<8x16xf32>
    %314 = tpu.matmul %312, %313, %cst_97 {dimension_numbers = #tpu.dot_dimension_numbers<[1], [1], [0], [0], [0, 0, 1, 0], [], []>} : vector<8x8xbf16>, vector<16x8xbf16>, vector<8x16xf32> -> vector<8x16xf32>
    %315 = arith.addf %314, %271 : vector<8x16xf32>
    %cst_98 = arith.constant dense<0xFF800000> : vector<8xf32>
    %316 = vector.multi_reduction <maximumf>, %315, %cst_98 [1] : vector<8x16xf32> to vector<8xf32>
    %317 = vector.shape_cast %316 : vector<8xf32> to vector<8x1xf32>
    %318 = vector.broadcast %317 : vector<8x1xf32> to vector<8x16xf32>
    %319 = arith.subf %315, %318 : vector<8x16xf32>
    %320 = math.exp %319 : vector<8x16xf32>
    %cst_99 = arith.constant dense<0.000000e+00> : vector<8xf32>
    %321 = vector.multi_reduction <add>, %320, %cst_99 [1] : vector<8x16xf32> to vector<8xf32>
    %322 = vector.shape_cast %321 : vector<8xf32> to vector<8x1xf32>
    %323 = tpu.reciprocal %322 {approx = true} : vector<8x1xf32> -> vector<8x1xf32>
    %324 = vector.broadcast %323 : vector<8x1xf32> to vector<8x16xf32>
    %325 = arith.mulf %320, %324 : vector<8x16xf32>
    %326 = arith.mulf %325, %275 : vector<8x16xf32>
    %327 = arith.truncf %326 : vector<8x16xf32> to vector<8x16xbf16>
    %328 = vector.extract_strided_slice %267 {offsets = [0, 16], sizes = [16, 8], strides = [1, 1]} : vector<16x32xbf16> to vector<16x8xbf16>
    %cst_100 = arith.constant dense<0.000000e+00> : vector<8x8xf32>
    %329 = tpu.matmul %327, %328, %cst_100 {dimension_numbers = #tpu.dot_dimension_numbers<[1], [0], [0], [1], [0, 0, 1, 1], [], []>} : vector<8x16xbf16>, vector<16x8xbf16>, vector<8x8xf32> -> vector<8x8xf32>
    %330 = vector.extract_strided_slice %265 {offsets = [0, 24], sizes = [8, 8], strides = [1, 1]} : vector<8x32xbf16> to vector<8x8xbf16>
    %331 = vector.extract_strided_slice %266 {offsets = [0, 24], sizes = [16, 8], strides = [1, 1]} : vector<16x32xbf16> to vector<16x8xbf16>
    %cst_101 = arith.constant dense<0.000000e+00> : vector<8x16xf32>
    %332 = tpu.matmul %330, %331, %cst_101 {dimension_numbers = #tpu.dot_dimension_numbers<[1], [1], [0], [0], [0, 0, 1, 0], [], []>} : vector<8x8xbf16>, vector<16x8xbf16>, vector<8x16xf32> -> vector<8x16xf32>
    %333 = arith.addf %332, %271 : vector<8x16xf32>
    %cst_102 = arith.constant dense<0xFF800000> : vector<8xf32>
    %334 = vector.multi_reduction <maximumf>, %333, %cst_102 [1] : vector<8x16xf32> to vector<8xf32>
    %335 = vector.shape_cast %334 : vector<8xf32> to vector<8x1xf32>
    %336 = vector.broadcast %335 : vector<8x1xf32> to vector<8x16xf32>
    %337 = arith.subf %333, %336 : vector<8x16xf32>
    %338 = math.exp %337 : vector<8x16xf32>
    %cst_103 = arith.constant dense<0.000000e+00> : vector<8xf32>
    %339 = vector.multi_reduction <add>, %338, %cst_103 [1] : vector<8x16xf32> to vector<8xf32>
    %340 = vector.shape_cast %339 : vector<8xf32> to vector<8x1xf32>
    %341 = tpu.reciprocal %340 {approx = true} : vector<8x1xf32> -> vector<8x1xf32>
    %342 = vector.broadcast %341 : vector<8x1xf32> to vector<8x16xf32>
    %343 = arith.mulf %338, %342 : vector<8x16xf32>
    %344 = arith.mulf %343, %275 : vector<8x16xf32>
    %345 = arith.truncf %344 : vector<8x16xf32> to vector<8x16xbf16>
    %346 = vector.extract_strided_slice %267 {offsets = [0, 24], sizes = [16, 8], strides = [1, 1]} : vector<16x32xbf16> to vector<16x8xbf16>
    %cst_104 = arith.constant dense<0.000000e+00> : vector<8x8xf32>
    %347 = tpu.matmul %345, %346, %cst_104 {dimension_numbers = #tpu.dot_dimension_numbers<[1], [0], [0], [1], [0, 0, 1, 1], [], []>} : vector<8x16xbf16>, vector<16x8xbf16>, vector<8x8xf32> -> vector<8x8xf32>
    %348 = tpu.concatenate %293, %311, %329, %347 in 1 : vector<8x8xf32>, vector<8x8xf32>, vector<8x8xf32>, vector<8x8xf32> -> vector<8x32xf32>
    %349 = vector.extract_strided_slice %262 {offsets = [8, 0], sizes = [8, 32], strides = [1, 1]} : vector<16x32xbf16> to vector<8x32xbf16>
    %350 = vector.extract_strided_slice %263 {offsets = [16, 0], sizes = [16, 32], strides = [1, 1]} : vector<32x32xbf16> to vector<16x32xbf16>
    %351 = vector.extract_strided_slice %264 {offsets = [16, 0], sizes = [16, 32], strides = [1, 1]} : vector<32x32xbf16> to vector<16x32xbf16>
    %352 = vector.extract_strided_slice %7 {offsets = [1, 0, 0], sizes = [1, 1, 16], strides = [1, 1, 1]} : vector<2x1x16xf32> to vector<1x1x16xf32>
    %353 = vector.shape_cast %352 : vector<1x1x16xf32> to vector<1x16xf32>
    %354 = vector.shape_cast %353 : vector<1x16xf32> to vector<1x16xf32>
    %355 = vector.broadcast %354 : vector<1x16xf32> to vector<8x16xf32>
    %356 = vector.extract_strided_slice %8 {offsets = [1, 0, 0], sizes = [1, 1, 16], strides = [1, 1, 1]} : vector<2x1x16xf32> to vector<1x1x16xf32>
    %357 = vector.shape_cast %356 : vector<1x1x16xf32> to vector<1x16xf32>
    %358 = vector.shape_cast %357 : vector<1x16xf32> to vector<1x16xf32>
    %359 = vector.broadcast %358 : vector<1x16xf32> to vector<8x16xf32>
    %360 = vector.extract_strided_slice %349 {offsets = [0, 0], sizes = [8, 8], strides = [1, 1]} : vector<8x32xbf16> to vector<8x8xbf16>
    %361 = vector.extract_strided_slice %350 {offsets = [0, 0], sizes = [16, 8], strides = [1, 1]} : vector<16x32xbf16> to vector<16x8xbf16>
    %cst_105 = arith.constant dense<0.000000e+00> : vector<8x16xf32>
    %362 = tpu.matmul %360, %361, %cst_105 {dimension_numbers = #tpu.dot_dimension_numbers<[1], [1], [0], [0], [0, 0, 1, 0], [], []>} : vector<8x8xbf16>, vector<16x8xbf16>, vector<8x16xf32> -> vector<8x16xf32>
    %363 = arith.addf %362, %355 : vector<8x16xf32>
    %cst_106 = arith.constant dense<0xFF800000> : vector<8xf32>
    %364 = vector.multi_reduction <maximumf>, %363, %cst_106 [1] : vector<8x16xf32> to vector<8xf32>
    %365 = vector.shape_cast %364 : vector<8xf32> to vector<8x1xf32>
    %366 = vector.broadcast %365 : vector<8x1xf32> to vector<8x16xf32>
    %367 = arith.subf %363, %366 : vector<8x16xf32>
    %368 = math.exp %367 : vector<8x16xf32>
    %cst_107 = arith.constant dense<0.000000e+00> : vector<8xf32>
    %369 = vector.multi_reduction <add>, %368, %cst_107 [1] : vector<8x16xf32> to vector<8xf32>
    %370 = vector.shape_cast %369 : vector<8xf32> to vector<8x1xf32>
    %371 = tpu.reciprocal %370 {approx = true} : vector<8x1xf32> -> vector<8x1xf32>
    %372 = vector.broadcast %371 : vector<8x1xf32> to vector<8x16xf32>
    %373 = arith.mulf %368, %372 : vector<8x16xf32>
    %374 = arith.mulf %373, %359 : vector<8x16xf32>
    %375 = arith.truncf %374 : vector<8x16xf32> to vector<8x16xbf16>
    %376 = vector.extract_strided_slice %351 {offsets = [0, 0], sizes = [16, 8], strides = [1, 1]} : vector<16x32xbf16> to vector<16x8xbf16>
    %cst_108 = arith.constant dense<0.000000e+00> : vector<8x8xf32>
    %377 = tpu.matmul %375, %376, %cst_108 {dimension_numbers = #tpu.dot_dimension_numbers<[1], [0], [0], [1], [0, 0, 1, 1], [], []>} : vector<8x16xbf16>, vector<16x8xbf16>, vector<8x8xf32> -> vector<8x8xf32>
    %378 = vector.extract_strided_slice %349 {offsets = [0, 8], sizes = [8, 8], strides = [1, 1]} : vector<8x32xbf16> to vector<8x8xbf16>
    %379 = vector.extract_strided_slice %350 {offsets = [0, 8], sizes = [16, 8], strides = [1, 1]} : vector<16x32xbf16> to vector<16x8xbf16>
    %cst_109 = arith.constant dense<0.000000e+00> : vector<8x16xf32>
    %380 = tpu.matmul %378, %379, %cst_109 {dimension_numbers = #tpu.dot_dimension_numbers<[1], [1], [0], [0], [0, 0, 1, 0], [], []>} : vector<8x8xbf16>, vector<16x8xbf16>, vector<8x16xf32> -> vector<8x16xf32>
    %381 = arith.addf %380, %355 : vector<8x16xf32>
    %cst_110 = arith.constant dense<0xFF800000> : vector<8xf32>
    %382 = vector.multi_reduction <maximumf>, %381, %cst_110 [1] : vector<8x16xf32> to vector<8xf32>
    %383 = vector.shape_cast %382 : vector<8xf32> to vector<8x1xf32>
    %384 = vector.broadcast %383 : vector<8x1xf32> to vector<8x16xf32>
    %385 = arith.subf %381, %384 : vector<8x16xf32>
    %386 = math.exp %385 : vector<8x16xf32>
    %cst_111 = arith.constant dense<0.000000e+00> : vector<8xf32>
    %387 = vector.multi_reduction <add>, %386, %cst_111 [1] : vector<8x16xf32> to vector<8xf32>
    %388 = vector.shape_cast %387 : vector<8xf32> to vector<8x1xf32>
    %389 = tpu.reciprocal %388 {approx = true} : vector<8x1xf32> -> vector<8x1xf32>
    %390 = vector.broadcast %389 : vector<8x1xf32> to vector<8x16xf32>
    %391 = arith.mulf %386, %390 : vector<8x16xf32>
    %392 = arith.mulf %391, %359 : vector<8x16xf32>
    %393 = arith.truncf %392 : vector<8x16xf32> to vector<8x16xbf16>
    %394 = vector.extract_strided_slice %351 {offsets = [0, 8], sizes = [16, 8], strides = [1, 1]} : vector<16x32xbf16> to vector<16x8xbf16>
    %cst_112 = arith.constant dense<0.000000e+00> : vector<8x8xf32>
    %395 = tpu.matmul %393, %394, %cst_112 {dimension_numbers = #tpu.dot_dimension_numbers<[1], [0], [0], [1], [0, 0, 1, 1], [], []>} : vector<8x16xbf16>, vector<16x8xbf16>, vector<8x8xf32> -> vector<8x8xf32>
    %396 = vector.extract_strided_slice %349 {offsets = [0, 16], sizes = [8, 8], strides = [1, 1]} : vector<8x32xbf16> to vector<8x8xbf16>
    %397 = vector.extract_strided_slice %350 {offsets = [0, 16], sizes = [16, 8], strides = [1, 1]} : vector<16x32xbf16> to vector<16x8xbf16>
    %cst_113 = arith.constant dense<0.000000e+00> : vector<8x16xf32>
    %398 = tpu.matmul %396, %397, %cst_113 {dimension_numbers = #tpu.dot_dimension_numbers<[1], [1], [0], [0], [0, 0, 1, 0], [], []>} : vector<8x8xbf16>, vector<16x8xbf16>, vector<8x16xf32> -> vector<8x16xf32>
    %399 = arith.addf %398, %355 : vector<8x16xf32>
    %cst_114 = arith.constant dense<0xFF800000> : vector<8xf32>
    %400 = vector.multi_reduction <maximumf>, %399, %cst_114 [1] : vector<8x16xf32> to vector<8xf32>
    %401 = vector.shape_cast %400 : vector<8xf32> to vector<8x1xf32>
    %402 = vector.broadcast %401 : vector<8x1xf32> to vector<8x16xf32>
    %403 = arith.subf %399, %402 : vector<8x16xf32>
    %404 = math.exp %403 : vector<8x16xf32>
    %cst_115 = arith.constant dense<0.000000e+00> : vector<8xf32>
    %405 = vector.multi_reduction <add>, %404, %cst_115 [1] : vector<8x16xf32> to vector<8xf32>
    %406 = vector.shape_cast %405 : vector<8xf32> to vector<8x1xf32>
    %407 = tpu.reciprocal %406 {approx = true} : vector<8x1xf32> -> vector<8x1xf32>
    %408 = vector.broadcast %407 : vector<8x1xf32> to vector<8x16xf32>
    %409 = arith.mulf %404, %408 : vector<8x16xf32>
    %410 = arith.mulf %409, %359 : vector<8x16xf32>
    %411 = arith.truncf %410 : vector<8x16xf32> to vector<8x16xbf16>
    %412 = vector.extract_strided_slice %351 {offsets = [0, 16], sizes = [16, 8], strides = [1, 1]} : vector<16x32xbf16> to vector<16x8xbf16>
    %cst_116 = arith.constant dense<0.000000e+00> : vector<8x8xf32>
    %413 = tpu.matmul %411, %412, %cst_116 {dimension_numbers = #tpu.dot_dimension_numbers<[1], [0], [0], [1], [0, 0, 1, 1], [], []>} : vector<8x16xbf16>, vector<16x8xbf16>, vector<8x8xf32> -> vector<8x8xf32>
    %414 = vector.extract_strided_slice %349 {offsets = [0, 24], sizes = [8, 8], strides = [1, 1]} : vector<8x32xbf16> to vector<8x8xbf16>
    %415 = vector.extract_strided_slice %350 {offsets = [0, 24], sizes = [16, 8], strides = [1, 1]} : vector<16x32xbf16> to vector<16x8xbf16>
    %cst_117 = arith.constant dense<0.000000e+00> : vector<8x16xf32>
    %416 = tpu.matmul %414, %415, %cst_117 {dimension_numbers = #tpu.dot_dimension_numbers<[1], [1], [0], [0], [0, 0, 1, 0], [], []>} : vector<8x8xbf16>, vector<16x8xbf16>, vector<8x16xf32> -> vector<8x16xf32>
    %417 = arith.addf %416, %355 : vector<8x16xf32>
    %cst_118 = arith.constant dense<0xFF800000> : vector<8xf32>
    %418 = vector.multi_reduction <maximumf>, %417, %cst_118 [1] : vector<8x16xf32> to vector<8xf32>
    %419 = vector.shape_cast %418 : vector<8xf32> to vector<8x1xf32>
    %420 = vector.broadcast %419 : vector<8x1xf32> to vector<8x16xf32>
    %421 = arith.subf %417, %420 : vector<8x16xf32>
    %422 = math.exp %421 : vector<8x16xf32>
    %cst_119 = arith.constant dense<0.000000e+00> : vector<8xf32>
    %423 = vector.multi_reduction <add>, %422, %cst_119 [1] : vector<8x16xf32> to vector<8xf32>
    %424 = vector.shape_cast %423 : vector<8xf32> to vector<8x1xf32>
    %425 = tpu.reciprocal %424 {approx = true} : vector<8x1xf32> -> vector<8x1xf32>
    %426 = vector.broadcast %425 : vector<8x1xf32> to vector<8x16xf32>
    %427 = arith.mulf %422, %426 : vector<8x16xf32>
    %428 = arith.mulf %427, %359 : vector<8x16xf32>
    %429 = arith.truncf %428 : vector<8x16xf32> to vector<8x16xbf16>
    %430 = vector.extract_strided_slice %351 {offsets = [0, 24], sizes = [16, 8], strides = [1, 1]} : vector<16x32xbf16> to vector<16x8xbf16>
    %cst_120 = arith.constant dense<0.000000e+00> : vector<8x8xf32>
    %431 = tpu.matmul %429, %430, %cst_120 {dimension_numbers = #tpu.dot_dimension_numbers<[1], [0], [0], [1], [0, 0, 1, 1], [], []>} : vector<8x16xbf16>, vector<16x8xbf16>, vector<8x8xf32> -> vector<8x8xf32>
    %432 = tpu.concatenate %377, %395, %413, %431 in 1 : vector<8x8xf32>, vector<8x8xf32>, vector<8x8xf32>, vector<8x8xf32> -> vector<8x32xf32>
    %433 = tpu.concatenate %348, %432 in 0 : vector<8x32xf32>, vector<8x32xf32> -> vector<16x32xf32>
    %434 = arith.truncf %433 : vector<16x32xf32> to vector<16x32xbf16>
    %c0_121 = arith.constant 0 : index
    %c0_122 = arith.constant 0 : index
    %c0_123 = arith.constant 0 : index
    %435 = vector.load %arg16[%c0_121, %c0_122, %c0_123] : memref<1x32x32xbf16, #tpu.memory_space<vmem>>, vector<1x32x32xbf16>
    %436 = vector.shape_cast %435 : vector<1x32x32xbf16> to vector<32x32xbf16>
    %cst_124 = arith.constant dense<0.000000e+00> : vector<16x32xf32>
    %437 = tpu.matmul %434, %436, %cst_124 {dimension_numbers = #tpu.dot_dimension_numbers<[1], [0], [0], [1], [0, 0, 1, 1], [], []>} : vector<16x32xbf16>, vector<32x32xbf16>, vector<16x32xf32> -> vector<16x32xf32>
    %c0_125 = arith.constant 0 : index
    %c0_126 = arith.constant 0 : index
    %c0_127 = arith.constant 0 : index
    %438 = vector.load %arg17[%c0_125, %c0_126, %c0_127] : memref<1x1x32xf32, #tpu.memory_space<vmem>>, vector<1x1x32xf32>
    %439 = vector.shape_cast %438 : vector<1x1x32xf32> to vector<1x32xf32>
    %440 = vector.broadcast %439 : vector<1x32xf32> to vector<16x32xf32>
    %441 = arith.addf %437, %440 : vector<16x32xf32>
    %442 = arith.addf %221, %441 : vector<16x32xf32>
    %443 = vector.extract_strided_slice %4 {offsets = [4, 0], sizes = [1, 32], strides = [1, 1]} : vector<8x32xf32> to vector<1x32xf32>
    %444 = vector.extract_strided_slice %4 {offsets = [5, 0], sizes = [1, 32], strides = [1, 1]} : vector<8x32xf32> to vector<1x32xf32>
    %cst_128 = arith.constant dense<0.000000e+00> : vector<16xf32>
    %445 = vector.multi_reduction <add>, %442, %cst_128 [1] : vector<16x32xf32> to vector<16xf32>
    %446 = vector.shape_cast %445 : vector<16xf32> to vector<16x1xf32>
    %cst_129 = arith.constant 3.200000e+01 : f32
    %447 = vector.broadcast %cst_129 : f32 to vector<16x1xf32>
    %448 = arith.divf %446, %447 : vector<16x1xf32>
    %449 = vector.broadcast %448 : vector<16x1xf32> to vector<16x32xf32>
    %450 = arith.subf %442, %449 : vector<16x32xf32>
    %451 = arith.mulf %450, %450 : vector<16x32xf32>
    %cst_130 = arith.constant dense<0.000000e+00> : vector<16xf32>
    %452 = vector.multi_reduction <add>, %451, %cst_130 [1] : vector<16x32xf32> to vector<16xf32>
    %453 = vector.shape_cast %452 : vector<16xf32> to vector<16x1xf32>
    %cst_131 = arith.constant 3.200000e+01 : f32
    %454 = vector.broadcast %cst_131 : f32 to vector<16x1xf32>
    %455 = arith.divf %453, %454 : vector<16x1xf32>
    %cst_132 = arith.constant 9.99999974E-6 : f32
    %456 = vector.broadcast %cst_132 : f32 to vector<16x1xf32>
    %457 = arith.addf %455, %456 : vector<16x1xf32>
    %458 = math.rsqrt %457 : vector<16x1xf32>
    %459 = vector.broadcast %458 : vector<16x1xf32> to vector<16x32xf32>
    %460 = arith.mulf %450, %459 : vector<16x32xf32>
    %461 = vector.broadcast %443 : vector<1x32xf32> to vector<16x32xf32>
    %462 = arith.mulf %460, %461 : vector<16x32xf32>
    %463 = vector.broadcast %444 : vector<1x32xf32> to vector<16x32xf32>
    %464 = arith.addf %462, %463 : vector<16x32xf32>
    %465 = arith.truncf %464 : vector<16x32xf32> to vector<16x32xbf16>
    %c0_133 = arith.constant 0 : index
    %c0_134 = arith.constant 0 : index
    %c0_135 = arith.constant 0 : index
    %466 = vector.load %arg18[%c0_133, %c0_134, %c0_135] : memref<1x32x64xbf16, #tpu.memory_space<vmem>>, vector<1x32x64xbf16>
    %467 = vector.shape_cast %466 : vector<1x32x64xbf16> to vector<32x64xbf16>
    %cst_136 = arith.constant dense<0.000000e+00> : vector<16x64xf32>
    %468 = tpu.matmul %465, %467, %cst_136 {dimension_numbers = #tpu.dot_dimension_numbers<[1], [0], [0], [1], [0, 0, 1, 1], [], []>} : vector<16x32xbf16>, vector<32x64xbf16>, vector<16x64xf32> -> vector<16x64xf32>
    %c0_137 = arith.constant 0 : index
    %c0_138 = arith.constant 0 : index
    %c0_139 = arith.constant 0 : index
    %469 = vector.load %arg19[%c0_137, %c0_138, %c0_139] : memref<1x1x64xf32, #tpu.memory_space<vmem>>, vector<1x1x64xf32>
    %470 = vector.shape_cast %469 : vector<1x1x64xf32> to vector<1x64xf32>
    %471 = vector.broadcast %470 : vector<1x64xf32> to vector<16x64xf32>
    %472 = arith.addf %468, %471 : vector<16x64xf32>
    %cst_140 = arith.constant 0.000000e+00 : f32
    %473 = vector.broadcast %cst_140 : f32 to vector<16x64xf32>
    %474 = arith.maximumf %472, %473 : vector<16x64xf32>
    %475 = arith.truncf %474 : vector<16x64xf32> to vector<16x64xbf16>
    %c0_141 = arith.constant 0 : index
    %c0_142 = arith.constant 0 : index
    %c0_143 = arith.constant 0 : index
    %476 = vector.load %arg20[%c0_141, %c0_142, %c0_143] : memref<1x64x32xbf16, #tpu.memory_space<vmem>>, vector<1x64x32xbf16>
    %477 = vector.shape_cast %476 : vector<1x64x32xbf16> to vector<64x32xbf16>
    %cst_144 = arith.constant dense<0.000000e+00> : vector<16x32xf32>
    %478 = tpu.matmul %475, %477, %cst_144 {dimension_numbers = #tpu.dot_dimension_numbers<[1], [0], [0], [1], [0, 0, 1, 1], [], []>} : vector<16x64xbf16>, vector<64x32xbf16>, vector<16x32xf32> -> vector<16x32xf32>
    %c0_145 = arith.constant 0 : index
    %c0_146 = arith.constant 0 : index
    %c0_147 = arith.constant 0 : index
    %479 = vector.load %arg21[%c0_145, %c0_146, %c0_147] : memref<1x1x32xf32, #tpu.memory_space<vmem>>, vector<1x1x32xf32>
    %480 = vector.shape_cast %479 : vector<1x1x32xf32> to vector<1x32xf32>
    %481 = vector.broadcast %480 : vector<1x32xf32> to vector<16x32xf32>
    %482 = arith.addf %478, %481 : vector<16x32xf32>
    %483 = arith.addf %442, %482 : vector<16x32xf32>
    %c0_148 = arith.constant 0 : index
    %c0_149 = arith.constant 0 : index
    %484 = vector.load %arg27[%c0_148, %c0_149] : memref<16x32xf32, #tpu.memory_space<vmem>>, vector<16x32xf32>
    tpu.vector_store %arg27[%c0_148, %c0_149], %483 {strides = array<i32>} : memref<16x32xf32, #tpu.memory_space<vmem>>, vector<16x32xf32>,
    %c1_i32 = arith.constant 1 : i32
    %485 = arith.cmpi eq, %arg1, %c1_i32 : i32
    %486 = arith.extui %485 : i1 to i32
    %c0_i32_150 = arith.constant 0 : i32
    %487 = arith.cmpi ne, %486, %c0_i32_150 : i32
    scf.if %487 {
      %c0_151 = arith.constant 0 : index
      %c0_152 = arith.constant 0 : index
      %488 = vector.load %arg23[%c0_151, %c0_152] : memref<2x32xf32, #tpu.memory_space<vmem>>, vector<1x32xf32>
      %c1 = arith.constant 1 : index
      %c0_153 = arith.constant 0 : index
      %489 = vector.load %arg23[%c1, %c0_153] : memref<2x32xf32, #tpu.memory_space<vmem>>, vector<1x32xf32>
      %cst_154 = arith.constant dense<0.000000e+00> : vector<16xf32>
      %490 = vector.multi_reduction <add>, %483, %cst_154 [1] : vector<16x32xf32> to vector<16xf32>
      %491 = vector.shape_cast %490 : vector<16xf32> to vector<16x1xf32>
      %cst_155 = arith.constant 3.200000e+01 : f32
      %492 = vector.broadcast %cst_155 : f32 to vector<16x1xf32>
      %493 = arith.divf %491, %492 : vector<16x1xf32>
      %494 = vector.broadcast %493 : vector<16x1xf32> to vector<16x32xf32>
      %495 = arith.subf %483, %494 : vector<16x32xf32>
      %496 = arith.mulf %495, %495 : vector<16x32xf32>
      %cst_156 = arith.constant dense<0.000000e+00> : vector<16xf32>
      %497 = vector.multi_reduction <add>, %496, %cst_156 [1] : vector<16x32xf32> to vector<16xf32>
      %498 = vector.shape_cast %497 : vector<16xf32> to vector<16x1xf32>
      %cst_157 = arith.constant 3.200000e+01 : f32
      %499 = vector.broadcast %cst_157 : f32 to vector<16x1xf32>
      %500 = arith.divf %498, %499 : vector<16x1xf32>
      %cst_158 = arith.constant 9.99999996E-13 : f32
      %501 = vector.broadcast %cst_158 : f32 to vector<16x1xf32>
      %502 = arith.addf %500, %501 : vector<16x1xf32>
      %503 = math.rsqrt %502 : vector<16x1xf32>
      %504 = vector.broadcast %503 : vector<16x1xf32> to vector<16x32xf32>
      %505 = arith.mulf %495, %504 : vector<16x32xf32>
      %506 = vector.broadcast %488 : vector<1x32xf32> to vector<16x32xf32>
      %507 = arith.mulf %505, %506 : vector<16x32xf32>
      %508 = vector.broadcast %489 : vector<1x32xf32> to vector<16x32xf32>
      %509 = arith.addf %507, %508 : vector<16x32xf32>
      %510 = arith.truncf %509 : vector<16x32xf32> to vector<16x32xbf16>
      %c0_159 = arith.constant 0 : index
      %c0_160 = arith.constant 0 : index
      %511 = vector.load %arg24[%c0_159, %c0_160] : memref<32x128xbf16, #tpu.memory_space<vmem>>, vector<32x128xbf16>
      %cst_161 = arith.constant dense<0.000000e+00> : vector<16x128xf32>
      %512 = tpu.matmul %510, %511, %cst_161 {dimension_numbers = #tpu.dot_dimension_numbers<[1], [0], [0], [1], [0, 0, 1, 1], [], []>} : vector<16x32xbf16>, vector<32x128xbf16>, vector<16x128xf32> -> vector<16x128xf32>
      %c0_162 = arith.constant 0 : index
      %c0_163 = arith.constant 0 : index
      %513 = vector.load %arg25[%c0_162, %c0_163] : memref<1x128xf32, #tpu.memory_space<vmem>>, vector<1x128xf32>
      %514 = vector.broadcast %513 : vector<1x128xf32> to vector<16x128xf32>
      %515 = arith.addf %512, %514 : vector<16x128xf32>
      %516 = vector.shape_cast %515 : vector<16x128xf32> to vector<2x8x128xf32>
      %c0_164 = arith.constant 0 : index
      %c0_165 = arith.constant 0 : index
      %c0_166 = arith.constant 0 : index
      %517 = vector.load %arg26[%c0_164, %c0_165, %c0_166] : memref<2x8x128xf32, #tpu.memory_space<vmem>>, vector<2x8x128xf32>
      tpu.vector_store %arg26[%c0_164, %c0_165, %c0_166], %516 {strides = array<i32>} : memref<2x8x128xf32, #tpu.memory_space<vmem>>, vector<2x8x128xf32>,
    } else {
    }
    return
  }
  func.func @transform_0(%arg0: i32, %arg1: i32) -> (i32, i32, i32) {
    %c0_i32 = arith.constant 0 : i32
    %c0_i32_0 = arith.constant 0 : i32
    %c0_i32_1 = arith.constant 0 : i32
    return %arg0, %c0_i32, %c0_i32_0 : i32, i32, i32
  }
  func.func @transform_1(%arg0: i32, %arg1: i32) -> (i32, i32, i32) {
    %c0_i32 = arith.constant 0 : i32
    %c0_i32_0 = arith.constant 0 : i32
    %c0_i32_1 = arith.constant 0 : i32
    return %arg0, %c0_i32, %c0_i32_0 : i32, i32, i32
  }
  func.func @transform_2(%arg0: i32, %arg1: i32) -> (i32, i32, i32) {
    %c0_i32 = arith.constant 0 : i32
    %c0_i32_0 = arith.constant 0 : i32
    %c0_i32_1 = arith.constant 0 : i32
    return %arg0, %c0_i32, %c0_i32_0 : i32, i32, i32
  }
  func.func @transform_3(%arg0: i32, %arg1: i32) -> (i32, i32, i32) {
    %c0_i32 = arith.constant 0 : i32
    %c0_i32_0 = arith.constant 0 : i32
    %c0_i32_1 = arith.constant 0 : i32
    return %arg0, %c0_i32, %c0_i32_0 : i32, i32, i32
  }
  func.func @transform_4(%arg0: i32, %arg1: i32) -> (i32, i32, i32) {
    %c0_i32 = arith.constant 0 : i32
    %c0_i32_0 = arith.constant 0 : i32
    %c0_i32_1 = arith.constant 0 : i32
    return %arg0, %c0_i32, %c0_i32_0 : i32, i32, i32
  }
  func.func @transform_5(%arg0: i32, %arg1: i32) -> (i32, i32, i32) {
    %c0_i32 = arith.constant 0 : i32
    %c0_i32_0 = arith.constant 0 : i32
    %c0_i32_1 = arith.constant 0 : i32
    return %arg0, %c0_i32, %c0_i32_0 : i32, i32, i32
  }
  func.func @transform_6(%arg0: i32, %arg1: i32) -> (i32, i32, i32) {
    %c0_i32 = arith.constant 0 : i32
    %c0_i32_0 = arith.constant 0 : i32
    %c0_i32_1 = arith.constant 0 : i32
    return %arg1, %c0_i32, %c0_i32_0 : i32, i32, i32
  }
  func.func @transform_7(%arg0: i32, %arg1: i32) -> (i32, i32, i32) {
    %c0_i32 = arith.constant 0 : i32
    %c0_i32_0 = arith.constant 0 : i32
    %c0_i32_1 = arith.constant 0 : i32
    return %arg1, %c0_i32, %c0_i32_0 : i32, i32, i32
  }
  func.func @transform_8(%arg0: i32, %arg1: i32) -> (i32, i32, i32) {
    %c0_i32 = arith.constant 0 : i32
    %c0_i32_0 = arith.constant 0 : i32
    %c0_i32_1 = arith.constant 0 : i32
    return %arg1, %c0_i32, %c0_i32_0 : i32, i32, i32
  }
  func.func @transform_9(%arg0: i32, %arg1: i32) -> (i32, i32, i32) {
    %c0_i32 = arith.constant 0 : i32
    %c0_i32_0 = arith.constant 0 : i32
    %c0_i32_1 = arith.constant 0 : i32
    return %arg1, %c0_i32, %c0_i32_0 : i32, i32, i32
  }
  func.func @transform_10(%arg0: i32, %arg1: i32) -> (i32, i32, i32) {
    %c0_i32 = arith.constant 0 : i32
    %c0_i32_0 = arith.constant 0 : i32
    %c0_i32_1 = arith.constant 0 : i32
    return %arg1, %c0_i32, %c0_i32_0 : i32, i32, i32
  }
  func.func @transform_11(%arg0: i32, %arg1: i32) -> (i32, i32, i32) {
    %c0_i32 = arith.constant 0 : i32
    %c0_i32_0 = arith.constant 0 : i32
    %c0_i32_1 = arith.constant 0 : i32
    return %arg1, %c0_i32, %c0_i32_0 : i32, i32, i32
  }
  func.func @transform_12(%arg0: i32, %arg1: i32) -> (i32, i32, i32) {
    %c0_i32 = arith.constant 0 : i32
    %c0_i32_0 = arith.constant 0 : i32
    %c0_i32_1 = arith.constant 0 : i32
    return %arg1, %c0_i32, %c0_i32_0 : i32, i32, i32
  }
  func.func @transform_13(%arg0: i32, %arg1: i32) -> (i32, i32, i32) {
    %c0_i32 = arith.constant 0 : i32
    %c0_i32_0 = arith.constant 0 : i32
    %c0_i32_1 = arith.constant 0 : i32
    return %arg1, %c0_i32, %c0_i32_0 : i32, i32, i32
  }
  func.func @transform_14(%arg0: i32, %arg1: i32) -> (i32, i32, i32) {
    %c0_i32 = arith.constant 0 : i32
    %c0_i32_0 = arith.constant 0 : i32
    %c0_i32_1 = arith.constant 0 : i32
    return %arg1, %c0_i32, %c0_i32_0 : i32, i32, i32
  }
  func.func @transform_15(%arg0: i32, %arg1: i32) -> (i32, i32, i32) {
    %c0_i32 = arith.constant 0 : i32
    %c0_i32_0 = arith.constant 0 : i32
    %c0_i32_1 = arith.constant 0 : i32
    return %arg1, %c0_i32, %c0_i32_0 : i32, i32, i32
  }
  func.func @transform_16(%arg0: i32, %arg1: i32) -> (i32, i32, i32) {
    %c0_i32 = arith.constant 0 : i32
    %c0_i32_0 = arith.constant 0 : i32
    %c0_i32_1 = arith.constant 0 : i32
    return %arg1, %c0_i32, %c0_i32_0 : i32, i32, i32
  }
  func.func @transform_17(%arg0: i32, %arg1: i32) -> (i32, i32, i32) {
    %c0_i32 = arith.constant 0 : i32
    %c0_i32_0 = arith.constant 0 : i32
    %c0_i32_1 = arith.constant 0 : i32
    return %arg1, %c0_i32, %c0_i32_0 : i32, i32, i32
  }
  func.func @transform_18(%arg0: i32, %arg1: i32) -> (i32, i32, i32) {
    %c0_i32 = arith.constant 0 : i32
    %c0_i32_0 = arith.constant 0 : i32
    %c0_i32_1 = arith.constant 0 : i32
    return %arg1, %c0_i32, %c0_i32_0 : i32, i32, i32
  }
  func.func @transform_19(%arg0: i32, %arg1: i32) -> (i32, i32, i32) {
    %c0_i32 = arith.constant 0 : i32
    %c0_i32_0 = arith.constant 0 : i32
    %c0_i32_1 = arith.constant 0 : i32
    return %arg1, %c0_i32, %c0_i32_0 : i32, i32, i32
  }
  func.func @transform_20(%arg0: i32, %arg1: i32) -> (i32, i32, i32) {
    %c0_i32 = arith.constant 0 : i32
    %c0_i32_0 = arith.constant 0 : i32
    %c0_i32_1 = arith.constant 0 : i32
    return %arg1, %c0_i32, %c0_i32_0 : i32, i32, i32
  }
  func.func @transform_21(%arg0: i32, %arg1: i32) -> (i32, i32) {
    %c0_i32 = arith.constant 0 : i32
    %c0_i32_0 = arith.constant 0 : i32
    %c0_i32_1 = arith.constant 0 : i32
    return %c0_i32, %c0_i32_0 : i32, i32
  }
  func.func @transform_22(%arg0: i32, %arg1: i32) -> (i32, i32) {
    %c0_i32 = arith.constant 0 : i32
    %c0_i32_0 = arith.constant 0 : i32
    %c0_i32_1 = arith.constant 0 : i32
    return %c0_i32, %c0_i32_0 : i32, i32
  }
  func.func @transform_23(%arg0: i32, %arg1: i32) -> (i32, i32) {
    %c0_i32 = arith.constant 0 : i32
    %c0_i32_0 = arith.constant 0 : i32
    %c0_i32_1 = arith.constant 0 : i32
    return %c0_i32, %c0_i32_0 : i32, i32
  }
  func.func @transform_24(%arg0: i32, %arg1: i32) -> (i32, i32, i32) {
    %c0_i32 = arith.constant 0 : i32
    %c0_i32_0 = arith.constant 0 : i32
    %c0_i32_1 = arith.constant 0 : i32
    return %arg0, %c0_i32, %c0_i32_0 : i32, i32, i32
  }
}

</mosaic_0001>

<llo_original>
// kernel: cif_decoder_san_forward.1
$region0: #{cif_decoder_san_forward.1}
  #allocation0 [shape = 'u32[]', space=smem, size = 0x4, offset = 0x4, fixed_abs, tag = 'smem constant byte address 0x4 - core index']
  #allocation1 [shape = 'u32[144,128]{1,0:T(1,128)}', space=vmem, size = 0x12000, scoped, tag = 'internal scratch']
  #allocation2 [shape = 'f32[16,32]{1,0:T(8,128)}', space=vmem, size = 0x2000, scoped, tag = 'scratch operand']
  %s0 = inlined_call_operand.vmem [shape: bf16[2,8,32], index: 0, kind: input, shape index: {}]
  %s1 = inlined_call_operand.vmem [shape: bf16[2,16,32], index: 1, kind: input, shape index: {}]
  %s2 = inlined_call_operand.vmem [shape: f32[2,1,8], index: 2, kind: input, shape index: {}]
  %s3 = inlined_call_operand.vmem [shape: f32[2,1,8], index: 3, kind: input, shape index: {}]
  %s4 = inlined_call_operand.vmem [shape: f32[2,1,16], index: 4, kind: input, shape index: {}]
  %s5 = inlined_call_operand.vmem [shape: f32[2,1,16], index: 5, kind: input, shape index: {}]
  %s6 = inlined_call_operand.vmem [shape: bf16[2,32,96], index: 6, kind: input, shape index: {}]
  %s7 = inlined_call_operand.hbm [shape: f32[2,1,96], index: 7, kind: input, shape index: {}]
  %s8 = inlined_call_operand.vmem [shape: bf16[2,32,32], index: 8, kind: input, shape index: {}]
  %s9 = inlined_call_operand.hbm [shape: f32[2,1,32], index: 9, kind: input, shape index: {}]
  %s10 = inlined_call_operand.vmem [shape: bf16[2,32,32], index: 10, kind: input, shape index: {}]
  %s11 = inlined_call_operand.vmem [shape: f32[2,1,32], index: 11, kind: input, shape index: {}]
  %s12 = inlined_call_operand.vmem [shape: bf16[2,32,64], index: 12, kind: input, shape index: {}]
  %s13 = inlined_call_operand.vmem [shape: f32[2,1,64], index: 13, kind: input, shape index: {}]
  %s14 = inlined_call_operand.vmem [shape: bf16[2,32,32], index: 14, kind: input, shape index: {}]
  %s15 = inlined_call_operand.vmem [shape: f32[2,1,32], index: 15, kind: input, shape index: {}]
  %s16 = inlined_call_operand.hbm [shape: bf16[2,32,64], index: 16, kind: input, shape index: {}]
  %s17 = inlined_call_operand.hbm [shape: f32[2,1,64], index: 17, kind: input, shape index: {}]
  %s18 = inlined_call_operand.vmem [shape: bf16[2,64,32], index: 18, kind: input, shape index: {}]
  %s19 = inlined_call_operand.hbm [shape: f32[2,1,32], index: 19, kind: input, shape index: {}]
  %s20 = inlined_call_operand.hbm [shape: f32[2,8,32], index: 20, kind: input, shape index: {}]
  %s21 = inlined_call_operand.hbm [shape: f32[2,32], index: 21, kind: input, shape index: {}]
  %s22 = inlined_call_operand.hbm [shape: bf16[32,128], index: 22, kind: input, shape index: {}]
  %s23 = inlined_call_operand.vmem [shape: f32[1,128], index: 23, kind: input, shape index: {}]
  %s24 = inlined_call_operand.hbm [shape: f32[2,8,128], index: 24, kind: output, shape index: {}]
  %s25 = sld [smem:[#allocation0]]
  $region169: #{cif_decoder_san_forward.1} parent=0
    _
  %s27 = ssub.s32 1, %s25
  %s28 = scalar_select 0, %s27, %s25
  $region1: #{cif_decoder_san_forward.1} parent=0
    #allocation3 [shape = 'u8[1024]{0}', space=vmem, size = 0x400, scoped, tag = 'input window, operand 7']
    #allocation4 [shape = 's32[2]{0}', space=sflag, size = 0x8, scoped, tag = 'scoped memory for cif_decoder_san_forward.1']
    #allocation5 [shape = 's32[2]{0}', space=sflag, size = 0x8, scoped, tag = 'scoped memory for cif_decoder_san_forward.1']
    #allocation6 [shape = 'u8[1024]{0}', space=vmem, size = 0x400, scoped, tag = 'input window, operand 9']
    #allocation7 [shape = 's32[2]{0}', space=sflag, size = 0x8, scoped, tag = 'scoped memory for cif_decoder_san_forward.1']
    #allocation8 [shape = 'u8[16384]{0}', space=vmem, size = 0x4000, scoped, tag = 'input window, operand 16']
    #allocation9 [shape = 'u8[1024]{0}', space=vmem, size = 0x400, scoped, tag = 'input window, operand 17']
    #allocation10 [shape = 's32[2]{0}', space=sflag, size = 0x8, scoped, tag = 'scoped memory for cif_decoder_san_forward.1']
    #allocation11 [shape = 'u8[1024]{0}', space=vmem, size = 0x400, scoped, tag = 'input window, operand 19']
    #allocation12 [shape = 'u8[8192]{0}', space=vmem, size = 0x2000, scoped, tag = 'input window, operand 20']
    #allocation13 [shape = 's32[2]{0}', space=sflag, size = 0x8, scoped, tag = 'scoped memory for cif_decoder_san_forward.1']
    #allocation14 [shape = 'u8[1024]{0}', space=vmem, size = 0x400, scoped, tag = 'input window, operand 21, single buffered']
    #allocation15 [shape = 'u8[8192]{0}', space=vmem, size = 0x2000, scoped, tag = 'input window, operand 22, single buffered']
    #allocation16 [shape = 's32[1]{0}', space=sflag, size = 0x4, scoped, tag = 'scoped memory for cif_decoder_san_forward.1']
    #allocation17 [shape = 'u8[8192]{0}', space=vmem, size = 0x2000, scoped, tag = 'output window, operand 0, single buffered']
    %29 = vsyncpa [#allocation4], 0
    %s30 = scalar_lea.sflag [#allocation4], 1
    %31 = vsyncpa %s30, 0
    %32 = vsyncpa [#allocation7], 0
    %s33 = scalar_lea.sflag [#allocation7], 1
    %34 = vsyncpa %s33, 0
    %35 = vsyncpa [#allocation10], 0
    %s36 = scalar_lea.sflag [#allocation10], 1
    %37 = vsyncpa %s36, 0
    %38 = vsyncpa [#allocation13], 0
    %s39 = scalar_lea.sflag [#allocation13], 1
    %40 = vsyncpa %s39, 0
    %41 = vsyncpa [#allocation16], 0
    %42 = vsyncpa [#allocation5], 0
    loop: start=0, step=1, limit=4
    $region2: #{cif_decoder_san_forward.1} parent=1 // loop_pre_header
      _
    $region3: #{cif_decoder_san_forward.1} parent=1 // loop_header
      %s44 = sphi 0, %s48
      %p45 = scmp.ge.s32.totalorder %s44, 4
      %s51 = sphi 0, %s63
      %s52 = sphi 0, %s59
      %s53 = sphi 0, %s51
      %s54 = sphi 0, %s52
      %s55 = sphi 0, %s53
      %s56 = sphi 0, %s54
      %s66 = sphi 0, %s68
      %s69 = sphi 0, %s66
      %s70 = sphi 0, %s69
      %s86 = sphi 0, %s70
      %s92 = sphi 0, %s94
      %s95 = sphi 0, %s92
      %s96 = sphi 0, %s95
      %s112 = sphi 0, %s96
      %s118 = sphi 0, %s120
      %s121 = sphi 0, %s118
      %s122 = sphi 0, %s121
      %s138 = sphi 0, %s122
      %s144 = sphi 0, %s146
      %s147 = sphi 0, %s144
      %s148 = sphi 0, %s147
      %s164 = sphi 0, %s148
      %s170 = sphi 0, %s172
      %s173 = sphi 0, %s170
      %s174 = sphi 0, %s173
      %s190 = sphi 0, %s174
      %s196 = sphi 0, %s198
      %s199 = sphi 0, %s196
      %s200 = sphi 0, %s199
      %s216 = sphi 0, %s200
      %s222 = sphi 0, %s224
      %s225 = sphi 0, %s222
      %s226 = sphi 0, %s225
      %s242 = sphi 0, %s226
      %s248 = sphi 0, %s250
      %s251 = sphi 0, %s248
      %s252 = sphi 0, %s251
      %s268 = sphi 0, %s252
      %s274 = sphi 0, %s276
      %s277 = sphi 0, %s274
      %s278 = sphi 0, %s277
      %s294 = sphi 0, %s278
      %s300 = sphi 0, %s302
      %s303 = sphi 0, %s300
      %s304 = sphi 0, %s303
      %s320 = sphi 0, %s304
      %s326 = sphi 0, %s328
      %s329 = sphi 0, %s326
      %s330 = sphi 0, %s329
      %s346 = sphi 0, %s330
      %s352 = sphi 0, %s354
      %s355 = sphi 0, %s352
      %s356 = sphi 0, %s355
      %s372 = sphi 0, %s356
      %s378 = sphi 0, %s380
      %s381 = sphi 0, %s378
      %s382 = sphi 0, %s381
      %s398 = sphi 0, %s382
      %s404 = sphi 0, %s406
      %s407 = sphi 0, %s404
      %s408 = sphi 0, %s407
      %s424 = sphi 0, %s408
      %s430 = sphi 0, %s432
      %s433 = sphi 0, %s430
      %s434 = sphi 0, %s433
      %s450 = sphi 0, %s434
      %s456 = sphi 0, %s458
      %s459 = sphi 0, %s456
      %s460 = sphi 0, %s459
      %s476 = sphi 0, %s460
      %s482 = sphi 0, %s484
      %s485 = sphi 0, %s482
      %s486 = sphi 0, %s485
      %s502 = sphi 0, %s486
      %s508 = sphi 0, %s510
      %s511 = sphi 0, %s508
      %s512 = sphi 0, %s511
      %s528 = sphi 0, %s512
      %s534 = sphi 0, %s536
      %s537 = sphi 0, %s534
      %s538 = sphi 0, %s537
      %s554 = sphi 0, %s538
      %s560 = sphi 0, %s562
      %s563 = sphi 0, %s560
      %s564 = sphi 0, %s563
      %s580 = sphi 0, %s564
      %s586 = sphi 0, %s588
      %s589 = sphi 0, %s586
      %s590 = sphi 0, %s589
      %s606 = sphi 0, %s590
      %s610 = sphi 0, %s610
      %s612 = sphi 0, %s610
      %s613 = sphi 0, %s612
      %s627 = sphi 0, %s613
      %s631 = sphi 0, %s631
      %s633 = sphi 0, %s631
      %s634 = sphi 0, %s633
      %s648 = sphi 0, %s634
      %s652 = sphi 0, %s652
      %s654 = sphi 0, %s652
      %s655 = sphi 0, %s654
      %s669 = sphi 0, %s655
      %s675 = sphi 0, %s677
      %s678 = sphi 0, %s675
      %s679 = sphi 0, %s678
      %s695 = sphi 0, %s679
    $region4: #{cif_decoder_san_forward.1} parent=1 // loop_header_branch
      %47 = sbr.rel (%p45) target = $region8
    $region5: #{cif_decoder_san_forward.1} parent=1 // loop_body
      %s49 = ssub.s32 %s44, 1
      %s50 = ssub.s32 %s44, 2
      %s57 = sadd.s32 1, %s52
      %p58 = scmp.ge.s32.totalorder %s57, 2
      %s59 = scalar_select %p58, 0, %s57
      %s60 = sadd.s32 1, %s51
      %s61 = scalar_select %p58, %s60, %s51
      %p62 = scmp.ge.s32.totalorder %s61, 1
      %s63 = scalar_select %p62, 0, %s61
      %s64 = ssub.s32 %s51, %s63
      %p65 = scmp.eq.s32.totalorder %s64, 0
      %s67 = sadd.s32 %s66, 1
      %s68 = scalar_select %p65, %s66, %s67
      %p71 = pneg %p65
      %p72 = scmp.eq.s32.totalorder %s44, 1
      %p73 = por %p71, %p72
      %p74 = scmp.ne.s32.totalorder %s66, %s69
      %p75 = scmp.eq.s32.totalorder %s44, 0
      %p76 = por %p74, %p75
      %p77 = scmp.ne.s32.totalorder %s66, %s69
      %p78 = scmp.eq.s32.totalorder %s49, 1
      %p79 = por %p77, %p78
      %p80 = scmp.ne.s32.totalorder %s69, %s70
      %p81 = scmp.eq.s32.totalorder %s49, 0
      %p82 = por %p80, %p81
      %p83 = scmp.ne.s32.totalorder %s69, %s70
      %p84 = scmp.eq.s32.totalorder %s50, 1
      %p85 = por %p83, %p84
      %p87 = scmp.ne.s32.totalorder %s70, %s86
      %p88 = scmp.eq.s32.totalorder %s50, 0
      %p89 = por %p87, %p88
      %s90 = ssub.s32 %s51, %s63
      %p91 = scmp.eq.s32.totalorder %s90, 0
      %s93 = sadd.s32 %s92, 1
      %s94 = scalar_select %p91, %s92, %s93
      %p97 = pneg %p91
      %p98 = scmp.eq.s32.totalorder %s44, 1
      %p99 = por %p97, %p98
      %p100 = scmp.ne.s32.totalorder %s92, %s95
      %p101 = scmp.eq.s32.totalorder %s44, 0
      %p102 = por %p100, %p101
      %p103 = scmp.ne.s32.totalorder %s92, %s95
      %p104 = scmp.eq.s32.totalorder %s49, 1
      %p105 = por %p103, %p104
      %p106 = scmp.ne.s32.totalorder %s95, %s96
      %p107 = scmp.eq.s32.totalorder %s49, 0
      %p108 = por %p106, %p107
      %p109 = scmp.ne.s32.totalorder %s95, %s96
      %p110 = scmp.eq.s32.totalorder %s50, 1
      %p111 = por %p109, %p110
      %p113 = scmp.ne.s32.totalorder %s96, %s112
      %p114 = scmp.eq.s32.totalorder %s50, 0
      %p115 = por %p113, %p114
      %s116 = ssub.s32 %s51, %s63
      %p117 = scmp.eq.s32.totalorder %s116, 0
      %s119 = sadd.s32 %s118, 1
      %s120 = scalar_select %p117, %s118, %s119
      %p123 = pneg %p117
      %p124 = scmp.eq.s32.totalorder %s44, 1
      %p125 = por %p123, %p124
      %p126 = scmp.ne.s32.totalorder %s118, %s121
      %p127 = scmp.eq.s32.totalorder %s44, 0
      %p128 = por %p126, %p127
      %p129 = scmp.ne.s32.totalorder %s118, %s121
      %p130 = scmp.eq.s32.totalorder %s49, 1
      %p131 = por %p129, %p130
      %p132 = scmp.ne.s32.totalorder %s121, %s122
      %p133 = scmp.eq.s32.totalorder %s49, 0
      %p134 = por %p132, %p133
      %p135 = scmp.ne.s32.totalorder %s121, %s122
      %p136 = scmp.eq.s32.totalorder %s50, 1
      %p137 = por %p135, %p136
      %p139 = scmp.ne.s32.totalorder %s122, %s138
      %p140 = scmp.eq.s32.totalorder %s50, 0
      %p141 = por %p139, %p140
      %s142 = ssub.s32 %s51, %s63
      %p143 = scmp.eq.s32.totalorder %s142, 0
      %s145 = sadd.s32 %s144, 1
      %s146 = scalar_select %p143, %s144, %s145
      %p149 = pneg %p143
      %p150 = scmp.eq.s32.totalorder %s44, 1
      %p151 = por %p149, %p150
      %p152 = scmp.ne.s32.totalorder %s144, %s147
      %p153 = scmp.eq.s32.totalorder %s44, 0
      %p154 = por %p152, %p153
      %p155 = scmp.ne.s32.totalorder %s144, %s147
      %p156 = scmp.eq.s32.totalorder %s49, 1
      %p157 = por %p155, %p156
      %p158 = scmp.ne.s32.totalorder %s147, %s148
      %p159 = scmp.eq.s32.totalorder %s49, 0
      %p160 = por %p158, %p159
      %p161 = scmp.ne.s32.totalorder %s147, %s148
      %p162 = scmp.eq.s32.totalorder %s50, 1
      %p163 = por %p161, %p162
      %p165 = scmp.ne.s32.totalorder %s148, %s164
      %p166 = scmp.eq.s32.totalorder %s50, 0
      %p167 = por %p165, %p166
      %s168 = ssub.s32 %s51, %s63
      %p169 = scmp.eq.s32.totalorder %s168, 0
      %s171 = sadd.s32 %s170, 1
      %s172 = scalar_select %p169, %s170, %s171
      %p175 = pneg %p169
      %p176 = scmp.eq.s32.totalorder %s44, 1
      %p177 = por %p175, %p176
      %p178 = scmp.ne.s32.totalorder %s170, %s173
      %p179 = scmp.eq.s32.totalorder %s44, 0
      %p180 = por %p178, %p179
      %p181 = scmp.ne.s32.totalorder %s170, %s173
      %p182 = scmp.eq.s32.totalorder %s49, 1
      %p183 = por %p181, %p182
      %p184 = scmp.ne.s32.totalorder %s173, %s174
      %p185 = scmp.eq.s32.totalorder %s49, 0
      %p186 = por %p184, %p185
      %p187 = scmp.ne.s32.totalorder %s173, %s174
      %p188 = scmp.eq.s32.totalorder %s50, 1
      %p189 = por %p187, %p188
      %p191 = scmp.ne.s32.totalorder %s174, %s190
      %p192 = scmp.eq.s32.totalorder %s50, 0
      %p193 = por %p191, %p192
      %s194 = ssub.s32 %s51, %s63
      %p195 = scmp.eq.s32.totalorder %s194, 0
      %s197 = sadd.s32 %s196, 1
      %s198 = scalar_select %p195, %s196, %s197
      %p201 = pneg %p195
      %p202 = scmp.eq.s32.totalorder %s44, 1
      %p203 = por %p201, %p202
      %p204 = scmp.ne.s32.totalorder %s196, %s199
      %p205 = scmp.eq.s32.totalorder %s44, 0
      %p206 = por %p204, %p205
      %p207 = scmp.ne.s32.totalorder %s196, %s199
      %p208 = scmp.eq.s32.totalorder %s49, 1
      %p209 = por %p207, %p208
      %p210 = scmp.ne.s32.totalorder %s199, %s200
      %p211 = scmp.eq.s32.totalorder %s49, 0
      %p212 = por %p210, %p211
      %p213 = scmp.ne.s32.totalorder %s199, %s200
      %p214 = scmp.eq.s32.totalorder %s50, 1
      %p215 = por %p213, %p214
      %p217 = scmp.ne.s32.totalorder %s200, %s216
      %p218 = scmp.eq.s32.totalorder %s50, 0
      %p219 = por %p217, %p218
      %s220 = ssub.s32 %s52, %s59
      %p221 = scmp.eq.s32.totalorder %s220, 0
      %s223 = sadd.s32 %s222, 1
      %s224 = scalar_select %p221, %s222, %s223
      %p227 = pneg %p221
      %p228 = scmp.eq.s32.totalorder %s44, 1
      %p229 = por %p227, %p228
      %p230 = scmp.ne.s32.totalorder %s222, %s225
      %p231 = scmp.eq.s32.totalorder %s44, 0
      %p232 = por %p230, %p231
      %p233 = scmp.ne.s32.totalorder %s222, %s225
      %p234 = scmp.eq.s32.totalorder %s49, 1
      %p235 = por %p233, %p234
      %p236 = scmp.ne.s32.totalorder %s225, %s226
      %p237 = scmp.eq.s32.totalorder %s49, 0
      %p238 = por %p236, %p237
      %p239 = scmp.ne.s32.totalorder %s225, %s226
      %p240 = scmp.eq.s32.totalorder %s50, 1
      %p241 = por %p239, %p240
      %p243 = scmp.ne.s32.totalorder %s226, %s242
      %p244 = scmp.eq.s32.totalorder %s50, 0
      %p245 = por %p243, %p244
      %s246 = ssub.s32 %s52, %s59
      %p247 = scmp.eq.s32.totalorder %s246, 0
      %s249 = sadd.s32 %s248, 1
      %s250 = scalar_select %p247, %s248, %s249
      %p253 = pneg %p247
      %p254 = scmp.eq.s32.totalorder %s44, 1
      %p255 = por %p253, %p254
      %p256 = scmp.ne.s32.totalorder %s248, %s251
      %p257 = scmp.eq.s32.totalorder %s44, 0
      %p258 = por %p256, %p257
      %p259 = scmp.ne.s32.totalorder %s248, %s251
      %p260 = scmp.eq.s32.totalorder %s49, 1
      %p261 = por %p259, %p260
      %p262 = scmp.ne.s32.totalorder %s251, %s252
      %p263 = scmp.eq.s32.totalorder %s49, 0
      %p264 = por %p262, %p263
      %p265 = scmp.ne.s32.totalorder %s251, %s252
      %p266 = scmp.eq.s32.totalorder %s50, 1
      %p267 = por %p265, %p266
      %p269 = scmp.ne.s32.totalorder %s252, %s268
      %p270 = scmp.eq.s32.totalorder %s50, 0
      %p271 = por %p269, %p270
      %s272 = ssub.s32 %s52, %s59
      %p273 = scmp.eq.s32.totalorder %s272, 0
      %s275 = sadd.s32 %s274, 1
      %s276 = scalar_select %p273, %s274, %s275
      %p279 = pneg %p273
      %p280 = scmp.eq.s32.totalorder %s44, 1
      %p281 = por %p279, %p280
      %p282 = scmp.ne.s32.totalorder %s274, %s277
      %p283 = scmp.eq.s32.totalorder %s44, 0
      %p284 = por %p282, %p283
      %p285 = scmp.ne.s32.totalorder %s274, %s277
      %p286 = scmp.eq.s32.totalorder %s49, 1
      %p287 = por %p285, %p286
      %p288 = scmp.ne.s32.totalorder %s277, %s278
      %p289 = scmp.eq.s32.totalorder %s49, 0
      %p290 = por %p288, %p289
      %p291 = scmp.ne.s32.totalorder %s277, %s278
      %p292 = scmp.eq.s32.totalorder %s50, 1
      %p293 = por %p291, %p292
      %p295 = scmp.ne.s32.totalorder %s278, %s294
      %p296 = scmp.eq.s32.totalorder %s50, 0
      %p297 = por %p295, %p296
      %s298 = ssub.s32 %s52, %s59
      %p299 = scmp.eq.s32.totalorder %s298, 0
      %s301 = sadd.s32 %s300, 1
      %s302 = scalar_select %p299, %s300, %s301
      %p305 = pneg %p299
      %p306 = scmp.eq.s32.totalorder %s44, 1
      %p307 = por %p305, %p306
      %p308 = scmp.ne.s32.totalorder %s300, %s303
      %p309 = scmp.eq.s32.totalorder %s44, 0
      %p310 = por %p308, %p309
      %p311 = scmp.ne.s32.totalorder %s300, %s303
      %p312 = scmp.eq.s32.totalorder %s49, 1
      %p313 = por %p311, %p312
      %p314 = scmp.ne.s32.totalorder %s303, %s304
      %p315 = scmp.eq.s32.totalorder %s49, 0
      %p316 = por %p314, %p315
      %p317 = scmp.ne.s32.totalorder %s303, %s304
      %p318 = scmp.eq.s32.totalorder %s50, 1
      %p319 = por %p317, %p318
      %p321 = scmp.ne.s32.totalorder %s304, %s320
      %p322 = scmp.eq.s32.totalorder %s50, 0
      %p323 = por %p321, %p322
      %s324 = ssub.s32 %s52, %s59
      %p325 = scmp.eq.s32.totalorder %s324, 0
      %s327 = sadd.s32 %s326, 1
      %s328 = scalar_select %p325, %s326, %s327
      %p331 = pneg %p325
      %p332 = scmp.eq.s32.totalorder %s44, 1
      %p333 = por %p331, %p332
      %p334 = scmp.ne.s32.totalorder %s326, %s329
      %p335 = scmp.eq.s32.totalorder %s44, 0
      %p336 = por %p334, %p335
      %p337 = scmp.ne.s32.totalorder %s326, %s329
      %p338 = scmp.eq.s32.totalorder %s49, 1
      %p339 = por %p337, %p338
      %p340 = scmp.ne.s32.totalorder %s329, %s330
      %p341 = scmp.eq.s32.totalorder %s49, 0
      %p342 = por %p340, %p341
      %p343 = scmp.ne.s32.totalorder %s329, %s330
      %p344 = scmp.eq.s32.totalorder %s50, 1
      %p345 = por %p343, %p344
      %p347 = scmp.ne.s32.totalorder %s330, %s346
      %p348 = scmp.eq.s32.totalorder %s50, 0
      %p349 = por %p347, %p348
      %s350 = ssub.s32 %s52, %s59
      %p351 = scmp.eq.s32.totalorder %s350, 0
      %s353 = sadd.s32 %s352, 1
      %s354 = scalar_select %p351, %s352, %s353
      %p357 = pneg %p351
      %p358 = scmp.eq.s32.totalorder %s44, 1
      %p359 = por %p357, %p358
      %p360 = scmp.ne.s32.totalorder %s352, %s355
      %p361 = scmp.eq.s32.totalorder %s44, 0
      %p362 = por %p360, %p361
      %p363 = scmp.ne.s32.totalorder %s352, %s355
      %p364 = scmp.eq.s32.totalorder %s49, 1
      %p365 = por %p363, %p364
      %p366 = scmp.ne.s32.totalorder %s355, %s356
      %p367 = scmp.eq.s32.totalorder %s49, 0
      %p368 = por %p366, %p367
      %p369 = scmp.ne.s32.totalorder %s355, %s356
      %p370 = scmp.eq.s32.totalorder %s50, 1
      %p371 = por %p369, %p370
      %p373 = scmp.ne.s32.totalorder %s356, %s372
      %p374 = scmp.eq.s32.totalorder %s50, 0
      %p375 = por %p373, %p374
      %s376 = ssub.s32 %s52, %s59
      %p377 = scmp.eq.s32.totalorder %s376, 0
      %s379 = sadd.s32 %s378, 1
      %s380 = scalar_select %p377, %s378, %s379
      %p383 = pneg %p377
      %p384 = scmp.eq.s32.totalorder %s44, 1
      %p385 = por %p383, %p384
      %p386 = scmp.ne.s32.totalorder %s378, %s381
      %p387 = scmp.eq.s32.totalorder %s44, 0
      %p388 = por %p386, %p387
      %p389 = scmp.ne.s32.totalorder %s378, %s381
      %p390 = scmp.eq.s32.totalorder %s49, 1
      %p391 = por %p389, %p390
      %p392 = scmp.ne.s32.totalorder %s381, %s382
      %p393 = scmp.eq.s32.totalorder %s49, 0
      %p394 = por %p392, %p393
      %p395 = scmp.ne.s32.totalorder %s381, %s382
      %p396 = scmp.eq.s32.totalorder %s50, 1
      %p397 = por %p395, %p396
      %p399 = scmp.ne.s32.totalorder %s382, %s398
      %p400 = scmp.eq.s32.totalorder %s50, 0
      %p401 = por %p399, %p400
      %s402 = ssub.s32 %s52, %s59
      %p403 = scmp.eq.s32.totalorder %s402, 0
      %s405 = sadd.s32 %s404, 1
      %s406 = scalar_select %p403, %s404, %s405
      %p409 = pneg %p403
      %p410 = scmp.eq.s32.totalorder %s44, 1
      %p411 = por %p409, %p410
      %p412 = scmp.ne.s32.totalorder %s404, %s407
      %p413 = scmp.eq.s32.totalorder %s44, 0
      %p414 = por %p412, %p413
      %p415 = scmp.ne.s32.totalorder %s404, %s407
      %p416 = scmp.eq.s32.totalorder %s49, 1
      %p417 = por %p415, %p416
      %p418 = scmp.ne.s32.totalorder %s407, %s408
      %p419 = scmp.eq.s32.totalorder %s49, 0
      %p420 = por %p418, %p419
      %p421 = scmp.ne.s32.totalorder %s407, %s408
      %p422 = scmp.eq.s32.totalorder %s50, 1
      %p423 = por %p421, %p422
      %p425 = scmp.ne.s32.totalorder %s408, %s424
      %p426 = scmp.eq.s32.totalorder %s50, 0
      %p427 = por %p425, %p426
      %s428 = ssub.s32 %s52, %s59
      %p429 = scmp.eq.s32.totalorder %s428, 0
      %s431 = sadd.s32 %s430, 1
      %s432 = scalar_select %p429, %s430, %s431
      %p435 = pneg %p429
      %p436 = scmp.eq.s32.totalorder %s44, 1
      %p437 = por %p435, %p436
      %p438 = scmp.ne.s32.totalorder %s430, %s433
      %p439 = scmp.eq.s32.totalorder %s44, 0
      %p440 = por %p438, %p439
      %p441 = scmp.ne.s32.totalorder %s430, %s433
      %p442 = scmp.eq.s32.totalorder %s49, 1
      %p443 = por %p441, %p442
      %p444 = scmp.ne.s32.totalorder %s433, %s434
      %p445 = scmp.eq.s32.totalorder %s49, 0
      %p446 = por %p444, %p445
      %p447 = scmp.ne.s32.totalorder %s433, %s434
      %p448 = scmp.eq.s32.totalorder %s50, 1
      %p449 = por %p447, %p448
      %p451 = scmp.ne.s32.totalorder %s434, %s450
      %p452 = scmp.eq.s32.totalorder %s50, 0
      %p453 = por %p451, %p452
      %s454 = ssub.s32 %s52, %s59
      %p455 = scmp.eq.s32.totalorder %s454, 0
      %s457 = sadd.s32 %s456, 1
      %s458 = scalar_select %p455, %s456, %s457
      %p461 = pneg %p455
      %p462 = scmp.eq.s32.totalorder %s44, 1
      %p463 = por %p461, %p462
      %p464 = scmp.ne.s32.totalorder %s456, %s459
      %p465 = scmp.eq.s32.totalorder %s44, 0
      %p466 = por %p464, %p465
      %p467 = scmp.ne.s32.totalorder %s456, %s459
      %p468 = scmp.eq.s32.totalorder %s49, 1
      %p469 = por %p467, %p468
      %p470 = scmp.ne.s32.totalorder %s459, %s460
      %p471 = scmp.eq.s32.totalorder %s49, 0
      %p472 = por %p470, %p471
      %p473 = scmp.ne.s32.totalorder %s459, %s460
      %p474 = scmp.eq.s32.totalorder %s50, 1
      %p475 = por %p473, %p474
      %p477 = scmp.ne.s32.totalorder %s460, %s476
      %p478 = scmp.eq.s32.totalorder %s50, 0
      %p479 = por %p477, %p478
      %s480 = ssub.s32 %s52, %s59
      %p481 = scmp.eq.s32.totalorder %s480, 0
      %s483 = sadd.s32 %s482, 1
      %s484 = scalar_select %p481, %s482, %s483
      %p487 = pneg %p481
      %p488 = scmp.eq.s32.totalorder %s44, 1
      %p489 = por %p487, %p488
      %p490 = scmp.ne.s32.totalorder %s482, %s485
      %p491 = scmp.eq.s32.totalorder %s44, 0
      %p492 = por %p490, %p491
      %p493 = scmp.ne.s32.totalorder %s482, %s485
      %p494 = scmp.eq.s32.totalorder %s49, 1
      %p495 = por %p493, %p494
      %p496 = scmp.ne.s32.totalorder %s485, %s486
      %p497 = scmp.eq.s32.totalorder %s49, 0
      %p498 = por %p496, %p497
      %p499 = scmp.ne.s32.totalorder %s485, %s486
      %p500 = scmp.eq.s32.totalorder %s50, 1
      %p501 = por %p499, %p500
      %p503 = scmp.ne.s32.totalorder %s486, %s502
      %p504 = scmp.eq.s32.totalorder %s50, 0
      %p505 = por %p503, %p504
      %s506 = ssub.s32 %s52, %s59
      %p507 = scmp.eq.s32.totalorder %s506, 0
      %s509 = sadd.s32 %s508, 1
      %s510 = scalar_select %p507, %s508, %s509
      %p513 = pneg %p507
      %p514 = scmp.eq.s32.totalorder %s44, 1
      %p515 = por %p513, %p514
      %p516 = scmp.ne.s32.totalorder %s508, %s511
      %p517 = scmp.eq.s32.totalorder %s44, 0
      %p518 = por %p516, %p517
      %p519 = scmp.ne.s32.totalorder %s508, %s511
      %p520 = scmp.eq.s32.totalorder %s49, 1
      %p521 = por %p519, %p520
      %p522 = scmp.ne.s32.totalorder %s511, %s512
      %p523 = scmp.eq.s32.totalorder %s49, 0
      %p524 = por %p522, %p523
      %p525 = scmp.ne.s32.totalorder %s511, %s512
      %p526 = scmp.eq.s32.totalorder %s50, 1
      %p527 = por %p525, %p526
      %p529 = scmp.ne.s32.totalorder %s512, %s528
      %p530 = scmp.eq.s32.totalorder %s50, 0
      %p531 = por %p529, %p530
      %s532 = ssub.s32 %s52, %s59
      %p533 = scmp.eq.s32.totalorder %s532, 0
      %s535 = sadd.s32 %s534, 1
      %s536 = scalar_select %p533, %s534, %s535
      %p539 = pneg %p533
      %p540 = scmp.eq.s32.totalorder %s44, 1
      %p541 = por %p539, %p540
      %p542 = scmp.ne.s32.totalorder %s534, %s537
      %p543 = scmp.eq.s32.totalorder %s44, 0
      %p544 = por %p542, %p543
      %p545 = scmp.ne.s32.totalorder %s534, %s537
      %p546 = scmp.eq.s32.totalorder %s49, 1
      %p547 = por %p545, %p546
      %p548 = scmp.ne.s32.totalorder %s537, %s538
      %p549 = scmp.eq.s32.totalorder %s49, 0
      %p550 = por %p548, %p549
      %p551 = scmp.ne.s32.totalorder %s537, %s538
      %p552 = scmp.eq.s32.totalorder %s50, 1
      %p553 = por %p551, %p552
      %p555 = scmp.ne.s32.totalorder %s538, %s554
      %p556 = scmp.eq.s32.totalorder %s50, 0
      %p557 = por %p555, %p556
      %s558 = ssub.s32 %s52, %s59
      %p559 = scmp.eq.s32.totalorder %s558, 0
      %s561 = sadd.s32 %s560, 1
      %s562 = scalar_select %p559, %s560, %s561
      %p565 = pneg %p559
      %p566 = scmp.eq.s32.totalorder %s44, 1
      %p567 = por %p565, %p566
      %p568 = scmp.ne.s32.totalorder %s560, %s563
      %p569 = scmp.eq.s32.totalorder %s44, 0
      %p570 = por %p568, %p569
      %p571 = scmp.ne.s32.totalorder %s560, %s563
      %p572 = scmp.eq.s32.totalorder %s49, 1
      %p573 = por %p571, %p572
      %p574 = scmp.ne.s32.totalorder %s563, %s564
      %p575 = scmp.eq.s32.totalorder %s49, 0
      %p576 = por %p574, %p575
      %p577 = scmp.ne.s32.totalorder %s563, %s564
      %p578 = scmp.eq.s32.totalorder %s50, 1
      %p579 = por %p577, %p578
      %p581 = scmp.ne.s32.totalorder %s564, %s580
      %p582 = scmp.eq.s32.totalorder %s50, 0
      %p583 = por %p581, %p582
      %s584 = ssub.s32 %s52, %s59
      %p585 = scmp.eq.s32.totalorder %s584, 0
      %s587 = sadd.s32 %s586, 1
      %s588 = scalar_select %p585, %s586, %s587
      %p591 = pneg %p585
      %p592 = scmp.eq.s32.totalorder %s44, 1
      %p593 = por %p591, %p592
      %p594 = scmp.ne.s32.totalorder %s586, %s589
      %p595 = scmp.eq.s32.totalorder %s44, 0
      %p596 = por %p594, %p595
      %p597 = scmp.ne.s32.totalorder %s586, %s589
      %p598 = scmp.eq.s32.totalorder %s49, 1
      %p599 = por %p597, %p598
      %p600 = scmp.ne.s32.totalorder %s589, %s590
      %p601 = scmp.eq.s32.totalorder %s49, 0
      %p602 = por %p600, %p601
      %p603 = scmp.ne.s32.totalorder %s589, %s590
      %p604 = scmp.eq.s32.totalorder %s50, 1
      %p605 = por %p603, %p604
      %p607 = scmp.ne.s32.totalorder %s590, %s606
      %p608 = scmp.eq.s32.totalorder %s50, 0
      %p609 = por %p607, %p608
      %s611 = sadd.s32 %s610, 1
      %p614 = scmp.eq.s32.totalorder %s44, 1
      %p615 = scmp.ne.s32.totalorder %s610, %s612
      %p616 = scmp.eq.s32.totalorder %s44, 0
      %p617 = por %p615, %p616
      %p618 = scmp.ne.s32.totalorder %s610, %s612
      %p619 = scmp.eq.s32.totalorder %s49, 1
      %p620 = por %p618, %p619
      %p621 = scmp.ne.s32.totalorder %s612, %s613
      %p622 = scmp.eq.s32.totalorder %s49, 0
      %p623 = por %p621, %p622
      %p624 = scmp.ne.s32.totalorder %s612, %s613
      %p625 = scmp.eq.s32.totalorder %s50, 1
      %p626 = por %p624, %p625
      %p628 = scmp.ne.s32.totalorder %s613, %s627
      %p629 = scmp.eq.s32.totalorder %s50, 0
      %p630 = por %p628, %p629
      %s632 = sadd.s32 %s631, 1
      %p635 = scmp.eq.s32.totalorder %s44, 1
      %p636 = scmp.ne.s32.totalorder %s631, %s633
      %p637 = scmp.eq.s32.totalorder %s44, 0
      %p638 = por %p636, %p637
      %p639 = scmp.ne.s32.totalorder %s631, %s633
      %p640 = scmp.eq.s32.totalorder %s49, 1
      %p641 = por %p639, %p640
      %p642 = scmp.ne.s32.totalorder %s633, %s634
      %p643 = scmp.eq.s32.totalorder %s49, 0
      %p644 = por %p642, %p643
      %p645 = scmp.ne.s32.totalorder %s633, %s634
      %p646 = scmp.eq.s32.totalorder %s50, 1
      %p647 = por %p645, %p646
      %p649 = scmp.ne.s32.totalorder %s634, %s648
      %p650 = scmp.eq.s32.totalorder %s50, 0
      %p651 = por %p649, %p650
      %s653 = sadd.s32 %s652, 1
      %p656 = scmp.eq.s32.totalorder %s44, 1
      %p657 = scmp.ne.s32.totalorder %s652, %s654
      %p658 = scmp.eq.s32.totalorder %s44, 0
      %p659 = por %p657, %p658
      %p660 = scmp.ne.s32.totalorder %s652, %s654
      %p661 = scmp.eq.s32.totalorder %s49, 1
      %p662 = por %p660, %p661
      %p663 = scmp.ne.s32.totalorder %s654, %s655
      %p664 = scmp.eq.s32.totalorder %s49, 0
      %p665 = por %p663, %p664
      %p666 = scmp.ne.s32.totalorder %s654, %s655
      %p667 = scmp.eq.s32.totalorder %s50, 1
      %p668 = por %p666, %p667
      %p670 = scmp.ne.s32.totalorder %s655, %s669
      %p671 = scmp.eq.s32.totalorder %s50, 0
      %p672 = por %p670, %p671
      %s673 = ssub.s32 %s51, %s63
      %p674 = scmp.eq.s32.totalorder %s673, 0
      %s676 = sadd.s32 %s675, 1
      %s677 = scalar_select %p674, %s675, %s676
      %p680 = pneg %p674
      %p681 = scmp.eq.s32.totalorder %s44, 1
      %p682 = por %p680, %p681
      %p683 = scmp.ne.s32.totalorder %s675, %s678
      %p684 = scmp.eq.s32.totalorder %s44, 0
      %p685 = por %p683, %p684
      %p686 = scmp.ne.s32.totalorder %s675, %s678
      %p687 = scmp.eq.s32.totalorder %s49, 1
      %p688 = por %p686, %p687
      %p689 = scmp.ne.s32.totalorder %s678, %s679
      %p690 = scmp.eq.s32.totalorder %s49, 0
      %p691 = por %p689, %p690
      %p692 = scmp.ne.s32.totalorder %s678, %s679
      %p693 = scmp.eq.s32.totalorder %s50, 1
      %p694 = por %p692, %p693
      %p696 = scmp.ne.s32.totalorder %s679, %s695
      %p697 = scmp.eq.s32.totalorder %s50, 0
      %p698 = por %p696, %p697
      %p699 = scmp.le.s32.totalorder 1, %s44
      %p700 = scmp.lt.s32.totalorder %s44, 3
      %p701 = pnand %p699, %p700
      %p702 = pneg %p701
      // Predicated region
      $region9: #{cif_decoder_san_forward.1} parent=5 // pred_check
        _
      $region10: #{cif_decoder_san_forward.1} parent=5 // pred_check_branch
        %704 = sbr.rel (%p701) target = $region12
      $region11: #{cif_decoder_san_forward.1} parent=5 // pred_region
        %s705 = ssub.s32 %s44, 1
        // Predicated region
        $region13: #{cif_decoder_san_forward.1} parent=11 // pred_check
          %p706 = pneg %p82
        $region14: #{cif_decoder_san_forward.1} parent=11 // pred_check_branch
          %708 = sbr.rel (%p706) target = $region16
        $region15: #{cif_decoder_san_forward.1} parent=11 // pred_region
          %s709 = smul.u32 2, %s53
          %p710 = scmp.lt.s32.totalorder %s709, 1
          %s711 = scalar_select %p710, %s709, 1
          %s712 = smul.addr %s711, 4
          %s713 = scalar_lea.vmem %s0, %s712
          %s714 = smul.u32 2, %s53
        $region16: #{cif_decoder_san_forward.1} parent=11 // pred_fallthru
          _
        // Predicated region
        $region17: #{cif_decoder_san_forward.1} parent=11 // pred_check
          %p715 = pneg %p108
        $region18: #{cif_decoder_san_forward.1} parent=11 // pred_check_branch
          %717 = sbr.rel (%p715) target = $region20
        $region19: #{cif_decoder_san_forward.1} parent=11 // pred_region
          %s718 = smul.u32 2, %s53
          %p719 = scmp.lt.s32.totalorder %s718, 1
          %s720 = scalar_select %p719, %s718, 1
          %s721 = smul.addr %s720, 2
          %s722 = smul.addr %s721, 4
          %s723 = scalar_lea.vmem %s1, %s722
          %s724 = smul.u32 2, %s53
        $region20: #{cif_decoder_san_forward.1} parent=11 // pred_fallthru
          _
        // Predicated region
        $region21: #{cif_decoder_san_forward.1} parent=11 // pred_check
          %p725 = pneg %p134
        $region22: #{cif_decoder_san_forward.1} parent=11 // pred_check_branch
          %727 = sbr.rel (%p725) target = $region24
        $region23: #{cif_decoder_san_forward.1} parent=11 // pred_region
          %s728 = smul.u32 2, %s53
          %p729 = scmp.lt.s32.totalorder %s728, 1
          %s730 = scalar_select %p729, %s728, 1
          %s731 = scalar_lea.vmem %s2, %s730
          %s732 = smul.u32 2, %s53
        $region24: #{cif_decoder_san_forward.1} parent=11 // pred_fallthru
          _
        // Predicated region
        $region25: #{cif_decoder_san_forward.1} parent=11 // pred_check
          %p733 = pneg %p160
        $region26: #{cif_decoder_san_forward.1} parent=11 // pred_check_branch
          %735 = sbr.rel (%p733) target = $region28
        $region27: #{cif_decoder_san_forward.1} parent=11 // pred_region
          %s736 = smul.u32 2, %s53
          %p737 = scmp.lt.s32.totalorder %s736, 1
          %s738 = scalar_select %p737, %s736, 1
          %s739 = scalar_lea.vmem %s3, %s738
          %s740 = smul.u32 2, %s53
        $region28: #{cif_decoder_san_forward.1} parent=11 // pred_fallthru
          _
        // Predicated region
        $region29: #{cif_decoder_san_forward.1} parent=11 // pred_check
          %p741 = pneg %p186
        $region30: #{cif_decoder_san_forward.1} parent=11 // pred_check_branch
          %743 = sbr.rel (%p741) target = $region32
        $region31: #{cif_decoder_san_forward.1} parent=11 // pred_region
          %s744 = smul.u32 2, %s53
          %p745 = scmp.lt.s32.totalorder %s744, 1
          %s746 = scalar_select %p745, %s744, 1
          %s747 = scalar_lea.vmem %s4, %s746
          %s748 = smul.u32 2, %s53
        $region32: #{cif_decoder_san_forward.1} parent=11 // pred_fallthru
          _
        // Predicated region
        $region33: #{cif_decoder_san_forward.1} parent=11 // pred_check
          %p749 = pneg %p212
        $region34: #{cif_decoder_san_forward.1} parent=11 // pred_check_branch
          %751 = sbr.rel (%p749) target = $region36
        $region35: #{cif_decoder_san_forward.1} parent=11 // pred_region
          %s752 = smul.u32 2, %s53
          %p753 = scmp.lt.s32.totalorder %s752, 1
          %s754 = scalar_select %p753, %s752, 1
          %s755 = scalar_lea.vmem %s5, %s754
          %s756 = smul.u32 2, %s53
        $region36: #{cif_decoder_san_forward.1} parent=11 // pred_fallthru
          _
        // Predicated region
        $region37: #{cif_decoder_san_forward.1} parent=11 // pred_check
          %p757 = pneg %p623
        $region38: #{cif_decoder_san_forward.1} parent=11 // pred_check_branch
          %759 = sbr.rel (%p757) target = $region40
        $region39: #{cif_decoder_san_forward.1} parent=11 // pred_region
          %s761 = ssub.s32 32, 32
          %762 = vsyncadd [#allocation13], %s761
          %s764 = sshll.u32 [#allocation14], 4
          %s765 = int_to_ptr.vmem [resolvable:$true] %s764
          %767 = dma.hbm_to_vmem [thread:$0]  %s21, 32, %s765, [#allocation13]
        $region40: #{cif_decoder_san_forward.1} parent=11 // pred_fallthru
          _
        // Predicated region
        $region41: #{cif_decoder_san_forward.1} parent=11 // pred_check
          %p768 = pneg %p644
        $region42: #{cif_decoder_san_forward.1} parent=11 // pred_check_branch
          %770 = sbr.rel (%p768) target = $region44
        $region43: #{cif_decoder_san_forward.1} parent=11 // pred_region
          %s772 = ssub.s32 256, 256
          %773 = vsyncadd [#allocation16], %s772
          %s774 = sshll.u32 [#allocation15], 4
          %s775 = int_to_ptr.vmem [resolvable:$true] %s774
          %780 = dma.hbm_to_vmem [thread:$0]  %s22, 256, %s775, [#allocation16], 64, 64, 4
        $region44: #{cif_decoder_san_forward.1} parent=11 // pred_fallthru
          _
        // Predicated region
        $region45: #{cif_decoder_san_forward.1} parent=11 // pred_check
          %p781 = pneg %p665
        $region46: #{cif_decoder_san_forward.1} parent=11 // pred_check_branch
          %783 = sbr.rel (%p781) target = $region48
        $region47: #{cif_decoder_san_forward.1} parent=11 // pred_region
          _
        $region48: #{cif_decoder_san_forward.1} parent=11 // pred_fallthru
          _
      $region12: #{cif_decoder_san_forward.1} parent=5 // pred_fallthru
        _
      %p784 = scmp.lt.s32.totalorder %s44, 2
      // Predicated region
      $region49: #{cif_decoder_san_forward.1} parent=5 // pred_check
        %p785 = pneg %p784
      $region50: #{cif_decoder_san_forward.1} parent=5 // pred_check_branch
        %787 = sbr.rel (%p785) target = $region52
      $region51: #{cif_decoder_san_forward.1} parent=5 // pred_region
        // Predicated region
        $region53: #{cif_decoder_san_forward.1} parent=51 // pred_check
          %p788 = pneg %p232
        $region54: #{cif_decoder_san_forward.1} parent=51 // pred_check_branch
          %790 = sbr.rel (%p788) target = $region56
        $region55: #{cif_decoder_san_forward.1} parent=51 // pred_region
          %p791 = scmp.lt.s32.totalorder %s52, 1
          %s792 = scalar_select %p791, %s52, 1
          %s793 = smul.addr %s792, 4
          %s794 = smul.addr %s793, 4
          %s795 = scalar_lea.vmem %s6, %s794
        $region56: #{cif_decoder_san_forward.1} parent=51 // pred_fallthru
          _
        // Predicated region
        $region57: #{cif_decoder_san_forward.1} parent=51 // pred_check
          %p796 = pneg %p258
        $region58: #{cif_decoder_san_forward.1} parent=51 // pred_check_branch
          %798 = sbr.rel (%p796) target = $region60
        $region59: #{cif_decoder_san_forward.1} parent=51 // pred_region
          %s799 = sand.u32 %s248, 1
          %s800 = scalar_lea.sflag [#allocation4], %s799
          %s801 = sand.u32 %s248, 1
          %s802 = scalar_lea.vmem [#allocation3], %s801
          %s804 = ssub.s32 16, 16
          %805 = vsyncadd %s800, %s804
          %s806 = smul.addr %s52, 16
          %s807 = scalar_lea.hbm %s7, %s806
          %s809 = sshll.u32 %s802, 4
          %s810 = int_to_ptr.vmem [resolvable:$true] %s809
          %812 = dma.hbm_to_vmem [thread:$0]  %s807, 16, %s810, %s800
        $region60: #{cif_decoder_san_forward.1} parent=51 // pred_fallthru
          _
        // Predicated region
        $region61: #{cif_decoder_san_forward.1} parent=51 // pred_check
          %p813 = pneg %p284
        $region62: #{cif_decoder_san_forward.1} parent=51 // pred_check_branch
          %815 = sbr.rel (%p813) target = $region64
        $region63: #{cif_decoder_san_forward.1} parent=51 // pred_region
          %p816 = scmp.lt.s32.totalorder %s52, 1
          %s817 = scalar_select %p816, %s52, 1
          %s818 = smul.addr %s817, 4
          %s819 = smul.addr %s818, 4
          %s820 = scalar_lea.vmem %s8, %s819
        $region64: #{cif_decoder_san_forward.1} parent=51 // pred_fallthru
          _
        // Predicated region
        $region65: #{cif_decoder_san_forward.1} parent=51 // pred_check
          %p821 = pneg %p310
        $region66: #{cif_decoder_san_forward.1} parent=51 // pred_check_branch
          %823 = sbr.rel (%p821) target = $region68
        $region67: #{cif_decoder_san_forward.1} parent=51 // pred_region
          %s824 = sand.u32 %s44, 1
          %s825 = scalar_lea.sflag [#allocation7], %s824
          %s826 = sand.u32 %s300, 1
          %s827 = scalar_lea.vmem [#allocation6], %s826
          %s829 = ssub.s32 16, 16
          %830 = vsyncadd %s825, %s829
          %s831 = smul.addr %s52, 16
          %s832 = scalar_lea.hbm %s9, %s831
          %s834 = sshll.u32 %s827, 4
          %s835 = int_to_ptr.vmem [resolvable:$true] %s834
          %837 = dma.hbm_to_vmem [thread:$0]  %s832, 16, %s835, %s825
        $region68: #{cif_decoder_san_forward.1} parent=51 // pred_fallthru
          _
        // Predicated region
        $region69: #{cif_decoder_san_forward.1} parent=51 // pred_check
          %p838 = pneg %p336
        $region70: #{cif_decoder_san_forward.1} parent=51 // pred_check_branch
          %840 = sbr.rel (%p838) target = $region72
        $region71: #{cif_decoder_san_forward.1} parent=51 // pred_region
          %p841 = scmp.lt.s32.totalorder %s52, 1
          %s842 = scalar_select %p841, %s52, 1
          %s843 = smul.addr %s842, 4
          %s844 = smul.addr %s843, 4
          %s845 = scalar_lea.vmem %s10, %s844
        $region72: #{cif_decoder_san_forward.1} parent=51 // pred_fallthru
          _
        // Predicated region
        $region73: #{cif_decoder_san_forward.1} parent=51 // pred_check
          %p846 = pneg %p362
        $region74: #{cif_decoder_san_forward.1} parent=51 // pred_check_branch
          %848 = sbr.rel (%p846) target = $region76
        $region75: #{cif_decoder_san_forward.1} parent=51 // pred_region
          %p849 = scmp.lt.s32.totalorder %s52, 1
          %s850 = scalar_select %p849, %s52, 1
          %s851 = scalar_lea.vmem %s11, %s850
        $region76: #{cif_decoder_san_forward.1} parent=51 // pred_fallthru
          _
        // Predicated region
        $region77: #{cif_decoder_san_forward.1} parent=51 // pred_check
          %p852 = pneg %p388
        $region78: #{cif_decoder_san_forward.1} parent=51 // pred_check_branch
          %854 = sbr.rel (%p852) target = $region80
        $region79: #{cif_decoder_san_forward.1} parent=51 // pred_region
          %p855 = scmp.lt.s32.totalorder %s52, 1
          %s856 = scalar_select %p855, %s52, 1
          %s857 = smul.addr %s856, 4
          %s858 = smul.addr %s857, 4
          %s859 = scalar_lea.vmem %s12, %s858
        $region80: #{cif_decoder_san_forward.1} parent=51 // pred_fallthru
          _
        // Predicated region
        $region81: #{cif_decoder_san_forward.1} parent=51 // pred_check
          %p860 = pneg %p414
        $region82: #{cif_decoder_san_forward.1} parent=51 // pred_check_branch
          %862 = sbr.rel (%p860) target = $region84
        $region83: #{cif_decoder_san_forward.1} parent=51 // pred_region
          %p863 = scmp.lt.s32.totalorder %s52, 1
          %s864 = scalar_select %p863, %s52, 1
          %s865 = scalar_lea.vmem %s13, %s864
        $region84: #{cif_decoder_san_forward.1} parent=51 // pred_fallthru
          _
        // Predicated region
        $region85: #{cif_decoder_san_forward.1} parent=51 // pred_check
          %p866 = pneg %p440
        $region86: #{cif_decoder_san_forward.1} parent=51 // pred_check_branch
          %868 = sbr.rel (%p866) target = $region88
        $region87: #{cif_decoder_san_forward.1} parent=51 // pred_region
          %p869 = scmp.lt.s32.totalorder %s52, 1
          %s870 = scalar_select %p869, %s52, 1
          %s871 = smul.addr %s870, 4
          %s872 = smul.addr %s871, 4
          %s873 = scalar_lea.vmem %s14, %s872
        $region88: #{cif_decoder_san_forward.1} parent=51 // pred_fallthru
          _
        // Predicated region
        $region89: #{cif_decoder_san_forward.1} parent=51 // pred_check
          %p874 = pneg %p466
        $region90: #{cif_decoder_san_forward.1} parent=51 // pred_check_branch
          %876 = sbr.rel (%p874) target = $region92
        $region91: #{cif_decoder_san_forward.1} parent=51 // pred_region
          %p877 = scmp.lt.s32.totalorder %s52, 1
          %s878 = scalar_select %p877, %s52, 1
          %s879 = scalar_lea.vmem %s15, %s878
        $region92: #{cif_decoder_san_forward.1} parent=51 // pred_fallthru
          _
        // Predicated region
        $region93: #{cif_decoder_san_forward.1} parent=51 // pred_check
          %p880 = pneg %p492
        $region94: #{cif_decoder_san_forward.1} parent=51 // pred_check_branch
          %882 = sbr.rel (%p880) target = $region96
        $region95: #{cif_decoder_san_forward.1} parent=51 // pred_region
          %s883 = sand.u32 %s44, 1
          %s884 = scalar_lea.sflag [#allocation7], %s883
          %s885 = sand.u32 %s482, 1
          %s886 = smul.addr %s885, 16
          %s887 = scalar_lea.vmem [#allocation8], %s886
          %s889 = ssub.s32 256, 256
          %890 = vsyncadd %s884, %s889
          %s891 = smul.addr %s52, 4
          %s892 = smul.addr %s891, 64
          %s893 = scalar_lea.hbm %s16, %s892
          %s894 = sshll.u32 %s887, 4
          %s895 = int_to_ptr.vmem [resolvable:$true] %s894
          %900 = dma.hbm_to_vmem [thread:$0]  %s893, 256, %s895, %s884, 64, 64, 4
        $region96: #{cif_decoder_san_forward.1} parent=51 // pred_fallthru
          _
        // Predicated region
        $region97: #{cif_decoder_san_forward.1} parent=51 // pred_check
          %p901 = pneg %p518
        $region98: #{cif_decoder_san_forward.1} parent=51 // pred_check_branch
          %903 = sbr.rel (%p901) target = $region100
        $region99: #{cif_decoder_san_forward.1} parent=51 // pred_region
          %s904 = sand.u32 %s44, 1
          %s905 = scalar_lea.sflag [#allocation10], %s904
          %s906 = sand.u32 %s508, 1
          %s907 = scalar_lea.vmem [#allocation9], %s906
          %s909 = ssub.s32 16, 16
          %910 = vsyncadd %s905, %s909
          %s911 = smul.addr %s52, 16
          %s912 = scalar_lea.hbm %s17, %s911
          %s914 = sshll.u32 %s907, 4
          %s915 = int_to_ptr.vmem [resolvable:$true] %s914
          %917 = dma.hbm_to_vmem [thread:$0]  %s912, 16, %s915, %s905
        $region100: #{cif_decoder_san_forward.1} parent=51 // pred_fallthru
          _
        // Predicated region
        $region101: #{cif_decoder_san_forward.1} parent=51 // pred_check
          %p918 = pneg %p544
        $region102: #{cif_decoder_san_forward.1} parent=51 // pred_check_branch
          %920 = sbr.rel (%p918) target = $region104
        $region103: #{cif_decoder_san_forward.1} parent=51 // pred_region
          %p921 = scmp.lt.s32.totalorder %s52, 1
          %s922 = scalar_select %p921, %s52, 1
          %s923 = smul.addr %s922, 8
          %s924 = smul.addr %s923, 4
          %s925 = scalar_lea.vmem %s18, %s924
        $region104: #{cif_decoder_san_forward.1} parent=51 // pred_fallthru
          _
        // Predicated region
        $region105: #{cif_decoder_san_forward.1} parent=51 // pred_check
          %p926 = pneg %p570
        $region106: #{cif_decoder_san_forward.1} parent=51 // pred_check_branch
          %928 = sbr.rel (%p926) target = $region108
        $region107: #{cif_decoder_san_forward.1} parent=51 // pred_region
          %s929 = sand.u32 %s44, 1
          %s930 = scalar_lea.sflag [#allocation10], %s929
          %s931 = sand.u32 %s560, 1
          %s932 = scalar_lea.vmem [#allocation11], %s931
          %s934 = ssub.s32 16, 16
          %935 = vsyncadd %s930, %s934
          %s936 = smul.addr %s52, 16
          %s937 = scalar_lea.hbm %s19, %s936
          %s939 = sshll.u32 %s932, 4
          %s940 = int_to_ptr.vmem [resolvable:$true] %s939
          %942 = dma.hbm_to_vmem [thread:$0]  %s937, 16, %s940, %s930
        $region108: #{cif_decoder_san_forward.1} parent=51 // pred_fallthru
          _
        // Predicated region
        $region109: #{cif_decoder_san_forward.1} parent=51 // pred_check
          %p943 = pneg %p596
        $region110: #{cif_decoder_san_forward.1} parent=51 // pred_check_branch
          %945 = sbr.rel (%p943) target = $region112
        $region111: #{cif_decoder_san_forward.1} parent=51 // pred_region
          %s946 = sand.u32 %s44, 1
          %s947 = scalar_lea.sflag [#allocation13], %s946
          %s948 = sand.u32 %s586, 1
          %s949 = smul.addr %s948, 8
          %s950 = scalar_lea.vmem [#allocation12], %s949
          %s952 = ssub.s32 128, 128
          %953 = vsyncadd %s947, %s952
          %s954 = smul.addr %s52, 128
          %s955 = scalar_lea.hbm %s20, %s954
          %s957 = sshll.u32 %s950, 4
          %s958 = int_to_ptr.vmem [resolvable:$true] %s957
          %960 = dma.hbm_to_vmem [thread:$0]  %s955, 128, %s958, %s947
        $region112: #{cif_decoder_san_forward.1} parent=51 // pred_fallthru
          _
      $region52: #{cif_decoder_san_forward.1} parent=5 // pred_fallthru
        _
      %p961 = scmp.le.s32.totalorder 1, %s44
      %p962 = scmp.lt.s32.totalorder %s44, 3
      %p963 = pnand %p961, %p962
      %p964 = pneg %p963
      // Predicated region
      $region113: #{cif_decoder_san_forward.1} parent=5 // pred_check
        _
      $region114: #{cif_decoder_san_forward.1} parent=5 // pred_check_branch
        %966 = sbr.rel (%p963) target = $region116
      $region115: #{cif_decoder_san_forward.1} parent=5 // pred_region
        %s967 = ssub.s32 %s44, 1
        %s968 = sand.u32 %s251, 1
        %s969 = scalar_lea.sflag [#allocation4], %s968
        %s970 = sand.u32 %s251, 1
        %s971 = scalar_lea.vmem [#allocation3], %s970
        // Predicated region
        $region117: #{cif_decoder_san_forward.1} parent=115 // pred_check
          %p972 = pneg %p264
        $region118: #{cif_decoder_san_forward.1} parent=115 // pred_check_branch
          %974 = sbr.rel (%p972) target = $region120
        $region119: #{cif_decoder_san_forward.1} parent=115 // pred_region
          %975 = dma.done %s969, 16
        $region120: #{cif_decoder_san_forward.1} parent=115 // pred_fallthru
          _
        %s976 = sand.u32 %s49, 1
        %s977 = scalar_lea.sflag [#allocation7], %s976
        %s978 = sand.u32 %s303, 1
        %s979 = scalar_lea.vmem [#allocation6], %s978
        // Predicated region
        $region121: #{cif_decoder_san_forward.1} parent=115 // pred_check
          %p980 = pneg %p316
        $region122: #{cif_decoder_san_forward.1} parent=115 // pred_check_branch
          %982 = sbr.rel (%p980) target = $region124
        $region123: #{cif_decoder_san_forward.1} parent=115 // pred_region
          %983 = dma.done %s977, 16
        $region124: #{cif_decoder_san_forward.1} parent=115 // pred_fallthru
          _
        %s984 = sand.u32 %s49, 1
        %s985 = scalar_lea.sflag [#allocation7], %s984
        %s986 = sand.u32 %s485, 1
        %s987 = smul.addr %s986, 16
        %s988 = scalar_lea.vmem [#allocation8], %s987
        // Predicated region
        $region125: #{cif_decoder_san_forward.1} parent=115 // pred_check
          %p989 = pneg %p498
        $region126: #{cif_decoder_san_forward.1} parent=115 // pred_check_branch
          %991 = sbr.rel (%p989) target = $region128
        $region127: #{cif_decoder_san_forward.1} parent=115 // pred_region
          %992 = dma.done %s985, 256
        $region128: #{cif_decoder_san_forward.1} parent=115 // pred_fallthru
          _
        %s993 = sand.u32 %s49, 1
        %s994 = scalar_lea.sflag [#allocation10], %s993
        %s995 = sand.u32 %s511, 1
        %s996 = scalar_lea.vmem [#allocation9], %s995
        // Predicated region
        $region129: #{cif_decoder_san_forward.1} parent=115 // pred_check
          %p997 = pneg %p524
        $region130: #{cif_decoder_san_forward.1} parent=115 // pred_check_branch
          %999 = sbr.rel (%p997) target = $region132
        $region131: #{cif_decoder_san_forward.1} parent=115 // pred_region
          %1000 = dma.done %s994, 16
        $region132: #{cif_decoder_san_forward.1} parent=115 // pred_fallthru
          _
        %s1001 = sand.u32 %s49, 1
        %s1002 = scalar_lea.sflag [#allocation10], %s1001
        %s1003 = sand.u32 %s563, 1
        %s1004 = scalar_lea.vmem [#allocation11], %s1003
        // Predicated region
        $region133: #{cif_decoder_san_forward.1} parent=115 // pred_check
          %p1005 = pneg %p576
        $region134: #{cif_decoder_san_forward.1} parent=115 // pred_check_branch
          %1007 = sbr.rel (%p1005) target = $region136
        $region135: #{cif_decoder_san_forward.1} parent=115 // pred_region
          %1008 = dma.done %s1002, 16
        $region136: #{cif_decoder_san_forward.1} parent=115 // pred_fallthru
          _
        %s1009 = sand.u32 %s49, 1
        %s1010 = scalar_lea.sflag [#allocation13], %s1009
        %s1011 = sand.u32 %s589, 1
        %s1012 = smul.addr %s1011, 8
        %s1013 = scalar_lea.vmem [#allocation12], %s1012
        // Predicated region
        $region137: #{cif_decoder_san_forward.1} parent=115 // pred_check
          %p1014 = pneg %p602
        $region138: #{cif_decoder_san_forward.1} parent=115 // pred_check_branch
          %1016 = sbr.rel (%p1014) target = $region140
        $region139: #{cif_decoder_san_forward.1} parent=115 // pred_region
          %1017 = dma.done %s1010, 128
        $region140: #{cif_decoder_san_forward.1} parent=115 // pred_fallthru
          _
        // Predicated region
        $region141: #{cif_decoder_san_forward.1} parent=115 // pred_check
          %p1018 = pneg %p623
        $region142: #{cif_decoder_san_forward.1} parent=115 // pred_check_branch
          %1020 = sbr.rel (%p1018) target = $region144
        $region143: #{cif_decoder_san_forward.1} parent=115 // pred_region
          %1021 = dma.done [#allocation13], 32
        $region144: #{cif_decoder_san_forward.1} parent=115 // pred_fallthru
          _
        // Predicated region
        $region145: #{cif_decoder_san_forward.1} parent=115 // pred_check
          %p1022 = pneg %p644
        $region146: #{cif_decoder_san_forward.1} parent=115 // pred_check_branch
          %1024 = sbr.rel (%p1022) target = $region148
        $region147: #{cif_decoder_san_forward.1} parent=115 // pred_region
          %1025 = dma.done [#allocation16], 256
        $region148: #{cif_decoder_san_forward.1} parent=115 // pred_fallthru
          _
        %s1026 = smul.u32 2, %s53
        %p1027 = scmp.lt.s32.totalorder %s1026, 1
        %s1028 = scalar_select %p1027, %s1026, 1
        %s1029 = smul.addr %s1028, 4
        %s1030 = scalar_lea.vmem %s0, %s1029
        %p1031 = pneg %p82
        %p1032 = pneg %p79
        %s1033 = smul.u32 2, %s53
        %p1034 = scmp.lt.s32.totalorder %s1033, 1
        %s1035 = scalar_select %p1034, %s1033, 1
        %s1036 = smul.addr %s1035, 2
        %s1037 = smul.addr %s1036, 4
        %s1038 = scalar_lea.vmem %s1, %s1037
        %p1039 = pneg %p108
        %p1040 = pneg %p105
        %s1041 = smul.u32 2, %s53
        %p1042 = scmp.lt.s32.totalorder %s1041, 1
        %s1043 = scalar_select %p1042, %s1041, 1
        %s1044 = scalar_lea.vmem %s2, %s1043
        %p1045 = pneg %p134
        %p1046 = pneg %p131
        %s1047 = smul.u32 2, %s53
        %p1048 = scmp.lt.s32.totalorder %s1047, 1
        %s1049 = scalar_select %p1048, %s1047, 1
        %s1050 = scalar_lea.vmem %s3, %s1049
        %p1051 = pneg %p160
        %p1052 = pneg %p157
        %s1053 = smul.u32 2, %s53
        %p1054 = scmp.lt.s32.totalorder %s1053, 1
        %s1055 = scalar_select %p1054, %s1053, 1
        %s1056 = scalar_lea.vmem %s4, %s1055
        %p1057 = pneg %p186
        %p1058 = pneg %p183
        %s1059 = smul.u32 2, %s53
        %p1060 = scmp.lt.s32.totalorder %s1059, 1
        %s1061 = scalar_select %p1060, %s1059, 1
        %s1062 = scalar_lea.vmem %s5, %s1061
        %p1063 = pneg %p212
        %p1064 = pneg %p209
        %p1065 = scmp.lt.s32.totalorder %s54, 1
        %s1066 = scalar_select %p1065, %s54, 1
        %s1067 = smul.addr %s1066, 4
        %s1068 = smul.addr %s1067, 4
        %s1069 = scalar_lea.vmem %s6, %s1068
        %p1070 = pneg %p238
        %p1071 = pneg %p235
        %s1072 = sand.u32 %s251, 1
        %s1073 = scalar_lea.sflag [#allocation4], %s1072
        %s1074 = sand.u32 %s251, 1
        %s1075 = scalar_lea.vmem [#allocation3], %s1074
        %p1076 = pneg %p264
        %p1077 = pneg %p261
        %p1078 = scmp.lt.s32.totalorder %s54, 1
        %s1079 = scalar_select %p1078, %s54, 1
        %s1080 = smul.addr %s1079, 4
        %s1081 = smul.addr %s1080, 4
        %s1082 = scalar_lea.vmem %s8, %s1081
        %p1083 = pneg %p290
        %p1084 = pneg %p287
        %s1085 = sand.u32 %s49, 1
        %s1086 = scalar_lea.sflag [#allocation7], %s1085
        %s1087 = sand.u32 %s303, 1
        %s1088 = scalar_lea.vmem [#allocation6], %s1087
        %p1089 = pneg %p316
        %p1090 = pneg %p313
        %p1091 = scmp.lt.s32.totalorder %s54, 1
        %s1092 = scalar_select %p1091, %s54, 1
        %s1093 = smul.addr %s1092, 4
        %s1094 = smul.addr %s1093, 4
        %s1095 = scalar_lea.vmem %s10, %s1094
        %p1096 = pneg %p342
        %p1097 = pneg %p339
        %p1098 = scmp.lt.s32.totalorder %s54, 1
        %s1099 = scalar_select %p1098, %s54, 1
        %s1100 = scalar_lea.vmem %s11, %s1099
        %p1101 = pneg %p368
        %p1102 = pneg %p365
        %p1103 = scmp.lt.s32.totalorder %s54, 1
        %s1104 = scalar_select %p1103, %s54, 1
        %s1105 = smul.addr %s1104, 4
        %s1106 = smul.addr %s1105, 4
        %s1107 = scalar_lea.vmem %s12, %s1106
        %p1108 = pneg %p394
        %p1109 = pneg %p391
        %p1110 = scmp.lt.s32.totalorder %s54, 1
        %s1111 = scalar_select %p1110, %s54, 1
        %s1112 = scalar_lea.vmem %s13, %s1111
        %p1113 = pneg %p420
        %p1114 = pneg %p417
        %p1115 = scmp.lt.s32.totalorder %s54, 1
        %s1116 = scalar_select %p1115, %s54, 1
        %s1117 = smul.addr %s1116, 4
        %s1118 = smul.addr %s1117, 4
        %s1119 = scalar_lea.vmem %s14, %s1118
        %p1120 = pneg %p446
        %p1121 = pneg %p443
        %p1122 = scmp.lt.s32.totalorder %s54, 1
        %s1123 = scalar_select %p1122, %s54, 1
        %s1124 = scalar_lea.vmem %s15, %s1123
        %p1125 = pneg %p472
        %p1126 = pneg %p469
        %s1127 = sand.u32 %s49, 1
        %s1128 = scalar_lea.sflag [#allocation7], %s1127
        %s1129 = sand.u32 %s485, 1
        %s1130 = smul.addr %s1129, 16
        %s1131 = scalar_lea.vmem [#allocation8], %s1130
        %p1132 = pneg %p498
        %p1133 = pneg %p495
        %s1134 = sand.u32 %s49, 1
        %s1135 = scalar_lea.sflag [#allocation10], %s1134
        %s1136 = sand.u32 %s511, 1
        %s1137 = scalar_lea.vmem [#allocation9], %s1136
        %p1138 = pneg %p524
        %p1139 = pneg %p521
        %p1140 = scmp.lt.s32.totalorder %s54, 1
        %s1141 = scalar_select %p1140, %s54, 1
        %s1142 = smul.addr %s1141, 8
        %s1143 = smul.addr %s1142, 4
        %s1144 = scalar_lea.vmem %s18, %s1143
        %p1145 = pneg %p550
        %p1146 = pneg %p547
        %s1147 = sand.u32 %s49, 1
        %s1148 = scalar_lea.sflag [#allocation10], %s1147
        %s1149 = sand.u32 %s563, 1
        %s1150 = scalar_lea.vmem [#allocation11], %s1149
        %p1151 = pneg %p576
        %p1152 = pneg %p573
        %s1153 = sand.u32 %s49, 1
        %s1154 = scalar_lea.sflag [#allocation13], %s1153
        %s1155 = sand.u32 %s589, 1
        %s1156 = smul.addr %s1155, 8
        %s1157 = scalar_lea.vmem [#allocation12], %s1156
        %p1158 = pneg %p602
        %p1159 = pneg %p599
        %p1160 = pneg %p623
        %p1161 = pneg %p620
        %p1162 = pneg %p644
        %p1163 = pneg %p641
        %p1164 = pneg %p665
        %p1165 = pneg %p662
        %p1166 = pneg %p691
        %p1167 = pneg %p688
        %s1168 = smul.u32 2, %s53
        %p1169 = scmp.lt.s32.totalorder %s1168, 1
        %s1170 = scalar_select %p1169, %s1168, 1
        %s1171 = smul.addr %s1170, 4
        %s1172 = scalar_lea.vmem %s0, %s1171
        %s1173 = smul.u32 2, %s53
        %s1174 = smul.u32 2, %s53
        %p1175 = scmp.lt.s32.totalorder %s1174, 1
        %s1176 = scalar_select %p1175, %s1174, 1
        %s1177 = smul.addr %s1176, 2
        %s1178 = smul.addr %s1177, 4
        %s1179 = scalar_lea.vmem %s1, %s1178
        %s1180 = smul.u32 2, %s53
        %s1181 = smul.u32 2, %s53
        %p1182 = scmp.lt.s32.totalorder %s1181, 1
        %s1183 = scalar_select %p1182, %s1181, 1
        %s1184 = scalar_lea.vmem %s2, %s1183
        %s1185 = smul.u32 2, %s53
        %s1186 = smul.u32 2, %s53
        %p1187 = scmp.lt.s32.totalorder %s1186, 1
        %s1188 = scalar_select %p1187, %s1186, 1
        %s1189 = scalar_lea.vmem %s3, %s1188
        %s1190 = smul.u32 2, %s53
        %s1191 = smul.u32 2, %s53
        %p1192 = scmp.lt.s32.totalorder %s1191, 1
        %s1193 = scalar_select %p1192, %s1191, 1
        %s1194 = scalar_lea.vmem %s4, %s1193
        %s1195 = smul.u32 2, %s53
        %s1196 = smul.u32 2, %s53
        %p1197 = scmp.lt.s32.totalorder %s1196, 1
        %s1198 = scalar_select %p1197, %s1196, 1
        %s1199 = scalar_lea.vmem %s5, %s1198
        %s1200 = smul.u32 2, %s53
        %p1201 = scmp.lt.s32.totalorder %s54, 1
        %s1202 = scalar_select %p1201, %s54, 1
        %s1203 = smul.addr %s1202, 4
        %s1204 = smul.addr %s1203, 4
        %s1205 = scalar_lea.vmem %s6, %s1204
        %p1206 = scmp.lt.s32.totalorder %s54, 1
        %s1207 = scalar_select %p1206, %s54, 1
        %s1208 = smul.addr %s1207, 4
        %s1209 = smul.addr %s1208, 4
        %s1210 = scalar_lea.vmem %s8, %s1209
        %p1211 = scmp.lt.s32.totalorder %s54, 1
        %s1212 = scalar_select %p1211, %s54, 1
        %s1213 = smul.addr %s1212, 4
        %s1214 = smul.addr %s1213, 4
        %s1215 = scalar_lea.vmem %s10, %s1214
        %p1216 = scmp.lt.s32.totalorder %s54, 1
        %s1217 = scalar_select %p1216, %s54, 1
        %s1218 = scalar_lea.vmem %s11, %s1217
        %p1219 = scmp.lt.s32.totalorder %s54, 1
        %s1220 = scalar_select %p1219, %s54, 1
        %s1221 = smul.addr %s1220, 4
        %s1222 = smul.addr %s1221, 4
        %s1223 = scalar_lea.vmem %s12, %s1222
        %p1224 = scmp.lt.s32.totalorder %s54, 1
        %s1225 = scalar_select %p1224, %s54, 1
        %s1226 = scalar_lea.vmem %s13, %s1225
        %p1227 = scmp.lt.s32.totalorder %s54, 1
        %s1228 = scalar_select %p1227, %s54, 1
        %s1229 = smul.addr %s1228, 4
        %s1230 = smul.addr %s1229, 4
        %s1231 = scalar_lea.vmem %s14, %s1230
        %p1232 = scmp.lt.s32.totalorder %s54, 1
        %s1233 = scalar_select %p1232, %s54, 1
        %s1234 = scalar_lea.vmem %s15, %s1233
        %p1235 = scmp.lt.s32.totalorder %s54, 1
        %s1236 = scalar_select %p1235, %s54, 1
        %s1237 = smul.addr %s1236, 8
        %s1238 = smul.addr %s1237, 4
        %s1239 = scalar_lea.vmem %s18, %s1238
        %s1240 = smul.u32 2, %s53
        %p1242 = scmp.eq.s32.totalorder %s54, 0
        // Predicated region
        $region149: #{cif_decoder_san_forward.1} parent=115 // pred_check
          %p1243 = pneg %p1242
        $region150: #{cif_decoder_san_forward.1} parent=115 // pred_check_branch
          %1245 = sbr.rel (%p1243) target = $region152
        $region151: #{cif_decoder_san_forward.1} parent=115 // pred_region
          %v1246 = vld [vmem:[%s1172] sm:$0xf]
          %v1247 = vld [vmem:[%s1172 + $0x4] sm:$0xf]
          %v1248 = vunpack.c.l.bf16 %v1246
          %v1249 = vunpack.c.l.bf16 %v1247
          %vm1250 = vcmask 261120
          %1251 = vst.msk [vmem:[#allocation2] sm:$0xff] %vm1250, %v1248
          %1252 = vst.msk [vmem:[#allocation2 + $0x8] sm:$0xff] %vm1250, %v1249
        $region152: #{cif_decoder_san_forward.1} parent=115 // pred_fallthru
          _
        %v1253 = vld [vmem:[%s1013] sm:$0xff]
        %v1254 = vld [vmem:[%s1184] sm:$0x1]
        %v1255 = vld [vmem:[%s1184 + $0x1] sm:$0x1]
        %v1256 = vld [vmem:[%s1189] sm:$0x1]
        %v1257 = vld [vmem:[%s1189 + $0x1] sm:$0x1]
        %v1258 = vld [vmem:[%s1194] sm:$0x1]
        %v1259 = vld [vmem:[%s1194 + $0x1] sm:$0x1]
        %v1260 = vld [vmem:[%s1199] sm:$0x1]
        %v1261 = vld [vmem:[%s1199 + $0x1] sm:$0x1]
        %v1262 = vld [vmem:[#allocation2] sm:$0xff]
        %v1263 = vld [vmem:[#allocation2 + $0x8] sm:$0xff]
        %vm1264 = vcmask 261120
        %v1265 = vsel %vm1264, %v1262, 0.0
        %1266 = vadd.xlane.f32.xlu0 %v1265
        %v1267 = vpop.xlane.xlu0 %1266
        %v1268 = vsel %vm1264, %v1263, 0.0
        %1269 = vadd.xlane.f32.xlu0 %v1268
        %v1270 = vpop.xlane.xlu0 %1269
        %v1271 = vrcp.pop 32.0
        %v1272 = vmul.f32 %v1267, %v1271
        %v1273 = vmul.f32 %v1270, %v1271
        %v1274 = vsub.f32 %v1262, %v1272
        %v1275 = vsub.f32 %v1263, %v1273
        %v1276 = vmul.f32 %v1274, %v1274
        %v1277 = vmul.f32 %v1275, %v1275
        %v1278 = vsel %vm1264, %v1276, 0.0
        %1279 = vadd.xlane.f32.xlu0 %v1278
        %v1280 = vpop.xlane.xlu0 %1279
        %v1281 = vsel %vm1264, %v1277, 0.0
        %1282 = vadd.xlane.f32.xlu0 %v1281
        %v1283 = vpop.xlane.xlu0 %1282
        %v1284 = vmul.f32 %v1280, %v1271
        %v1285 = vmul.f32 %v1283, %v1271
        %v1286 = vadd.f32 %v1284, 1e-05
        %v1287 = vadd.f32 %v1285, 1e-05
        %v1288 = vrsqrt.pop %v1286
        %v1289 = vrsqrt.pop %v1287
        %v1290 = vmul.f32 %v1274, %v1288
        %v1291 = vmul.f32 %v1275, %v1289
        %v1292 = vlaneseq
        %v1293 = vshrl.u32 %v1292, 7
        %v1294 = vsub.s32 0, %v1293
        %v1295 = vrot.slane %v1253, %v1294
        %v1296 = vmul.f32 %v1290, %v1295
        %v1297 = vmul.f32 %v1291, %v1295
        %v1298 = vlaneseq
        %v1299 = vshrl.u32 %v1298, 7
        %v1300 = vsub.s32 1, %v1299
        %v1301 = vrot.slane %v1253, %v1300
        %v1302 = vadd.f32 %v1296, %v1301
        %v1303 = vadd.f32 %v1297, %v1301
        %v1304 = vpack.c.bf16 %v1303, %v1302
        %v1305 = vld [vmem:[%s1205] sm:$0xf]
        %v1306 = vld [vmem:[%s1205 + $0x4] sm:$0xf]
        %v1307 = vld [vmem:[%s1205 + $0x8] sm:$0xf]
        %v1308 = vld [vmem:[%s1205 + $0xc] sm:$0xf]
        %v1309 = vld [vmem:[%s971] sm:$0x1]
        %v1311 = vlaneseq
        %v1312 = vshrl.u32 %v1311, 7
        %v1313 = vsub.s32 0, %v1312
        %v1314 = vrot.slane %v1309, %v1313
        %v1320 = vunpack.c.l.b16 %v1305
        %v1321 = vunpack.c.l.b16 %v1306
        %v1322 = vunpack.c.l.b16 %v1307
        %v1323 = vunpack.c.l.b16 %v1308
        %v1324 = vpack.c.b16 %v1321, %v1320
        %v1325 = vpack.c.b16 %v1323, %v1322
        %v1329 = vsel %vm1264, %v1304, 0
        %1331 = vmatprep.subr.bf16.mxu0 0
        %1332 = vmatpush1.bf16.msra.mxu0 %v1324
        %1333 = vmatprep.subr.bf16.mxu0 0
        %1334 = vmatpush1.bf16.msra.mxu0 %v1325
        %1335 = vmatprep.subr.bf16.mxu0 0
        %1336 = vmatpush1.bf16.msra.mxu0 0
        %1337 = vmatprep.subr.bf16.mxu0 0
        %1338 = vmatpush1.bf16.msra.mxu0 0
        %1339 = vmatprep.subr.bf16.mxu0 0
        %1340 = vmatpush1.bf16.msra.mxu0 0
        %1341 = vmatprep.subr.bf16.mxu0 0
        %1342 = vmatpush1.bf16.msra.mxu0 0
        %1343 = vmatprep.subr.bf16.mxu0 0
        %1344 = vmatpush1.bf16.msra.mxu0 0
        %1345 = vmatprep.subr.bf16.mxu0 0
        %1346 = vmatpush1.bf16.msra.mxu0 0
        %1347 = vmatprep.subr.bf16.mxu0 0
        %1348 = vmatpush1.bf16.msra.mxu0 0
        %1349 = vmatprep.subr.bf16.mxu0 0
        %1350 = vmatpush1.bf16.msra.mxu0 0
        %1351 = vmatprep.subr.bf16.mxu0 0
        %1352 = vmatpush1.bf16.msra.mxu0 0
        %1353 = vmatprep.subr.bf16.mxu0 0
        %1354 = vmatpush1.bf16.msra.mxu0 0
        %1355 = vmatprep.subr.bf16.mxu0 0
        %1356 = vmatpush1.bf16.msra.mxu0 0
        %1357 = vmatprep.subr.bf16.mxu0 0
        %1358 = vmatpush1.bf16.msra.mxu0 0
        %1359 = vmatprep.subr.bf16.mxu0 0
        %1360 = vmatpush1.bf16.msra.mxu0 0
        %1361 = vmatprep.subr.bf16.mxu0 0
        %1362 = vmatpush1.bf16.msra.mxu0 0
        %1363 = vmatprep.mubr.bf16.mxu0 0
        %1364 = vmatmul.mubr.bf16.gmra.mrb[0].mxu0 %v1329
        %v1365 = vpop.f32.mrb[0].mxu0
        %v1366 = vadd.f32 %v1314, %v1365
        %v1367 = vpop.f32.mrb[0].mxu0
        %v1368 = vpop.f32.mrb[0].mxu0
        %v1369 = vadd.f32 %v1314, %v1368
        %v1370 = vpop.f32.mrb[0].mxu0
        %1371 = vdwg.mxu0
        %v1372 = vpack.c.bf16 %v1369, %v1366
        %v1374 = vlaneseq
        %v1375 = vshrl.u32 %v1374, 7
        %v1376 = vsub.s32 0, %v1375
        %v1377 = vrot.slane %v1254, %v1376
        %v1380 = vlaneseq
        %v1381 = vshrl.u32 %v1380, 7
        %v1382 = vsub.s32 0, %v1381
        %v1383 = vrot.slane %v1256, %v1382
        %1386 = vrot.lane.b32.xlu0 %v1372, 96
        %v1387 = vpop.permute.xlu0 %1386
        %vm1388 = vcmask 64512
        %v1390 = vsel %vm1388, %v1372, 0
        %v1393 = vsel %vm1388, %v1387, 0
        %1395 = vmatprep.subr.bf16.mxu0 0
        %1396 = vmatpush1.bf16.xpose.msra.mxu0 %v1393
        %1397 = vmatprep.subr.bf16.mxu0 0
        %1398 = vmatpush1.bf16.xpose.msra.mxu0 0
        %1399 = vmatprep.subr.bf16.mxu0 0
        %1400 = vmatpush1.bf16.xpose.msra.mxu0 0
        %1401 = vmatprep.subr.bf16.mxu0 0
        %1402 = vmatpush1.bf16.xpose.msra.mxu0 0
        %1403 = vmatprep.subr.bf16.mxu0 0
        %1404 = vmatpush1.bf16.xpose.msra.mxu0 0
        %1405 = vmatprep.subr.bf16.mxu0 0
        %1406 = vmatpush1.bf16.xpose.msra.mxu0 0
        %1407 = vmatprep.subr.bf16.mxu0 0
        %1408 = vmatpush1.bf16.xpose.msra.mxu0 0
        %1409 = vmatprep.subr.bf16.mxu0 0
        %1410 = vmatpush1.bf16.xpose.msra.mxu0 0
        %1411 = vmatprep.subr.bf16.mxu0 0
        %1412 = vmatpush1.bf16.xpose.msra.mxu0 0
        %1413 = vmatprep.subr.bf16.mxu0 0
        %1414 = vmatpush1.bf16.xpose.msra.mxu0 0
        %1415 = vmatprep.subr.bf16.mxu0 0
        %1416 = vmatpush1.bf16.xpose.msra.mxu0 0
        %1417 = vmatprep.subr.bf16.mxu0 0
        %1418 = vmatpush1.bf16.xpose.msra.mxu0 0
        %1419 = vmatprep.subr.bf16.mxu0 0
        %1420 = vmatpush1.bf16.xpose.msra.mxu0 0
        %1421 = vmatprep.subr.bf16.mxu0 0
        %1422 = vmatpush1.bf16.xpose.msra.mxu0 0
        %1423 = vmatprep.subr.bf16.mxu0 0
        %1424 = vmatpush1.bf16.xpose.msra.mxu0 0
        %1425 = vmatprep.subr.bf16.mxu0 0
        %1426 = vmatpush1.bf16.xpose.msra.mxu0 0
        %1427 = vmatprep.mubr.bf16.mxu0 0
        %1428 = vmatmul.mubr.bf16.gmra.mrb[0].mxu0 %v1390
        %v1429 = vpop.f32.mrb[0].mxu0
        %v1430 = vadd.f32 %v1377, %v1429
        %v1431 = vpop.f32.mrb[0].mxu0
        %v1432 = vpop.f32.mrb[0].mxu0
        %v1433 = vpop.f32.mrb[0].mxu0
        %1434 = vdwg.mxu0
        %v1435 = vsel %vm1388, %v1430, -inf
        %1436 = vmax.xlane.f32.xlu0 %v1435
        %v1437 = vpop.xlane.xlu0 %1436
        %v1438 = vsub.f32 %v1430, %v1437
        %v1439 = vmul.f32 %v1438, 1.442695
        %v1440 = vpow.pop %v1439
        %v1441 = vsel %vm1388, %v1440, 0.0
        %1442 = vadd.xlane.f32.xlu0 %v1441
        %v1443 = vpop.xlane.xlu0 %1442
        %v1444 = vrcp.pop %v1443
        %v1445 = vmul.f32 %v1440, %v1444
        %v1446 = vmul.f32 %v1445, %v1383
        %v1447 = vpack.c.bf16 %v1446, %v1446
        %1448 = vrot.lane.b32.xlu0 %v1372, 64
        %v1449 = vpop.permute.xlu0 %1448
        %v1451 = vsel %vm1388, %v1447, 0
        %vm1453 = vcmask 1043456
        %v1455 = vsel %vm1453, %v1449, 0
        %1457 = vmatprep.subr.bf16.mxu0 0
        %1458 = vmatpush1.bf16.msra.mxu0 %v1455
        %1459 = vmatprep.subr.bf16.mxu0 0
        %1460 = vmatpush1.bf16.msra.mxu0 0
        %1461 = vmatprep.subr.bf16.mxu0 0
        %1462 = vmatpush1.bf16.msra.mxu0 0
        %1463 = vmatprep.subr.bf16.mxu0 0
        %1464 = vmatpush1.bf16.msra.mxu0 0
        %1465 = vmatprep.subr.bf16.mxu0 0
        %1466 = vmatpush1.bf16.msra.mxu0 0
        %1467 = vmatprep.subr.bf16.mxu0 0
        %1468 = vmatpush1.bf16.msra.mxu0 0
        %1469 = vmatprep.subr.bf16.mxu0 0
        %1470 = vmatpush1.bf16.msra.mxu0 0
        %1471 = vmatprep.subr.bf16.mxu0 0
        %1472 = vmatpush1.bf16.msra.mxu0 0
        %1473 = vmatprep.subr.bf16.mxu0 0
        %1474 = vmatpush1.bf16.msra.mxu0 0
        %1475 = vmatprep.subr.bf16.mxu0 0
        %1476 = vmatpush1.bf16.msra.mxu0 0
        %1477 = vmatprep.subr.bf16.mxu0 0
        %1478 = vmatpush1.bf16.msra.mxu0 0
        %1479 = vmatprep.subr.bf16.mxu0 0
        %1480 = vmatpush1.bf16.msra.mxu0 0
        %1481 = vmatprep.subr.bf16.mxu0 0
        %1482 = vmatpush1.bf16.msra.mxu0 0
        %1483 = vmatprep.subr.bf16.mxu0 0
        %1484 = vmatpush1.bf16.msra.mxu0 0
        %1485 = vmatprep.subr.bf16.mxu0 0
        %1486 = vmatpush1.bf16.msra.mxu0 0
        %1487 = vmatprep.subr.bf16.mxu0 0
        %1488 = vmatpush1.bf16.msra.mxu0 0
        %1489 = vmatprep.mubr.bf16.mxu0 0
        %1490 = vmatmul.mubr.bf16.gmra.mrb[0].mxu0 %v1451
        %v1491 = vpop.f32.mrb[0].mxu0
        %v1492 = vadd.f32 0.0, %v1491
        %v1493 = vpop.f32.mrb[0].mxu0
        %v1494 = vpop.f32.mrb[0].mxu0
        %v1495 = vpop.f32.mrb[0].mxu0
        %1496 = vdwg.mxu0
        %1497 = vrot.lane.b32.xlu0 %v1372, 120
        %v1498 = vpop.permute.xlu0 %1497
        %1499 = vrot.lane.b32.xlu0 %v1372, 88
        %v1500 = vpop.permute.xlu0 %1499
        %v1502 = vsel %vm1388, %v1498, 0
        %v1505 = vsel %vm1388, %v1500, 0
        %1507 = vmatprep.subr.bf16.mxu0 0
        %1508 = vmatpush1.bf16.xpose.msra.mxu0 %v1505
        %1509 = vmatprep.subr.bf16.mxu0 0
        %1510 = vmatpush1.bf16.xpose.msra.mxu0 0
        %1511 = vmatprep.subr.bf16.mxu0 0
        %1512 = vmatpush1.bf16.xpose.msra.mxu0 0
        %1513 = vmatprep.subr.bf16.mxu0 0
        %1514 = vmatpush1.bf16.xpose.msra.mxu0 0
        %1515 = vmatprep.subr.bf16.mxu0 0
        %1516 = vmatpush1.bf16.xpose.msra.mxu0 0
        %1517 = vmatprep.subr.bf16.mxu0 0
        %1518 = vmatpush1.bf16.xpose.msra.mxu0 0
        %1519 = vmatprep.subr.bf16.mxu0 0
        %1520 = vmatpush1.bf16.xpose.msra.mxu0 0
        %1521 = vmatprep.subr.bf16.mxu0 0
        %1522 = vmatpush1.bf16.xpose.msra.mxu0 0
        %1523 = vmatprep.subr.bf16.mxu0 0
        %1524 = vmatpush1.bf16.xpose.msra.mxu0 0
        %1525 = vmatprep.subr.bf16.mxu0 0
        %1526 = vmatpush1.bf16.xpose.msra.mxu0 0
        %1527 = vmatprep.subr.bf16.mxu0 0
        %1528 = vmatpush1.bf16.xpose.msra.mxu0 0
        %1529 = vmatprep.subr.bf16.mxu0 0
        %1530 = vmatpush1.bf16.xpose.msra.mxu0 0
        %1531 = vmatprep.subr.bf16.mxu0 0
        %1532 = vmatpush1.bf16.xpose.msra.mxu0 0
        %1533 = vmatprep.subr.bf16.mxu0 0
        %1534 = vmatpush1.bf16.xpose.msra.mxu0 0
        %1535 = vmatprep.subr.bf16.mxu0 0
        %1536 = vmatpush1.bf16.xpose.msra.mxu0 0
        %1537 = vmatprep.subr.bf16.mxu0 0
        %1538 = vmatpush1.bf16.xpose.msra.mxu0 0
        %1539 = vmatprep.mubr.bf16.mxu0 0
        %1540 = vmatmul.mubr.bf16.gmra.mrb[0].mxu0 %v1502
        %v1541 = vpop.f32.mrb[0].mxu0
        %v1542 = vadd.f32 %v1377, %v1541
        %v1543 = vpop.f32.mrb[0].mxu0
        %v1544 = vpop.f32.mrb[0].mxu0
        %v1545 = vpop.f32.mrb[0].mxu0
        %1546 = vdwg.mxu0
        %v1547 = vsel %vm1388, %v1542, -inf
        %1548 = vmax.xlane.f32.xlu0 %v1547
        %v1549 = vpop.xlane.xlu0 %1548
        %v1550 = vsub.f32 %v1542, %v1549
        %v1551 = vmul.f32 %v1550, 1.442695
        %v1552 = vpow.pop %v1551
        %v1553 = vsel %vm1388, %v1552, 0.0
        %1554 = vadd.xlane.f32.xlu0 %v1553
        %v1555 = vpop.xlane.xlu0 %1554
        %v1556 = vrcp.pop %v1555
        %v1557 = vmul.f32 %v1552, %v1556
        %v1558 = vmul.f32 %v1557, %v1383
        %v1559 = vpack.c.bf16 %v1558, %v1558
        %1560 = vrot.lane.b32.xlu0 %v1372, 56
        %v1561 = vpop.permute.xlu0 %1560
        %v1563 = vsel %vm1388, %v1559, 0
        %v1566 = vsel %vm1453, %v1561, 0
        %1568 = vmatprep.subr.bf16.mxu0 0
        %1569 = vmatpush1.bf16.msra.mxu0 %v1566
        %1570 = vmatprep.subr.bf16.mxu0 0
        %1571 = vmatpush1.bf16.msra.mxu0 0
        %1572 = vmatprep.subr.bf16.mxu0 0
        %1573 = vmatpush1.bf16.msra.mxu0 0
        %1574 = vmatprep.subr.bf16.mxu0 0
        %1575 = vmatpush1.bf16.msra.mxu0 0
        %1576 = vmatprep.subr.bf16.mxu0 0
        %1577 = vmatpush1.bf16.msra.mxu0 0
        %1578 = vmatprep.subr.bf16.mxu0 0
        %1579 = vmatpush1.bf16.msra.mxu0 0
        %1580 = vmatprep.subr.bf16.mxu0 0
        %1581 = vmatpush1.bf16.msra.mxu0 0
        %1582 = vmatprep.subr.bf16.mxu0 0
        %1583 = vmatpush1.bf16.msra.mxu0 0
        %1584 = vmatprep.subr.bf16.mxu0 0
        %1585 = vmatpush1.bf16.msra.mxu0 0
        %1586 = vmatprep.subr.bf16.mxu0 0
        %1587 = vmatpush1.bf16.msra.mxu0 0
        %1588 = vmatprep.subr.bf16.mxu0 0
        %1589 = vmatpush1.bf16.msra.mxu0 0
        %1590 = vmatprep.subr.bf16.mxu0 0
        %1591 = vmatpush1.bf16.msra.mxu0 0
        %1592 = vmatprep.subr.bf16.mxu0 0
        %1593 = vmatpush1.bf16.msra.mxu0 0
        %1594 = vmatprep.subr.bf16.mxu0 0
        %1595 = vmatpush1.bf16.msra.mxu0 0
        %1596 = vmatprep.subr.bf16.mxu0 0
        %1597 = vmatpush1.bf16.msra.mxu0 0
        %1598 = vmatprep.subr.bf16.mxu0 0
        %1599 = vmatpush1.bf16.msra.mxu0 0
        %1600 = vmatprep.mubr.bf16.mxu0 0
        %1601 = vmatmul.mubr.bf16.gmra.mrb[0].mxu0 %v1563
        %v1602 = vpop.f32.mrb[0].mxu0
        %v1603 = vadd.f32 0.0, %v1602
        %v1604 = vpop.f32.mrb[0].mxu0
        %v1605 = vpop.f32.mrb[0].mxu0
        %v1606 = vpop.f32.mrb[0].mxu0
        %1607 = vdwg.mxu0
        %1608 = vrot.lane.b32.xlu0 %v1372, 112
        %v1609 = vpop.permute.xlu0 %1608
        %1610 = vrot.lane.b32.xlu0 %v1372, 80
        %v1611 = vpop.permute.xlu0 %1610
        %v1613 = vsel %vm1388, %v1609, 0
        %v1616 = vsel %vm1388, %v1611, 0
        %1618 = vmatprep.subr.bf16.mxu0 0
        %1619 = vmatpush1.bf16.xpose.msra.mxu0 %v1616
        %1620 = vmatprep.subr.bf16.mxu0 0
        %1621 = vmatpush1.bf16.xpose.msra.mxu0 0
        %1622 = vmatprep.subr.bf16.mxu0 0
        %1623 = vmatpush1.bf16.xpose.msra.mxu0 0
        %1624 = vmatprep.subr.bf16.mxu0 0
        %1625 = vmatpush1.bf16.xpose.msra.mxu0 0
        %1626 = vmatprep.subr.bf16.mxu0 0
        %1627 = vmatpush1.bf16.xpose.msra.mxu0 0
        %1628 = vmatprep.subr.bf16.mxu0 0
        %1629 = vmatpush1.bf16.xpose.msra.mxu0 0
        %1630 = vmatprep.subr.bf16.mxu0 0
        %1631 = vmatpush1.bf16.xpose.msra.mxu0 0
        %1632 = vmatprep.subr.bf16.mxu0 0
        %1633 = vmatpush1.bf16.xpose.msra.mxu0 0
        %1634 = vmatprep.subr.bf16.mxu0 0
        %1635 = vmatpush1.bf16.xpose.msra.mxu0 0
        %1636 = vmatprep.subr.bf16.mxu0 0
        %1637 = vmatpush1.bf16.xpose.msra.mxu0 0
        %1638 = vmatprep.subr.bf16.mxu0 0
        %1639 = vmatpush1.bf16.xpose.msra.mxu0 0
        %1640 = vmatprep.subr.bf16.mxu0 0
        %1641 = vmatpush1.bf16.xpose.msra.mxu0 0
        %1642 = vmatprep.subr.bf16.mxu0 0
        %1643 = vmatpush1.bf16.xpose.msra.mxu0 0
        %1644 = vmatprep.subr.bf16.mxu0 0
        %1645 = vmatpush1.bf16.xpose.msra.mxu0 0
        %1646 = vmatprep.subr.bf16.mxu0 0
        %1647 = vmatpush1.bf16.xpose.msra.mxu0 0
        %1648 = vmatprep.subr.bf16.mxu0 0
        %1649 = vmatpush1.bf16.xpose.msra.mxu0 0
        %1650 = vmatprep.mubr.bf16.mxu0 0
        %1651 = vmatmul.mubr.bf16.gmra.mrb[0].mxu0 %v1613
        %v1652 = vpop.f32.mrb[0].mxu0
        %v1653 = vadd.f32 %v1377, %v1652
        %v1654 = vpop.f32.mrb[0].mxu0
        %v1655 = vpop.f32.mrb[0].mxu0
        %v1656 = vpop.f32.mrb[0].mxu0
        %1657 = vdwg.mxu0
        %v1658 = vsel %vm1388, %v1653, -inf
        %1659 = vmax.xlane.f32.xlu0 %v1658
        %v1660 = vpop.xlane.xlu0 %1659
        %v1661 = vsub.f32 %v1653, %v1660
        %v1662 = vmul.f32 %v1661, 1.442695
        %v1663 = vpow.pop %v1662
        %v1664 = vsel %vm1388, %v1663, 0.0
        %1665 = vadd.xlane.f32.xlu0 %v1664
        %v1666 = vpop.xlane.xlu0 %1665
        %v1667 = vrcp.pop %v1666
        %v1668 = vmul.f32 %v1663, %v1667
        %v1669 = vmul.f32 %v1668, %v1383
        %v1670 = vpack.c.bf16 %v1669, %v1669
        %1671 = vrot.lane.b32.xlu0 %v1372, 48
        %v1672 = vpop.permute.xlu0 %1671
        %v1674 = vsel %vm1388, %v1670, 0
        %v1677 = vsel %vm1453, %v1672, 0
        %1679 = vmatprep.subr.bf16.mxu0 0
        %1680 = vmatpush1.bf16.msra.mxu0 %v1677
        %1681 = vmatprep.subr.bf16.mxu0 0
        %1682 = vmatpush1.bf16.msra.mxu0 0
        %1683 = vmatprep.subr.bf16.mxu0 0
        %1684 = vmatpush1.bf16.msra.mxu0 0
        %1685 = vmatprep.subr.bf16.mxu0 0
        %1686 = vmatpush1.bf16.msra.mxu0 0
        %1687 = vmatprep.subr.bf16.mxu0 0
        %1688 = vmatpush1.bf16.msra.mxu0 0
        %1689 = vmatprep.subr.bf16.mxu0 0
        %1690 = vmatpush1.bf16.msra.mxu0 0
        %1691 = vmatprep.subr.bf16.mxu0 0
        %1692 = vmatpush1.bf16.msra.mxu0 0
        %1693 = vmatprep.subr.bf16.mxu0 0
        %1694 = vmatpush1.bf16.msra.mxu0 0
        %1695 = vmatprep.subr.bf16.mxu0 0
        %1696 = vmatpush1.bf16.msra.mxu0 0
        %1697 = vmatprep.subr.bf16.mxu0 0
        %1698 = vmatpush1.bf16.msra.mxu0 0
        %1699 = vmatprep.subr.bf16.mxu0 0
        %1700 = vmatpush1.bf16.msra.mxu0 0
        %1701 = vmatprep.subr.bf16.mxu0 0
        %1702 = vmatpush1.bf16.msra.mxu0 0
        %1703 = vmatprep.subr.bf16.mxu0 0
        %1704 = vmatpush1.bf16.msra.mxu0 0
        %1705 = vmatprep.subr.bf16.mxu0 0
        %1706 = vmatpush1.bf16.msra.mxu0 0
        %1707 = vmatprep.subr.bf16.mxu0 0
        %1708 = vmatpush1.bf16.msra.mxu0 0
        %1709 = vmatprep.subr.bf16.mxu0 0
        %1710 = vmatpush1.bf16.msra.mxu0 0
        %1711 = vmatprep.mubr.bf16.mxu0 0
        %1712 = vmatmul.mubr.bf16.gmra.mrb[0].mxu0 %v1674
        %v1713 = vpop.f32.mrb[0].mxu0
        %v1714 = vadd.f32 0.0, %v1713
        %v1715 = vpop.f32.mrb[0].mxu0
        %v1716 = vpop.f32.mrb[0].mxu0
        %v1717 = vpop.f32.mrb[0].mxu0
        %1718 = vdwg.mxu0
        %1719 = vrot.lane.b32.xlu0 %v1372, 104
        %v1720 = vpop.permute.xlu0 %1719
        %1721 = vrot.lane.b32.xlu0 %v1372, 72
        %v1722 = vpop.permute.xlu0 %1721
        %v1724 = vsel %vm1388, %v1720, 0
        %v1727 = vsel %vm1388, %v1722, 0
        %1729 = vmatprep.subr.bf16.mxu0 0
        %1730 = vmatpush1.bf16.xpose.msra.mxu0 %v1727
        %1731 = vmatprep.subr.bf16.mxu0 0
        %1732 = vmatpush1.bf16.xpose.msra.mxu0 0
        %1733 = vmatprep.subr.bf16.mxu0 0
        %1734 = vmatpush1.bf16.xpose.msra.mxu0 0
        %1735 = vmatprep.subr.bf16.mxu0 0
        %1736 = vmatpush1.bf16.xpose.msra.mxu0 0
        %1737 = vmatprep.subr.bf16.mxu0 0
        %1738 = vmatpush1.bf16.xpose.msra.mxu0 0
        %1739 = vmatprep.subr.bf16.mxu0 0
        %1740 = vmatpush1.bf16.xpose.msra.mxu0 0
        %1741 = vmatprep.subr.bf16.mxu0 0
        %1742 = vmatpush1.bf16.xpose.msra.mxu0 0
        %1743 = vmatprep.subr.bf16.mxu0 0
        %1744 = vmatpush1.bf16.xpose.msra.mxu0 0
        %1745 = vmatprep.subr.bf16.mxu0 0
        %1746 = vmatpush1.bf16.xpose.msra.mxu0 0
        %1747 = vmatprep.subr.bf16.mxu0 0
        %1748 = vmatpush1.bf16.xpose.msra.mxu0 0
        %1749 = vmatprep.subr.bf16.mxu0 0
        %1750 = vmatpush1.bf16.xpose.msra.mxu0 0
        %1751 = vmatprep.subr.bf16.mxu0 0
        %1752 = vmatpush1.bf16.xpose.msra.mxu0 0
        %1753 = vmatprep.subr.bf16.mxu0 0
        %1754 = vmatpush1.bf16.xpose.msra.mxu0 0
        %1755 = vmatprep.subr.bf16.mxu0 0
        %1756 = vmatpush1.bf16.xpose.msra.mxu0 0
        %1757 = vmatprep.subr.bf16.mxu0 0
        %1758 = vmatpush1.bf16.xpose.msra.mxu0 0
        %1759 = vmatprep.subr.bf16.mxu0 0
        %1760 = vmatpush1.bf16.xpose.msra.mxu0 0
        %1761 = vmatprep.mubr.bf16.mxu0 0
        %1762 = vmatmul.mubr.bf16.gmra.mrb[0].mxu0 %v1724
        %v1763 = vpop.f32.mrb[0].mxu0
        %v1764 = vadd.f32 %v1377, %v1763
        %v1765 = vpop.f32.mrb[0].mxu0
        %v1766 = vpop.f32.mrb[0].mxu0
        %v1767 = vpop.f32.mrb[0].mxu0
        %1768 = vdwg.mxu0
        %v1769 = vsel %vm1388, %v1764, -inf
        %1770 = vmax.xlane.f32.xlu0 %v1769
        %v1771 = vpop.xlane.xlu0 %1770
        %v1772 = vsub.f32 %v1764, %v1771
        %v1773 = vmul.f32 %v1772, 1.442695
        %v1774 = vpow.pop %v1773
        %v1775 = vsel %vm1388, %v1774, 0.0
        %1776 = vadd.xlane.f32.xlu0 %v1775
        %v1777 = vpop.xlane.xlu0 %1776
        %v1778 = vrcp.pop %v1777
        %v1779 = vmul.f32 %v1774, %v1778
        %v1780 = vmul.f32 %v1779, %v1383
        %v1781 = vpack.c.bf16 %v1780, %v1780
        %1782 = vrot.lane.b32.xlu0 %v1372, 40
        %v1783 = vpop.permute.xlu0 %1782
        %v1785 = vsel %vm1388, %v1781, 0
        %v1788 = vsel %vm1453, %v1783, 0
        %1790 = vmatprep.subr.bf16.mxu0 0
        %1791 = vmatpush1.bf16.msra.mxu0 %v1788
        %1792 = vmatprep.subr.bf16.mxu0 0
        %1793 = vmatpush1.bf16.msra.mxu0 0
        %1794 = vmatprep.subr.bf16.mxu0 0
        %1795 = vmatpush1.bf16.msra.mxu0 0
        %1796 = vmatprep.subr.bf16.mxu0 0
        %1797 = vmatpush1.bf16.msra.mxu0 0
        %1798 = vmatprep.subr.bf16.mxu0 0
        %1799 = vmatpush1.bf16.msra.mxu0 0
        %1800 = vmatprep.subr.bf16.mxu0 0
        %1801 = vmatpush1.bf16.msra.mxu0 0
        %1802 = vmatprep.subr.bf16.mxu0 0
        %1803 = vmatpush1.bf16.msra.mxu0 0
        %1804 = vmatprep.subr.bf16.mxu0 0
        %1805 = vmatpush1.bf16.msra.mxu0 0
        %1806 = vmatprep.subr.bf16.mxu0 0
        %1807 = vmatpush1.bf16.msra.mxu0 0
        %1808 = vmatprep.subr.bf16.mxu0 0
        %1809 = vmatpush1.bf16.msra.mxu0 0
        %1810 = vmatprep.subr.bf16.mxu0 0
        %1811 = vmatpush1.bf16.msra.mxu0 0
        %1812 = vmatprep.subr.bf16.mxu0 0
        %1813 = vmatpush1.bf16.msra.mxu0 0
        %1814 = vmatprep.subr.bf16.mxu0 0
        %1815 = vmatpush1.bf16.msra.mxu0 0
        %1816 = vmatprep.subr.bf16.mxu0 0
        %1817 = vmatpush1.bf16.msra.mxu0 0
        %1818 = vmatprep.subr.bf16.mxu0 0
        %1819 = vmatpush1.bf16.msra.mxu0 0
        %1820 = vmatprep.subr.bf16.mxu0 0
        %1821 = vmatpush1.bf16.msra.mxu0 0
        %1822 = vmatprep.mubr.bf16.mxu0 0
        %1823 = vmatmul.mubr.bf16.gmra.mrb[0].mxu0 %v1785
        %v1824 = vpop.f32.mrb[0].mxu0
        %v1825 = vadd.f32 0.0, %v1824
        %v1826 = vpop.f32.mrb[0].mxu0
        %v1827 = vpop.f32.mrb[0].mxu0
        %v1828 = vpop.f32.mrb[0].mxu0
        %1829 = vdwg.mxu0
        %1831 = vrot.lane.b32.xlu0 %v1603, 8
        %v1832 = vpop.permute.xlu0 %1831
        %1835 = vrot.lane.b32.xlu0 %v1714, 16
        %v1836 = vpop.permute.xlu0 %1835
        %1839 = vrot.lane.b32.xlu0 %v1825, 24
        %v1840 = vpop.permute.xlu0 %1839
        %v1842 = vsel %vm1388, %v1492, %v1832
        %vm1843 = vcmask 130048
        %v1844 = vsel %vm1843, %v1842, %v1836
        %vm1845 = vcmask 195584
        %v1846 = vsel %vm1845, %v1844, %v1840
        %v1848 = vlaneseq
        %v1849 = vshrl.u32 %v1848, 7
        %v1850 = vsub.s32 0, %v1849
        %v1851 = vrot.slane %v1255, %v1850
        %v1854 = vlaneseq
        %v1855 = vshrl.u32 %v1854, 7
        %v1856 = vsub.s32 0, %v1855
        %v1857 = vrot.slane %v1257, %v1856
        %v1859 = vrot.slane %v1372, 4
        %1860 = vrot.lane.b32.xlu0 %v1859, 96
        %v1861 = vpop.permute.xlu0 %1860
        %v1863 = vsel %vm1388, %v1859, 0
        %v1866 = vsel %vm1388, %v1861, 0
        %1868 = vmatprep.subr.bf16.mxu0 0
        %1869 = vmatpush1.bf16.xpose.msra.mxu0 %v1866
        %1870 = vmatprep.subr.bf16.mxu0 0
        %1871 = vmatpush1.bf16.xpose.msra.mxu0 0
        %1872 = vmatprep.subr.bf16.mxu0 0
        %1873 = vmatpush1.bf16.xpose.msra.mxu0 0
        %1874 = vmatprep.subr.bf16.mxu0 0
        %1875 = vmatpush1.bf16.xpose.msra.mxu0 0
        %1876 = vmatprep.subr.bf16.mxu0 0
        %1877 = vmatpush1.bf16.xpose.msra.mxu0 0
        %1878 = vmatprep.subr.bf16.mxu0 0
        %1879 = vmatpush1.bf16.xpose.msra.mxu0 0
        %1880 = vmatprep.subr.bf16.mxu0 0
        %1881 = vmatpush1.bf16.xpose.msra.mxu0 0
        %1882 = vmatprep.subr.bf16.mxu0 0
        %1883 = vmatpush1.bf16.xpose.msra.mxu0 0
        %1884 = vmatprep.subr.bf16.mxu0 0
        %1885 = vmatpush1.bf16.xpose.msra.mxu0 0
        %1886 = vmatprep.subr.bf16.mxu0 0
        %1887 = vmatpush1.bf16.xpose.msra.mxu0 0
        %1888 = vmatprep.subr.bf16.mxu0 0
        %1889 = vmatpush1.bf16.xpose.msra.mxu0 0
        %1890 = vmatprep.subr.bf16.mxu0 0
        %1891 = vmatpush1.bf16.xpose.msra.mxu0 0
        %1892 = vmatprep.subr.bf16.mxu0 0
        %1893 = vmatpush1.bf16.xpose.msra.mxu0 0
        %1894 = vmatprep.subr.bf16.mxu0 0
        %1895 = vmatpush1.bf16.xpose.msra.mxu0 0
        %1896 = vmatprep.subr.bf16.mxu0 0
        %1897 = vmatpush1.bf16.xpose.msra.mxu0 0
        %1898 = vmatprep.subr.bf16.mxu0 0
        %1899 = vmatpush1.bf16.xpose.msra.mxu0 0
        %1900 = vmatprep.mubr.bf16.mxu0 0
        %1901 = vmatmul.mubr.bf16.gmra.mrb[0].mxu0 %v1863
        %v1902 = vpop.f32.mrb[0].mxu0
        %v1903 = vadd.f32 %v1851, %v1902
        %v1904 = vpop.f32.mrb[0].mxu0
        %v1905 = vpop.f32.mrb[0].mxu0
        %v1906 = vpop.f32.mrb[0].mxu0
        %1907 = vdwg.mxu0
        %v1908 = vsel %vm1388, %v1903, -inf
        %1909 = vmax.xlane.f32.xlu0 %v1908
        %v1910 = vpop.xlane.xlu0 %1909
        %v1911 = vsub.f32 %v1903, %v1910
        %v1912 = vmul.f32 %v1911, 1.442695
        %v1913 = vpow.pop %v1912
        %v1914 = vsel %vm1388, %v1913, 0.0
        %1915 = vadd.xlane.f32.xlu0 %v1914
        %v1916 = vpop.xlane.xlu0 %1915
        %v1917 = vrcp.pop %v1916
        %v1918 = vmul.f32 %v1913, %v1917
        %v1919 = vmul.f32 %v1918, %v1857
        %v1920 = vpack.c.bf16 %v1919, %v1919
        %1921 = vrot.lane.b32.xlu0 %v1859, 64
        %v1922 = vpop.permute.xlu0 %1921
        %v1924 = vsel %vm1388, %v1920, 0
        %v1927 = vsel %vm1453, %v1922, 0
        %1929 = vmatprep.subr.bf16.mxu0 0
        %1930 = vmatpush1.bf16.msra.mxu0 %v1927
        %1931 = vmatprep.subr.bf16.mxu0 0
        %1932 = vmatpush1.bf16.msra.mxu0 0
        %1933 = vmatprep.subr.bf16.mxu0 0
        %1934 = vmatpush1.bf16.msra.mxu0 0
        %1935 = vmatprep.subr.bf16.mxu0 0
        %1936 = vmatpush1.bf16.msra.mxu0 0
        %1937 = vmatprep.subr.bf16.mxu0 0
        %1938 = vmatpush1.bf16.msra.mxu0 0
        %1939 = vmatprep.subr.bf16.mxu0 0
        %1940 = vmatpush1.bf16.msra.mxu0 0
        %1941 = vmatprep.subr.bf16.mxu0 0
        %1942 = vmatpush1.bf16.msra.mxu0 0
        %1943 = vmatprep.subr.bf16.mxu0 0
        %1944 = vmatpush1.bf16.msra.mxu0 0
        %1945 = vmatprep.subr.bf16.mxu0 0
        %1946 = vmatpush1.bf16.msra.mxu0 0
        %1947 = vmatprep.subr.bf16.mxu0 0
        %1948 = vmatpush1.bf16.msra.mxu0 0
        %1949 = vmatprep.subr.bf16.mxu0 0
        %1950 = vmatpush1.bf16.msra.mxu0 0
        %1951 = vmatprep.subr.bf16.mxu0 0
        %1952 = vmatpush1.bf16.msra.mxu0 0
        %1953 = vmatprep.subr.bf16.mxu0 0
        %1954 = vmatpush1.bf16.msra.mxu0 0
        %1955 = vmatprep.subr.bf16.mxu0 0
        %1956 = vmatpush1.bf16.msra.mxu0 0
        %1957 = vmatprep.subr.bf16.mxu0 0
        %1958 = vmatpush1.bf16.msra.mxu0 0
        %1959 = vmatprep.subr.bf16.mxu0 0
        %1960 = vmatpush1.bf16.msra.mxu0 0
        %1961 = vmatprep.mubr.bf16.mxu0 0
        %1962 = vmatmul.mubr.bf16.gmra.mrb[0].mxu0 %v1924
        %v1963 = vpop.f32.mrb[0].mxu0
        %v1964 = vadd.f32 0.0, %v1963
        %v1965 = vpop.f32.mrb[0].mxu0
        %v1966 = vpop.f32.mrb[0].mxu0
        %v1967 = vpop.f32.mrb[0].mxu0
        %1968 = vdwg.mxu0
        %1969 = vrot.lane.b32.xlu0 %v1859, 120
        %v1970 = vpop.permute.xlu0 %1969
        %1971 = vrot.lane.b32.xlu0 %v1859, 88
        %v1972 = vpop.permute.xlu0 %1971
        %v1974 = vsel %vm1388, %v1970, 0
        %v1977 = vsel %vm1388, %v1972, 0
        %1979 = vmatprep.subr.bf16.mxu0 0
        %1980 = vmatpush1.bf16.xpose.msra.mxu0 %v1977
        %1981 = vmatprep.subr.bf16.mxu0 0
        %1982 = vmatpush1.bf16.xpose.msra.mxu0 0
        %1983 = vmatprep.subr.bf16.mxu0 0
        %1984 = vmatpush1.bf16.xpose.msra.mxu0 0
        %1985 = vmatprep.subr.bf16.mxu0 0
        %1986 = vmatpush1.bf16.xpose.msra.mxu0 0
        %1987 = vmatprep.subr.bf16.mxu0 0
        %1988 = vmatpush1.bf16.xpose.msra.mxu0 0
        %1989 = vmatprep.subr.bf16.mxu0 0
        %1990 = vmatpush1.bf16.xpose.msra.mxu0 0
        %1991 = vmatprep.subr.bf16.mxu0 0
        %1992 = vmatpush1.bf16.xpose.msra.mxu0 0
        %1993 = vmatprep.subr.bf16.mxu0 0
        %1994 = vmatpush1.bf16.xpose.msra.mxu0 0
        %1995 = vmatprep.subr.bf16.mxu0 0
        %1996 = vmatpush1.bf16.xpose.msra.mxu0 0
        %1997 = vmatprep.subr.bf16.mxu0 0
        %1998 = vmatpush1.bf16.xpose.msra.mxu0 0
        %1999 = vmatprep.subr.bf16.mxu0 0
        %2000 = vmatpush1.bf16.xpose.msra.mxu0 0
        %2001 = vmatprep.subr.bf16.mxu0 0
        %2002 = vmatpush1.bf16.xpose.msra.mxu0 0
        %2003 = vmatprep.subr.bf16.mxu0 0
        %2004 = vmatpush1.bf16.xpose.msra.mxu0 0
        %2005 = vmatprep.subr.bf16.mxu0 0
        %2006 = vmatpush1.bf16.xpose.msra.mxu0 0
        %2007 = vmatprep.subr.bf16.mxu0 0
        %2008 = vmatpush1.bf16.xpose.msra.mxu0 0
        %2009 = vmatprep.subr.bf16.mxu0 0
        %2010 = vmatpush1.bf16.xpose.msra.mxu0 0
        %2011 = vmatprep.mubr.bf16.mxu0 0
        %2012 = vmatmul.mubr.bf16.gmra.mrb[0].mxu0 %v1974
        %v2013 = vpop.f32.mrb[0].mxu0
        %v2014 = vadd.f32 %v1851, %v2013
        %v2015 = vpop.f32.mrb[0].mxu0
        %v2016 = vpop.f32.mrb[0].mxu0
        %v2017 = vpop.f32.mrb[0].mxu0
        %2018 = vdwg.mxu0
        %v2019 = vsel %vm1388, %v2014, -inf
        %2020 = vmax.xlane.f32.xlu0 %v2019
        %v2021 = vpop.xlane.xlu0 %2020
        %v2022 = vsub.f32 %v2014, %v2021
        %v2023 = vmul.f32 %v2022, 1.442695
        %v2024 = vpow.pop %v2023
        %v2025 = vsel %vm1388, %v2024, 0.0
        %2026 = vadd.xlane.f32.xlu0 %v2025
        %v2027 = vpop.xlane.xlu0 %2026
        %v2028 = vrcp.pop %v2027
        %v2029 = vmul.f32 %v2024, %v2028
        %v2030 = vmul.f32 %v2029, %v1857
        %v2031 = vpack.c.bf16 %v2030, %v2030
        %2032 = vrot.lane.b32.xlu0 %v1859, 56
        %v2033 = vpop.permute.xlu0 %2032
        %v2035 = vsel %vm1388, %v2031, 0
        %v2038 = vsel %vm1453, %v2033, 0
        %2040 = vmatprep.subr.bf16.mxu0 0
        %2041 = vmatpush1.bf16.msra.mxu0 %v2038
        %2042 = vmatprep.subr.bf16.mxu0 0
        %2043 = vmatpush1.bf16.msra.mxu0 0
        %2044 = vmatprep.subr.bf16.mxu0 0
        %2045 = vmatpush1.bf16.msra.mxu0 0
        %2046 = vmatprep.subr.bf16.mxu0 0
        %2047 = vmatpush1.bf16.msra.mxu0 0
        %2048 = vmatprep.subr.bf16.mxu0 0
        %2049 = vmatpush1.bf16.msra.mxu0 0
        %2050 = vmatprep.subr.bf16.mxu0 0
        %2051 = vmatpush1.bf16.msra.mxu0 0
        %2052 = vmatprep.subr.bf16.mxu0 0
        %2053 = vmatpush1.bf16.msra.mxu0 0
        %2054 = vmatprep.subr.bf16.mxu0 0
        %2055 = vmatpush1.bf16.msra.mxu0 0
        %2056 = vmatprep.subr.bf16.mxu0 0
        %2057 = vmatpush1.bf16.msra.mxu0 0
        %2058 = vmatprep.subr.bf16.mxu0 0
        %2059 = vmatpush1.bf16.msra.mxu0 0
        %2060 = vmatprep.subr.bf16.mxu0 0
        %2061 = vmatpush1.bf16.msra.mxu0 0
        %2062 = vmatprep.subr.bf16.mxu0 0
        %2063 = vmatpush1.bf16.msra.mxu0 0
        %2064 = vmatprep.subr.bf16.mxu0 0
        %2065 = vmatpush1.bf16.msra.mxu0 0
        %2066 = vmatprep.subr.bf16.mxu0 0
        %2067 = vmatpush1.bf16.msra.mxu0 0
        %2068 = vmatprep.subr.bf16.mxu0 0
        %2069 = vmatpush1.bf16.msra.mxu0 0
        %2070 = vmatprep.subr.bf16.mxu0 0
        %2071 = vmatpush1.bf16.msra.mxu0 0
        %2072 = vmatprep.mubr.bf16.mxu0 0
        %2073 = vmatmul.mubr.bf16.gmra.mrb[0].mxu0 %v2035
        %v2074 = vpop.f32.mrb[0].mxu0
        %v2075 = vadd.f32 0.0, %v2074
        %v2076 = vpop.f32.mrb[0].mxu0
        %v2077 = vpop.f32.mrb[0].mxu0
        %v2078 = vpop.f32.mrb[0].mxu0
        %2079 = vdwg.mxu0
        %2080 = vrot.lane.b32.xlu0 %v1859, 112
        %v2081 = vpop.permute.xlu0 %2080
        %2082 = vrot.lane.b32.xlu0 %v1859, 80
        %v2083 = vpop.permute.xlu0 %2082
        %v2085 = vsel %vm1388, %v2081, 0
        %v2088 = vsel %vm1388, %v2083, 0
        %2090 = vmatprep.subr.bf16.mxu0 0
        %2091 = vmatpush1.bf16.xpose.msra.mxu0 %v2088
        %2092 = vmatprep.subr.bf16.mxu0 0
        %2093 = vmatpush1.bf16.xpose.msra.mxu0 0
        %2094 = vmatprep.subr.bf16.mxu0 0
        %2095 = vmatpush1.bf16.xpose.msra.mxu0 0
        %2096 = vmatprep.subr.bf16.mxu0 0
        %2097 = vmatpush1.bf16.xpose.msra.mxu0 0
        %2098 = vmatprep.subr.bf16.mxu0 0
        %2099 = vmatpush1.bf16.xpose.msra.mxu0 0
        %2100 = vmatprep.subr.bf16.mxu0 0
        %2101 = vmatpush1.bf16.xpose.msra.mxu0 0
        %2102 = vmatprep.subr.bf16.mxu0 0
        %2103 = vmatpush1.bf16.xpose.msra.mxu0 0
        %2104 = vmatprep.subr.bf16.mxu0 0
        %2105 = vmatpush1.bf16.xpose.msra.mxu0 0
        %2106 = vmatprep.subr.bf16.mxu0 0
        %2107 = vmatpush1.bf16.xpose.msra.mxu0 0
        %2108 = vmatprep.subr.bf16.mxu0 0
        %2109 = vmatpush1.bf16.xpose.msra.mxu0 0
        %2110 = vmatprep.subr.bf16.mxu0 0
        %2111 = vmatpush1.bf16.xpose.msra.mxu0 0
        %2112 = vmatprep.subr.bf16.mxu0 0
        %2113 = vmatpush1.bf16.xpose.msra.mxu0 0
        %2114 = vmatprep.subr.bf16.mxu0 0
        %2115 = vmatpush1.bf16.xpose.msra.mxu0 0
        %2116 = vmatprep.subr.bf16.mxu0 0
        %2117 = vmatpush1.bf16.xpose.msra.mxu0 0
        %2118 = vmatprep.subr.bf16.mxu0 0
        %2119 = vmatpush1.bf16.xpose.msra.mxu0 0
        %2120 = vmatprep.subr.bf16.mxu0 0
        %2121 = vmatpush1.bf16.xpose.msra.mxu0 0
        %2122 = vmatprep.mubr.bf16.mxu0 0
        %2123 = vmatmul.mubr.bf16.gmra.mrb[0].mxu0 %v2085
        %v2124 = vpop.f32.mrb[0].mxu0
        %v2125 = vadd.f32 %v1851, %v2124
        %v2126 = vpop.f32.mrb[0].mxu0
        %v2127 = vpop.f32.mrb[0].mxu0
        %v2128 = vpop.f32.mrb[0].mxu0
        %2129 = vdwg.mxu0
        %v2130 = vsel %vm1388, %v2125, -inf
        %2131 = vmax.xlane.f32.xlu0 %v2130
        %v2132 = vpop.xlane.xlu0 %2131
        %v2133 = vsub.f32 %v2125, %v2132
        %v2134 = vmul.f32 %v2133, 1.442695
        %v2135 = vpow.pop %v2134
        %v2136 = vsel %vm1388, %v2135, 0.0
        %2137 = vadd.xlane.f32.xlu0 %v2136
        %v2138 = vpop.xlane.xlu0 %2137
        %v2139 = vrcp.pop %v2138
        %v2140 = vmul.f32 %v2135, %v2139
        %v2141 = vmul.f32 %v2140, %v1857
        %v2142 = vpack.c.bf16 %v2141, %v2141
        %2143 = vrot.lane.b32.xlu0 %v1859, 48
        %v2144 = vpop.permute.xlu0 %2143
        %v2146 = vsel %vm1388, %v2142, 0
        %v2149 = vsel %vm1453, %v2144, 0
        %2151 = vmatprep.subr.bf16.mxu0 0
        %2152 = vmatpush1.bf16.msra.mxu0 %v2149
        %2153 = vmatprep.subr.bf16.mxu0 0
        %2154 = vmatpush1.bf16.msra.mxu0 0
        %2155 = vmatprep.subr.bf16.mxu0 0
        %2156 = vmatpush1.bf16.msra.mxu0 0
        %2157 = vmatprep.subr.bf16.mxu0 0
        %2158 = vmatpush1.bf16.msra.mxu0 0
        %2159 = vmatprep.subr.bf16.mxu0 0
        %2160 = vmatpush1.bf16.msra.mxu0 0
        %2161 = vmatprep.subr.bf16.mxu0 0
        %2162 = vmatpush1.bf16.msra.mxu0 0
        %2163 = vmatprep.subr.bf16.mxu0 0
        %2164 = vmatpush1.bf16.msra.mxu0 0
        %2165 = vmatprep.subr.bf16.mxu0 0
        %2166 = vmatpush1.bf16.msra.mxu0 0
        %2167 = vmatprep.subr.bf16.mxu0 0
        %2168 = vmatpush1.bf16.msra.mxu0 0
        %2169 = vmatprep.subr.bf16.mxu0 0
        %2170 = vmatpush1.bf16.msra.mxu0 0
        %2171 = vmatprep.subr.bf16.mxu0 0
        %2172 = vmatpush1.bf16.msra.mxu0 0
        %2173 = vmatprep.subr.bf16.mxu0 0
        %2174 = vmatpush1.bf16.msra.mxu0 0
        %2175 = vmatprep.subr.bf16.mxu0 0
        %2176 = vmatpush1.bf16.msra.mxu0 0
        %2177 = vmatprep.subr.bf16.mxu0 0
        %2178 = vmatpush1.bf16.msra.mxu0 0
        %2179 = vmatprep.subr.bf16.mxu0 0
        %2180 = vmatpush1.bf16.msra.mxu0 0
        %2181 = vmatprep.subr.bf16.mxu0 0
        %2182 = vmatpush1.bf16.msra.mxu0 0
        %2183 = vmatprep.mubr.bf16.mxu0 0
        %2184 = vmatmul.mubr.bf16.gmra.mrb[0].mxu0 %v2146
        %v2185 = vpop.f32.mrb[0].mxu0
        %v2186 = vadd.f32 0.0, %v2185
        %v2187 = vpop.f32.mrb[0].mxu0
        %v2188 = vpop.f32.mrb[0].mxu0
        %v2189 = vpop.f32.mrb[0].mxu0
        %2190 = vdwg.mxu0
        %2191 = vrot.lane.b32.xlu0 %v1859, 104
        %v2192 = vpop.permute.xlu0 %2191
        %2193 = vrot.lane.b32.xlu0 %v1859, 72
        %v2194 = vpop.permute.xlu0 %2193
        %v2196 = vsel %vm1388, %v2192, 0
        %v2199 = vsel %vm1388, %v2194, 0
        %2201 = vmatprep.subr.bf16.mxu0 0
        %2202 = vmatpush1.bf16.xpose.msra.mxu0 %v2199
        %2203 = vmatprep.subr.bf16.mxu0 0
        %2204 = vmatpush1.bf16.xpose.msra.mxu0 0
        %2205 = vmatprep.subr.bf16.mxu0 0
        %2206 = vmatpush1.bf16.xpose.msra.mxu0 0
        %2207 = vmatprep.subr.bf16.mxu0 0
        %2208 = vmatpush1.bf16.xpose.msra.mxu0 0
        %2209 = vmatprep.subr.bf16.mxu0 0
        %2210 = vmatpush1.bf16.xpose.msra.mxu0 0
        %2211 = vmatprep.subr.bf16.mxu0 0
        %2212 = vmatpush1.bf16.xpose.msra.mxu0 0
        %2213 = vmatprep.subr.bf16.mxu0 0
        %2214 = vmatpush1.bf16.xpose.msra.mxu0 0
        %2215 = vmatprep.subr.bf16.mxu0 0
        %2216 = vmatpush1.bf16.xpose.msra.mxu0 0
        %2217 = vmatprep.subr.bf16.mxu0 0
        %2218 = vmatpush1.bf16.xpose.msra.mxu0 0
        %2219 = vmatprep.subr.bf16.mxu0 0
        %2220 = vmatpush1.bf16.xpose.msra.mxu0 0
        %2221 = vmatprep.subr.bf16.mxu0 0
        %2222 = vmatpush1.bf16.xpose.msra.mxu0 0
        %2223 = vmatprep.subr.bf16.mxu0 0
        %2224 = vmatpush1.bf16.xpose.msra.mxu0 0
        %2225 = vmatprep.subr.bf16.mxu0 0
        %2226 = vmatpush1.bf16.xpose.msra.mxu0 0
        %2227 = vmatprep.subr.bf16.mxu0 0
        %2228 = vmatpush1.bf16.xpose.msra.mxu0 0
        %2229 = vmatprep.subr.bf16.mxu0 0
        %2230 = vmatpush1.bf16.xpose.msra.mxu0 0
        %2231 = vmatprep.subr.bf16.mxu0 0
        %2232 = vmatpush1.bf16.xpose.msra.mxu0 0
        %2233 = vmatprep.mubr.bf16.mxu0 0
        %2234 = vmatmul.mubr.bf16.gmra.mrb[0].mxu0 %v2196
        %v2235 = vpop.f32.mrb[0].mxu0
        %v2236 = vadd.f32 %v1851, %v2235
        %v2237 = vpop.f32.mrb[0].mxu0
        %v2238 = vpop.f32.mrb[0].mxu0
        %v2239 = vpop.f32.mrb[0].mxu0
        %2240 = vdwg.mxu0
        %v2241 = vsel %vm1388, %v2236, -inf
        %2242 = vmax.xlane.f32.xlu0 %v2241
        %v2243 = vpop.xlane.xlu0 %2242
        %v2244 = vsub.f32 %v2236, %v2243
        %v2245 = vmul.f32 %v2244, 1.442695
        %v2246 = vpow.pop %v2245
        %v2247 = vsel %vm1388, %v2246, 0.0
        %2248 = vadd.xlane.f32.xlu0 %v2247
        %v2249 = vpop.xlane.xlu0 %2248
        %v2250 = vrcp.pop %v2249
        %v2251 = vmul.f32 %v2246, %v2250
        %v2252 = vmul.f32 %v2251, %v1857
        %v2253 = vpack.c.bf16 %v2252, %v2252
        %2254 = vrot.lane.b32.xlu0 %v1859, 40
        %v2255 = vpop.permute.xlu0 %2254
        %v2257 = vsel %vm1388, %v2253, 0
        %v2260 = vsel %vm1453, %v2255, 0
        %2262 = vmatprep.subr.bf16.mxu0 0
        %2263 = vmatpush1.bf16.msra.mxu0 %v2260
        %2264 = vmatprep.subr.bf16.mxu0 0
        %2265 = vmatpush1.bf16.msra.mxu0 0
        %2266 = vmatprep.subr.bf16.mxu0 0
        %2267 = vmatpush1.bf16.msra.mxu0 0
        %2268 = vmatprep.subr.bf16.mxu0 0
        %2269 = vmatpush1.bf16.msra.mxu0 0
        %2270 = vmatprep.subr.bf16.mxu0 0
        %2271 = vmatpush1.bf16.msra.mxu0 0
        %2272 = vmatprep.subr.bf16.mxu0 0
        %2273 = vmatpush1.bf16.msra.mxu0 0
        %2274 = vmatprep.subr.bf16.mxu0 0
        %2275 = vmatpush1.bf16.msra.mxu0 0
        %2276 = vmatprep.subr.bf16.mxu0 0
        %2277 = vmatpush1.bf16.msra.mxu0 0
        %2278 = vmatprep.subr.bf16.mxu0 0
        %2279 = vmatpush1.bf16.msra.mxu0 0
        %2280 = vmatprep.subr.bf16.mxu0 0
        %2281 = vmatpush1.bf16.msra.mxu0 0
        %2282 = vmatprep.subr.bf16.mxu0 0
        %2283 = vmatpush1.bf16.msra.mxu0 0
        %2284 = vmatprep.subr.bf16.mxu0 0
        %2285 = vmatpush1.bf16.msra.mxu0 0
        %2286 = vmatprep.subr.bf16.mxu0 0
        %2287 = vmatpush1.bf16.msra.mxu0 0
        %2288 = vmatprep.subr.bf16.mxu0 0
        %2289 = vmatpush1.bf16.msra.mxu0 0
        %2290 = vmatprep.subr.bf16.mxu0 0
        %2291 = vmatpush1.bf16.msra.mxu0 0
        %2292 = vmatprep.subr.bf16.mxu0 0
        %2293 = vmatpush1.bf16.msra.mxu0 0
        %2294 = vmatprep.mubr.bf16.mxu0 0
        %2295 = vmatmul.mubr.bf16.gmra.mrb[0].mxu0 %v2257
        %v2296 = vpop.f32.mrb[0].mxu0
        %v2297 = vadd.f32 0.0, %v2296
        %v2298 = vpop.f32.mrb[0].mxu0
        %v2299 = vpop.f32.mrb[0].mxu0
        %v2300 = vpop.f32.mrb[0].mxu0
        %2301 = vdwg.mxu0
        %2303 = vrot.lane.b32.xlu0 %v2075, 8
        %v2304 = vpop.permute.xlu0 %2303
        %2307 = vrot.lane.b32.xlu0 %v2186, 16
        %v2308 = vpop.permute.xlu0 %2307
        %2311 = vrot.lane.b32.xlu0 %v2297, 24
        %v2312 = vpop.permute.xlu0 %2311
        %v2314 = vsel %vm1388, %v1964, %v2304
        %v2315 = vsel %vm1843, %v2314, %v2308
        %v2316 = vsel %vm1845, %v2315, %v2312
        %v2317 = vpack.c.bf16 %v2316, %v1846
        %v2318 = vld [vmem:[%s1210] sm:$0xf]
        %v2319 = vld [vmem:[%s1210 + $0x4] sm:$0xf]
        %v2320 = vld [vmem:[%s1210 + $0x8] sm:$0xf]
        %v2321 = vld [vmem:[%s1210 + $0xc] sm:$0xf]
        %v2322 = vld [vmem:[%s979] sm:$0x1]
        %v2324 = vlaneseq
        %v2325 = vshrl.u32 %v2324, 7
        %v2326 = vsub.s32 0, %v2325
        %v2327 = vrot.slane %v2322, %v2326
        %v2333 = vunpack.c.l.b16 %v2318
        %v2334 = vunpack.c.l.b16 %v2319
        %v2335 = vunpack.c.l.b16 %v2320
        %v2336 = vunpack.c.l.b16 %v2321
        %v2337 = vpack.c.b16 %v2334, %v2333
        %v2338 = vpack.c.b16 %v2336, %v2335
        %v2342 = vsel %vm1264, %v2317, 0
        %2344 = vmatprep.subr.bf16.mxu0 0
        %2345 = vmatpush1.bf16.msra.mxu0 %v2337
        %2346 = vmatprep.subr.bf16.mxu0 0
        %2347 = vmatpush1.bf16.msra.mxu0 %v2338
        %2348 = vmatprep.subr.bf16.mxu0 0
        %2349 = vmatpush1.bf16.msra.mxu0 0
        %2350 = vmatprep.subr.bf16.mxu0 0
        %2351 = vmatpush1.bf16.msra.mxu0 0
        %2352 = vmatprep.subr.bf16.mxu0 0
        %2353 = vmatpush1.bf16.msra.mxu0 0
        %2354 = vmatprep.subr.bf16.mxu0 0
        %2355 = vmatpush1.bf16.msra.mxu0 0
        %2356 = vmatprep.subr.bf16.mxu0 0
        %2357 = vmatpush1.bf16.msra.mxu0 0
        %2358 = vmatprep.subr.bf16.mxu0 0
        %2359 = vmatpush1.bf16.msra.mxu0 0
        %2360 = vmatprep.subr.bf16.mxu0 0
        %2361 = vmatpush1.bf16.msra.mxu0 0
        %2362 = vmatprep.subr.bf16.mxu0 0
        %2363 = vmatpush1.bf16.msra.mxu0 0
        %2364 = vmatprep.subr.bf16.mxu0 0
        %2365 = vmatpush1.bf16.msra.mxu0 0
        %2366 = vmatprep.subr.bf16.mxu0 0
        %2367 = vmatpush1.bf16.msra.mxu0 0
        %2368 = vmatprep.subr.bf16.mxu0 0
        %2369 = vmatpush1.bf16.msra.mxu0 0
        %2370 = vmatprep.subr.bf16.mxu0 0
        %2371 = vmatpush1.bf16.msra.mxu0 0
        %2372 = vmatprep.subr.bf16.mxu0 0
        %2373 = vmatpush1.bf16.msra.mxu0 0
        %2374 = vmatprep.subr.bf16.mxu0 0
        %2375 = vmatpush1.bf16.msra.mxu0 0
        %2376 = vmatprep.mubr.bf16.mxu0 0
        %2377 = vmatmul.mubr.bf16.gmra.mrb[0].mxu0 %v2342
        %v2378 = vpop.f32.mrb[0].mxu0
        %v2379 = vadd.f32 %v2327, %v2378
        %v2380 = vpop.f32.mrb[0].mxu0
        %v2381 = vpop.f32.mrb[0].mxu0
        %v2382 = vadd.f32 %v2327, %v2381
        %v2383 = vpop.f32.mrb[0].mxu0
        %2384 = vdwg.mxu0
        %v2385 = vadd.f32 %v1262, %v2379
        %v2386 = vadd.f32 %v1263, %v2382
        %v2387 = vsel %vm1264, %v2385, 0.0
        %2388 = vadd.xlane.f32.xlu0 %v2387
        %v2389 = vpop.xlane.xlu0 %2388
        %v2390 = vsel %vm1264, %v2386, 0.0
        %2391 = vadd.xlane.f32.xlu0 %v2390
        %v2392 = vpop.xlane.xlu0 %2391
        %v2393 = vmul.f32 %v2389, %v1271
        %v2394 = vmul.f32 %v2392, %v1271
        %v2395 = vsub.f32 %v2385, %v2393
        %v2396 = vsub.f32 %v2386, %v2394
        %v2397 = vmul.f32 %v2395, %v2395
        %v2398 = vmul.f32 %v2396, %v2396
        %v2399 = vsel %vm1264, %v2397, 0.0
        %2400 = vadd.xlane.f32.xlu0 %v2399
        %v2401 = vpop.xlane.xlu0 %2400
        %v2402 = vsel %vm1264, %v2398, 0.0
        %2403 = vadd.xlane.f32.xlu0 %v2402
        %v2404 = vpop.xlane.xlu0 %2403
        %v2405 = vmul.f32 %v2401, %v1271
        %v2406 = vmul.f32 %v2404, %v1271
        %v2407 = vadd.f32 %v2405, 1e-05
        %v2408 = vadd.f32 %v2406, 1e-05
        %v2409 = vrsqrt.pop %v2407
        %v2410 = vrsqrt.pop %v2408
        %v2411 = vmul.f32 %v2395, %v2409
        %v2412 = vmul.f32 %v2396, %v2410
        %v2413 = vlaneseq
        %v2414 = vshrl.u32 %v2413, 7
        %v2415 = vsub.s32 2, %v2414
        %v2416 = vrot.slane %v1253, %v2415
        %v2417 = vmul.f32 %v2411, %v2416
        %v2418 = vmul.f32 %v2412, %v2416
        %v2419 = vlaneseq
        %v2420 = vshrl.u32 %v2419, 7
        %v2421 = vsub.s32 3, %v2420
        %v2422 = vrot.slane %v1253, %v2421
        %v2423 = vadd.f32 %v2417, %v2422
        %v2424 = vadd.f32 %v2418, %v2422
        %v2425 = vpack.c.bf16 %v2424, %v2423
        %v2426 = vld [vmem:[%s1215] sm:$0xf]
        %v2427 = vld [vmem:[%s1215 + $0x4] sm:$0xf]
        %v2428 = vld [vmem:[%s1215 + $0x8] sm:$0xf]
        %v2429 = vld [vmem:[%s1215 + $0xc] sm:$0xf]
        %v2430 = vld [vmem:[%s1218] sm:$0x1]
        %v2432 = vlaneseq
        %v2433 = vshrl.u32 %v2432, 7
        %v2434 = vsub.s32 0, %v2433
        %v2435 = vrot.slane %v2430, %v2434
        %v2441 = vunpack.c.l.b16 %v2426
        %v2442 = vunpack.c.l.b16 %v2427
        %v2443 = vunpack.c.l.b16 %v2428
        %v2444 = vunpack.c.l.b16 %v2429
        %v2445 = vpack.c.b16 %v2442, %v2441
        %v2446 = vpack.c.b16 %v2444, %v2443
        %v2450 = vsel %vm1264, %v2425, 0
        %2452 = vmatprep.subr.bf16.mxu0 0
        %2453 = vmatpush1.bf16.msra.mxu0 %v2445
        %2454 = vmatprep.subr.bf16.mxu0 0
        %2455 = vmatpush1.bf16.msra.mxu0 %v2446
        %2456 = vmatprep.subr.bf16.mxu0 0
        %2457 = vmatpush1.bf16.msra.mxu0 0
        %2458 = vmatprep.subr.bf16.mxu0 0
        %2459 = vmatpush1.bf16.msra.mxu0 0
        %2460 = vmatprep.subr.bf16.mxu0 0
        %2461 = vmatpush1.bf16.msra.mxu0 0
        %2462 = vmatprep.subr.bf16.mxu0 0
        %2463 = vmatpush1.bf16.msra.mxu0 0
        %2464 = vmatprep.subr.bf16.mxu0 0
        %2465 = vmatpush1.bf16.msra.mxu0 0
        %2466 = vmatprep.subr.bf16.mxu0 0
        %2467 = vmatpush1.bf16.msra.mxu0 0
        %2468 = vmatprep.subr.bf16.mxu0 0
        %2469 = vmatpush1.bf16.msra.mxu0 0
        %2470 = vmatprep.subr.bf16.mxu0 0
        %2471 = vmatpush1.bf16.msra.mxu0 0
        %2472 = vmatprep.subr.bf16.mxu0 0
        %2473 = vmatpush1.bf16.msra.mxu0 0
        %2474 = vmatprep.subr.bf16.mxu0 0
        %2475 = vmatpush1.bf16.msra.mxu0 0
        %2476 = vmatprep.subr.bf16.mxu0 0
        %2477 = vmatpush1.bf16.msra.mxu0 0
        %2478 = vmatprep.subr.bf16.mxu0 0
        %2479 = vmatpush1.bf16.msra.mxu0 0
        %2480 = vmatprep.subr.bf16.mxu0 0
        %2481 = vmatpush1.bf16.msra.mxu0 0
        %2482 = vmatprep.subr.bf16.mxu0 0
        %2483 = vmatpush1.bf16.msra.mxu0 0
        %2484 = vmatprep.mubr.bf16.mxu0 0
        %2485 = vmatmul.mubr.bf16.gmra.mrb[0].mxu0 %v2450
        %v2486 = vpop.f32.mrb[0].mxu0
        %v2487 = vadd.f32 %v2435, %v2486
        %v2488 = vpop.f32.mrb[0].mxu0
        %v2489 = vpop.f32.mrb[0].mxu0
        %v2490 = vadd.f32 %v2435, %v2489
        %v2491 = vpop.f32.mrb[0].mxu0
        %2492 = vdwg.mxu0
        %v2493 = vld [vmem:[%s1179] sm:$0xf]
        %v2494 = vld [vmem:[%s1179 + $0x4] sm:$0xf]
        %v2495 = vld [vmem:[%s1179 + $0x8] sm:$0xf]
        %v2496 = vld [vmem:[%s1179 + $0xc] sm:$0xf]
        %v2497 = vld [vmem:[%s1223] sm:$0xf]
        %v2498 = vld [vmem:[%s1223 + $0x4] sm:$0xf]
        %v2499 = vld [vmem:[%s1223 + $0x8] sm:$0xf]
        %v2500 = vld [vmem:[%s1223 + $0xc] sm:$0xf]
        %v2501 = vld [vmem:[%s1226] sm:$0x1]
        %v2503 = vlaneseq
        %v2504 = vshrl.u32 %v2503, 7
        %v2505 = vsub.s32 0, %v2504
        %v2506 = vrot.slane %v2501, %v2505
        %v2512 = vunpack.c.l.b16 %v2493
        %v2513 = vunpack.c.l.b16 %v2494
        %v2514 = vunpack.c.l.b16 %v2495
        %v2515 = vunpack.c.l.b16 %v2496
        %v2516 = vpack.c.b16 %v2513, %v2512
        %v2517 = vpack.c.b16 %v2515, %v2514
        %v2522 = vunpack.c.l.b16 %v2497
        %v2523 = vunpack.c.l.b16 %v2498
        %v2524 = vunpack.c.l.b16 %v2499
        %v2525 = vunpack.c.l.b16 %v2500
        %v2526 = vpack.c.b16 %v2523, %v2522
        %v2527 = vpack.c.b16 %v2525, %v2524
        %v2531 = vsel %vm1264, %v2516, 0
        %v2534 = vsel %vm1264, %v2517, 0
        %2536 = vmatprep.subr.bf16.mxu0 0
        %2537 = vmatpush1.bf16.msra.mxu0 %v2526
        %2538 = vmatprep.subr.bf16.mxu0 0
        %2539 = vmatpush1.bf16.msra.mxu0 %v2527
        %2540 = vmatprep.subr.bf16.mxu0 0
        %2541 = vmatpush1.bf16.msra.mxu0 0
        %2542 = vmatprep.subr.bf16.mxu0 0
        %2543 = vmatpush1.bf16.msra.mxu0 0
        %2544 = vmatprep.subr.bf16.mxu0 0
        %2545 = vmatpush1.bf16.msra.mxu0 0
        %2546 = vmatprep.subr.bf16.mxu0 0
        %2547 = vmatpush1.bf16.msra.mxu0 0
        %2548 = vmatprep.subr.bf16.mxu0 0
        %2549 = vmatpush1.bf16.msra.mxu0 0
        %2550 = vmatprep.subr.bf16.mxu0 0
        %2551 = vmatpush1.bf16.msra.mxu0 0
        %2552 = vmatprep.subr.bf16.mxu0 0
        %2553 = vmatpush1.bf16.msra.mxu0 0
        %2554 = vmatprep.subr.bf16.mxu0 0
        %2555 = vmatpush1.bf16.msra.mxu0 0
        %2556 = vmatprep.subr.bf16.mxu0 0
        %2557 = vmatpush1.bf16.msra.mxu0 0
        %2558 = vmatprep.subr.bf16.mxu0 0
        %2559 = vmatpush1.bf16.msra.mxu0 0
        %2560 = vmatprep.subr.bf16.mxu0 0
        %2561 = vmatpush1.bf16.msra.mxu0 0
        %2562 = vmatprep.subr.bf16.mxu0 0
        %2563 = vmatpush1.bf16.msra.mxu0 0
        %2564 = vmatprep.subr.bf16.mxu0 0
        %2565 = vmatpush1.bf16.msra.mxu0 0
        %2566 = vmatprep.subr.bf16.mxu0 0
        %2567 = vmatpush1.bf16.msra.mxu0 0
        %2568 = vmatprep.mubr.bf16.mxu0 0
        %2569 = vmatmul.mubr.bf16.gmra.mrb[0].mxu0 %v2531
        %v2570 = vpop.f32.mrb[0].mxu0
        %v2571 = vadd.f32 %v2506, %v2570
        %v2572 = vpop.f32.mrb[0].mxu0
        %v2573 = vpop.f32.mrb[0].mxu0
        %v2574 = vadd.f32 %v2506, %v2573
        %v2575 = vpop.f32.mrb[0].mxu0
        %2576 = vmatprep.mubr.bf16.mxu0 0
        %2577 = vmatmul.mubr.bf16.gmra.mrb[0].mxu0 %v2534
        %v2578 = vpop.f32.mrb[0].mxu0
        %v2579 = vadd.f32 %v2506, %v2578
        %v2580 = vpop.f32.mrb[0].mxu0
        %v2581 = vpop.f32.mrb[0].mxu0
        %v2582 = vadd.f32 %v2506, %v2581
        %v2583 = vpop.f32.mrb[0].mxu0
        %2584 = vdwg.mxu0
        %v2585 = vpack.c.bf16 %v2574, %v2571
        %v2586 = vpack.c.bf16 %v2582, %v2579
        %v2587 = vpack.c.bf16 %v2490, %v2487
        %v2589 = vlaneseq
        %v2590 = vshrl.u32 %v2589, 7
        %v2591 = vsub.s32 0, %v2590
        %v2592 = vrot.slane %v1258, %v2591
        %v2595 = vlaneseq
        %v2596 = vshrl.u32 %v2595, 7
        %v2597 = vsub.s32 0, %v2596
        %v2598 = vrot.slane %v1260, %v2597
        %v2601 = vsel %vm1388, %v2587, 0
        %v2604 = vsel %vm1388, %v2585, 0
        %2606 = vmatprep.subr.bf16.mxu0 0
        %2607 = vmatpush1.bf16.xpose.msra.mxu0 %v2604
        %2608 = vmatprep.subr.bf16.mxu0 0
        %2609 = vmatpush1.bf16.xpose.msra.mxu0 0
        %2610 = vmatprep.subr.bf16.mxu0 0
        %2611 = vmatpush1.bf16.xpose.msra.mxu0 0
        %2612 = vmatprep.subr.bf16.mxu0 0
        %2613 = vmatpush1.bf16.xpose.msra.mxu0 0
        %2614 = vmatprep.subr.bf16.mxu0 0
        %2615 = vmatpush1.bf16.xpose.msra.mxu0 0
        %2616 = vmatprep.subr.bf16.mxu0 0
        %2617 = vmatpush1.bf16.xpose.msra.mxu0 0
        %2618 = vmatprep.subr.bf16.mxu0 0
        %2619 = vmatpush1.bf16.xpose.msra.mxu0 0
        %2620 = vmatprep.subr.bf16.mxu0 0
        %2621 = vmatpush1.bf16.xpose.msra.mxu0 0
        %2622 = vmatprep.subr.bf16.mxu0 0
        %2623 = vmatpush1.bf16.xpose.msra.mxu0 0
        %2624 = vmatprep.subr.bf16.mxu0 0
        %2625 = vmatpush1.bf16.xpose.msra.mxu0 0
        %2626 = vmatprep.subr.bf16.mxu0 0
        %2627 = vmatpush1.bf16.xpose.msra.mxu0 0
        %2628 = vmatprep.subr.bf16.mxu0 0
        %2629 = vmatpush1.bf16.xpose.msra.mxu0 0
        %2630 = vmatprep.subr.bf16.mxu0 0
        %2631 = vmatpush1.bf16.xpose.msra.mxu0 0
        %2632 = vmatprep.subr.bf16.mxu0 0
        %2633 = vmatpush1.bf16.xpose.msra.mxu0 0
        %2634 = vmatprep.subr.bf16.mxu0 0
        %2635 = vmatpush1.bf16.xpose.msra.mxu0 0
        %2636 = vmatprep.subr.bf16.mxu0 0
        %2637 = vmatpush1.bf16.xpose.msra.mxu0 0
        %2638 = vmatprep.mubr.bf16.mxu0 0
        %2639 = vmatmul.mubr.bf16.gmra.mrb[0].mxu0 %v2601
        %v2640 = vpop.f32.mrb[0].mxu0
        %v2641 = vadd.f32 %v2592, %v2640
        %v2642 = vpop.f32.mrb[0].mxu0
        %v2643 = vpop.f32.mrb[0].mxu0
        %v2644 = vpop.f32.mrb[0].mxu0
        %2645 = vdwg.mxu0
        %v2646 = vsel %vm1843, %v2641, -inf
        %2647 = vmax.xlane.f32.xlu0 %v2646
        %v2648 = vpop.xlane.xlu0 %2647
        %v2649 = vsub.f32 %v2641, %v2648
        %v2650 = vmul.f32 %v2649, 1.442695
        %v2651 = vpow.pop %v2650
        %v2652 = vsel %vm1843, %v2651, 0.0
        %2653 = vadd.xlane.f32.xlu0 %v2652
        %v2654 = vpop.xlane.xlu0 %2653
        %v2655 = vrcp.pop %v2654
        %v2656 = vmul.f32 %v2651, %v2655
        %v2657 = vmul.f32 %v2656, %v2598
        %v2658 = vpack.c.bf16 %v2657, %v2657
        %2660 = vrot.lane.b32.xlu0 %v2585, 96
        %v2661 = vpop.permute.xlu0 %2660
        %v2664 = vsel %vm1843, %v2658, 0
        %2666 = vmatprep.subr.bf16.mxu0 0
        %2667 = vmatpush1.bf16.msra.mxu0 %v2661
        %2668 = vmatprep.subr.bf16.mxu0 0
        %2669 = vmatpush1.bf16.msra.mxu0 0
        %2670 = vmatprep.subr.bf16.mxu0 0
        %2671 = vmatpush1.bf16.msra.mxu0 0
        %2672 = vmatprep.subr.bf16.mxu0 0
        %2673 = vmatpush1.bf16.msra.mxu0 0
        %2674 = vmatprep.subr.bf16.mxu0 0
        %2675 = vmatpush1.bf16.msra.mxu0 0
        %2676 = vmatprep.subr.bf16.mxu0 0
        %2677 = vmatpush1.bf16.msra.mxu0 0
        %2678 = vmatprep.subr.bf16.mxu0 0
        %2679 = vmatpush1.bf16.msra.mxu0 0
        %2680 = vmatprep.subr.bf16.mxu0 0
        %2681 = vmatpush1.bf16.msra.mxu0 0
        %2682 = vmatprep.subr.bf16.mxu0 0
        %2683 = vmatpush1.bf16.msra.mxu0 0
        %2684 = vmatprep.subr.bf16.mxu0 0
        %2685 = vmatpush1.bf16.msra.mxu0 0
        %2686 = vmatprep.subr.bf16.mxu0 0
        %2687 = vmatpush1.bf16.msra.mxu0 0
        %2688 = vmatprep.subr.bf16.mxu0 0
        %2689 = vmatpush1.bf16.msra.mxu0 0
        %2690 = vmatprep.subr.bf16.mxu0 0
        %2691 = vmatpush1.bf16.msra.mxu0 0
        %2692 = vmatprep.subr.bf16.mxu0 0
        %2693 = vmatpush1.bf16.msra.mxu0 0
        %2694 = vmatprep.subr.bf16.mxu0 0
        %2695 = vmatpush1.bf16.msra.mxu0 0
        %2696 = vmatprep.subr.bf16.mxu0 0
        %2697 = vmatpush1.bf16.msra.mxu0 0
        %2698 = vmatprep.mubr.bf16.mxu0 0
        %2699 = vmatmul.mubr.bf16.gmra.mrb[0].mxu0 %v2664
        %v2700 = vpop.f32.mrb[0].mxu0
        %v2701 = vadd.f32 0.0, %v2700
        %v2702 = vpop.f32.mrb[0].mxu0
        %v2703 = vpop.f32.mrb[0].mxu0
        %v2704 = vpop.f32.mrb[0].mxu0
        %2705 = vdwg.mxu0
        %2707 = vrot.lane.b32.xlu0 %v2587, 120
        %v2708 = vpop.permute.xlu0 %2707
        %2709 = vrot.lane.b32.xlu0 %v2585, 120
        %v2710 = vpop.permute.xlu0 %2709
        %v2712 = vsel %vm1388, %v2708, 0
        %v2715 = vsel %vm1388, %v2710, 0
        %2717 = vmatprep.subr.bf16.mxu0 0
        %2718 = vmatpush1.bf16.xpose.msra.mxu0 %v2715
        %2719 = vmatprep.subr.bf16.mxu0 0
        %2720 = vmatpush1.bf16.xpose.msra.mxu0 0
        %2721 = vmatprep.subr.bf16.mxu0 0
        %2722 = vmatpush1.bf16.xpose.msra.mxu0 0
        %2723 = vmatprep.subr.bf16.mxu0 0
        %2724 = vmatpush1.bf16.xpose.msra.mxu0 0
        %2725 = vmatprep.subr.bf16.mxu0 0
        %2726 = vmatpush1.bf16.xpose.msra.mxu0 0
        %2727 = vmatprep.subr.bf16.mxu0 0
        %2728 = vmatpush1.bf16.xpose.msra.mxu0 0
        %2729 = vmatprep.subr.bf16.mxu0 0
        %2730 = vmatpush1.bf16.xpose.msra.mxu0 0
        %2731 = vmatprep.subr.bf16.mxu0 0
        %2732 = vmatpush1.bf16.xpose.msra.mxu0 0
        %2733 = vmatprep.subr.bf16.mxu0 0
        %2734 = vmatpush1.bf16.xpose.msra.mxu0 0
        %2735 = vmatprep.subr.bf16.mxu0 0
        %2736 = vmatpush1.bf16.xpose.msra.mxu0 0
        %2737 = vmatprep.subr.bf16.mxu0 0
        %2738 = vmatpush1.bf16.xpose.msra.mxu0 0
        %2739 = vmatprep.subr.bf16.mxu0 0
        %2740 = vmatpush1.bf16.xpose.msra.mxu0 0
        %2741 = vmatprep.subr.bf16.mxu0 0
        %2742 = vmatpush1.bf16.xpose.msra.mxu0 0
        %2743 = vmatprep.subr.bf16.mxu0 0
        %2744 = vmatpush1.bf16.xpose.msra.mxu0 0
        %2745 = vmatprep.subr.bf16.mxu0 0
        %2746 = vmatpush1.bf16.xpose.msra.mxu0 0
        %2747 = vmatprep.subr.bf16.mxu0 0
        %2748 = vmatpush1.bf16.xpose.msra.mxu0 0
        %2749 = vmatprep.mubr.bf16.mxu0 0
        %2750 = vmatmul.mubr.bf16.gmra.mrb[0].mxu0 %v2712
        %v2751 = vpop.f32.mrb[0].mxu0
        %v2752 = vadd.f32 %v2592, %v2751
        %v2753 = vpop.f32.mrb[0].mxu0
        %v2754 = vpop.f32.mrb[0].mxu0
        %v2755 = vpop.f32.mrb[0].mxu0
        %2756 = vdwg.mxu0
        %v2757 = vsel %vm1843, %v2752, -inf
        %2758 = vmax.xlane.f32.xlu0 %v2757
        %v2759 = vpop.xlane.xlu0 %2758
        %v2760 = vsub.f32 %v2752, %v2759
        %v2761 = vmul.f32 %v2760, 1.442695
        %v2762 = vpow.pop %v2761
        %v2763 = vsel %vm1843, %v2762, 0.0
        %2764 = vadd.xlane.f32.xlu0 %v2763
        %v2765 = vpop.xlane.xlu0 %2764
        %v2766 = vrcp.pop %v2765
        %v2767 = vmul.f32 %v2762, %v2766
        %v2768 = vmul.f32 %v2767, %v2598
        %v2769 = vpack.c.bf16 %v2768, %v2768
        %2770 = vrot.lane.b32.xlu0 %v2585, 88
        %v2771 = vpop.permute.xlu0 %2770
        %v2774 = vsel %vm1843, %v2769, 0
        %2776 = vmatprep.subr.bf16.mxu0 0
        %2777 = vmatpush1.bf16.msra.mxu0 %v2771
        %2778 = vmatprep.subr.bf16.mxu0 0
        %2779 = vmatpush1.bf16.msra.mxu0 0
        %2780 = vmatprep.subr.bf16.mxu0 0
        %2781 = vmatpush1.bf16.msra.mxu0 0
        %2782 = vmatprep.subr.bf16.mxu0 0
        %2783 = vmatpush1.bf16.msra.mxu0 0
        %2784 = vmatprep.subr.bf16.mxu0 0
        %2785 = vmatpush1.bf16.msra.mxu0 0
        %2786 = vmatprep.subr.bf16.mxu0 0
        %2787 = vmatpush1.bf16.msra.mxu0 0
        %2788 = vmatprep.subr.bf16.mxu0 0
        %2789 = vmatpush1.bf16.msra.mxu0 0
        %2790 = vmatprep.subr.bf16.mxu0 0
        %2791 = vmatpush1.bf16.msra.mxu0 0
        %2792 = vmatprep.subr.bf16.mxu0 0
        %2793 = vmatpush1.bf16.msra.mxu0 0
        %2794 = vmatprep.subr.bf16.mxu0 0
        %2795 = vmatpush1.bf16.msra.mxu0 0
        %2796 = vmatprep.subr.bf16.mxu0 0
        %2797 = vmatpush1.bf16.msra.mxu0 0
        %2798 = vmatprep.subr.bf16.mxu0 0
        %2799 = vmatpush1.bf16.msra.mxu0 0
        %2800 = vmatprep.subr.bf16.mxu0 0
        %2801 = vmatpush1.bf16.msra.mxu0 0
        %2802 = vmatprep.subr.bf16.mxu0 0
        %2803 = vmatpush1.bf16.msra.mxu0 0
        %2804 = vmatprep.subr.bf16.mxu0 0
        %2805 = vmatpush1.bf16.msra.mxu0 0
        %2806 = vmatprep.subr.bf16.mxu0 0
        %2807 = vmatpush1.bf16.msra.mxu0 0
        %2808 = vmatprep.mubr.bf16.mxu0 0
        %2809 = vmatmul.mubr.bf16.gmra.mrb[0].mxu0 %v2774
        %v2810 = vpop.f32.mrb[0].mxu0
        %v2811 = vadd.f32 0.0, %v2810
        %v2812 = vpop.f32.mrb[0].mxu0
        %v2813 = vpop.f32.mrb[0].mxu0
        %v2814 = vpop.f32.mrb[0].mxu0
        %2815 = vdwg.mxu0
        %2816 = vrot.lane.b32.xlu0 %v2587, 112
        %v2817 = vpop.permute.xlu0 %2816
        %2818 = vrot.lane.b32.xlu0 %v2585, 112
        %v2819 = vpop.permute.xlu0 %2818
        %v2821 = vsel %vm1388, %v2817, 0
        %v2824 = vsel %vm1388, %v2819, 0
        %2826 = vmatprep.subr.bf16.mxu0 0
        %2827 = vmatpush1.bf16.xpose.msra.mxu0 %v2824
        %2828 = vmatprep.subr.bf16.mxu0 0
        %2829 = vmatpush1.bf16.xpose.msra.mxu0 0
        %2830 = vmatprep.subr.bf16.mxu0 0
        %2831 = vmatpush1.bf16.xpose.msra.mxu0 0
        %2832 = vmatprep.subr.bf16.mxu0 0
        %2833 = vmatpush1.bf16.xpose.msra.mxu0 0
        %2834 = vmatprep.subr.bf16.mxu0 0
        %2835 = vmatpush1.bf16.xpose.msra.mxu0 0
        %2836 = vmatprep.subr.bf16.mxu0 0
        %2837 = vmatpush1.bf16.xpose.msra.mxu0 0
        %2838 = vmatprep.subr.bf16.mxu0 0
        %2839 = vmatpush1.bf16.xpose.msra.mxu0 0
        %2840 = vmatprep.subr.bf16.mxu0 0
        %2841 = vmatpush1.bf16.xpose.msra.mxu0 0
        %2842 = vmatprep.subr.bf16.mxu0 0
        %2843 = vmatpush1.bf16.xpose.msra.mxu0 0
        %2844 = vmatprep.subr.bf16.mxu0 0
        %2845 = vmatpush1.bf16.xpose.msra.mxu0 0
        %2846 = vmatprep.subr.bf16.mxu0 0
        %2847 = vmatpush1.bf16.xpose.msra.mxu0 0
        %2848 = vmatprep.subr.bf16.mxu0 0
        %2849 = vmatpush1.bf16.xpose.msra.mxu0 0
        %2850 = vmatprep.subr.bf16.mxu0 0
        %2851 = vmatpush1.bf16.xpose.msra.mxu0 0
        %2852 = vmatprep.subr.bf16.mxu0 0
        %2853 = vmatpush1.bf16.xpose.msra.mxu0 0
        %2854 = vmatprep.subr.bf16.mxu0 0
        %2855 = vmatpush1.bf16.xpose.msra.mxu0 0
        %2856 = vmatprep.subr.bf16.mxu0 0
        %2857 = vmatpush1.bf16.xpose.msra.mxu0 0
        %2858 = vmatprep.mubr.bf16.mxu0 0
        %2859 = vmatmul.mubr.bf16.gmra.mrb[0].mxu0 %v2821
        %v2860 = vpop.f32.mrb[0].mxu0
        %v2861 = vadd.f32 %v2592, %v2860
        %v2862 = vpop.f32.mrb[0].mxu0
        %v2863 = vpop.f32.mrb[0].mxu0
        %v2864 = vpop.f32.mrb[0].mxu0
        %2865 = vdwg.mxu0
        %v2866 = vsel %vm1843, %v2861, -inf
        %2867 = vmax.xlane.f32.xlu0 %v2866
        %v2868 = vpop.xlane.xlu0 %2867
        %v2869 = vsub.f32 %v2861, %v2868
        %v2870 = vmul.f32 %v2869, 1.442695
        %v2871 = vpow.pop %v2870
        %v2872 = vsel %vm1843, %v2871, 0.0
        %2873 = vadd.xlane.f32.xlu0 %v2872
        %v2874 = vpop.xlane.xlu0 %2873
        %v2875 = vrcp.pop %v2874
        %v2876 = vmul.f32 %v2871, %v2875
        %v2877 = vmul.f32 %v2876, %v2598
        %v2878 = vpack.c.bf16 %v2877, %v2877
        %2879 = vrot.lane.b32.xlu0 %v2585, 80
        %v2880 = vpop.permute.xlu0 %2879
        %v2883 = vsel %vm1843, %v2878, 0
        %2885 = vmatprep.subr.bf16.mxu0 0
        %2886 = vmatpush1.bf16.msra.mxu0 %v2880
        %2887 = vmatprep.subr.bf16.mxu0 0
        %2888 = vmatpush1.bf16.msra.mxu0 0
        %2889 = vmatprep.subr.bf16.mxu0 0
        %2890 = vmatpush1.bf16.msra.mxu0 0
        %2891 = vmatprep.subr.bf16.mxu0 0
        %2892 = vmatpush1.bf16.msra.mxu0 0
        %2893 = vmatprep.subr.bf16.mxu0 0
        %2894 = vmatpush1.bf16.msra.mxu0 0
        %2895 = vmatprep.subr.bf16.mxu0 0
        %2896 = vmatpush1.bf16.msra.mxu0 0
        %2897 = vmatprep.subr.bf16.mxu0 0
        %2898 = vmatpush1.bf16.msra.mxu0 0
        %2899 = vmatprep.subr.bf16.mxu0 0
        %2900 = vmatpush1.bf16.msra.mxu0 0
        %2901 = vmatprep.subr.bf16.mxu0 0
        %2902 = vmatpush1.bf16.msra.mxu0 0
        %2903 = vmatprep.subr.bf16.mxu0 0
        %2904 = vmatpush1.bf16.msra.mxu0 0
        %2905 = vmatprep.subr.bf16.mxu0 0
        %2906 = vmatpush1.bf16.msra.mxu0 0
        %2907 = vmatprep.subr.bf16.mxu0 0
        %2908 = vmatpush1.bf16.msra.mxu0 0
        %2909 = vmatprep.subr.bf16.mxu0 0
        %2910 = vmatpush1.bf16.msra.mxu0 0
        %2911 = vmatprep.subr.bf16.mxu0 0
        %2912 = vmatpush1.bf16.msra.mxu0 0
        %2913 = vmatprep.subr.bf16.mxu0 0
        %2914 = vmatpush1.bf16.msra.mxu0 0
        %2915 = vmatprep.subr.bf16.mxu0 0
        %2916 = vmatpush1.bf16.msra.mxu0 0
        %2917 = vmatprep.mubr.bf16.mxu0 0
        %2918 = vmatmul.mubr.bf16.gmra.mrb[0].mxu0 %v2883
        %v2919 = vpop.f32.mrb[0].mxu0
        %v2920 = vadd.f32 0.0, %v2919
        %v2921 = vpop.f32.mrb[0].mxu0
        %v2922 = vpop.f32.mrb[0].mxu0
        %v2923 = vpop.f32.mrb[0].mxu0
        %2924 = vdwg.mxu0
        %2925 = vrot.lane.b32.xlu0 %v2587, 104
        %v2926 = vpop.permute.xlu0 %2925
        %2927 = vrot.lane.b32.xlu0 %v2585, 104
        %v2928 = vpop.permute.xlu0 %2927
        %v2930 = vsel %vm1388, %v2926, 0
        %v2933 = vsel %vm1388, %v2928, 0
        %2935 = vmatprep.subr.bf16.mxu0 0
        %2936 = vmatpush1.bf16.xpose.msra.mxu0 %v2933
        %2937 = vmatprep.subr.bf16.mxu0 0
        %2938 = vmatpush1.bf16.xpose.msra.mxu0 0
        %2939 = vmatprep.subr.bf16.mxu0 0
        %2940 = vmatpush1.bf16.xpose.msra.mxu0 0
        %2941 = vmatprep.subr.bf16.mxu0 0
        %2942 = vmatpush1.bf16.xpose.msra.mxu0 0
        %2943 = vmatprep.subr.bf16.mxu0 0
        %2944 = vmatpush1.bf16.xpose.msra.mxu0 0
        %2945 = vmatprep.subr.bf16.mxu0 0
        %2946 = vmatpush1.bf16.xpose.msra.mxu0 0
        %2947 = vmatprep.subr.bf16.mxu0 0
        %2948 = vmatpush1.bf16.xpose.msra.mxu0 0
        %2949 = vmatprep.subr.bf16.mxu0 0
        %2950 = vmatpush1.bf16.xpose.msra.mxu0 0
        %2951 = vmatprep.subr.bf16.mxu0 0
        %2952 = vmatpush1.bf16.xpose.msra.mxu0 0
        %2953 = vmatprep.subr.bf16.mxu0 0
        %2954 = vmatpush1.bf16.xpose.msra.mxu0 0
        %2955 = vmatprep.subr.bf16.mxu0 0
        %2956 = vmatpush1.bf16.xpose.msra.mxu0 0
        %2957 = vmatprep.subr.bf16.mxu0 0
        %2958 = vmatpush1.bf16.xpose.msra.mxu0 0
        %2959 = vmatprep.subr.bf16.mxu0 0
        %2960 = vmatpush1.bf16.xpose.msra.mxu0 0
        %2961 = vmatprep.subr.bf16.mxu0 0
        %2962 = vmatpush1.bf16.xpose.msra.mxu0 0
        %2963 = vmatprep.subr.bf16.mxu0 0
        %2964 = vmatpush1.bf16.xpose.msra.mxu0 0
        %2965 = vmatprep.subr.bf16.mxu0 0
        %2966 = vmatpush1.bf16.xpose.msra.mxu0 0
        %2967 = vmatprep.mubr.bf16.mxu0 0
        %2968 = vmatmul.mubr.bf16.gmra.mrb[0].mxu0 %v2930
        %v2969 = vpop.f32.mrb[0].mxu0
        %v2970 = vadd.f32 %v2592, %v2969
        %v2971 = vpop.f32.mrb[0].mxu0
        %v2972 = vpop.f32.mrb[0].mxu0
        %v2973 = vpop.f32.mrb[0].mxu0
        %2974 = vdwg.mxu0
        %v2975 = vsel %vm1843, %v2970, -inf
        %2976 = vmax.xlane.f32.xlu0 %v2975
        %v2977 = vpop.xlane.xlu0 %2976
        %v2978 = vsub.f32 %v2970, %v2977
        %v2979 = vmul.f32 %v2978, 1.442695
        %v2980 = vpow.pop %v2979
        %v2981 = vsel %vm1843, %v2980, 0.0
        %2982 = vadd.xlane.f32.xlu0 %v2981
        %v2983 = vpop.xlane.xlu0 %2982
        %v2984 = vrcp.pop %v2983
        %v2985 = vmul.f32 %v2980, %v2984
        %v2986 = vmul.f32 %v2985, %v2598
        %v2987 = vpack.c.bf16 %v2986, %v2986
        %2988 = vrot.lane.b32.xlu0 %v2585, 72
        %v2989 = vpop.permute.xlu0 %2988
        %v2992 = vsel %vm1843, %v2987, 0
        %2994 = vmatprep.subr.bf16.mxu0 0
        %2995 = vmatpush1.bf16.msra.mxu0 %v2989
        %2996 = vmatprep.subr.bf16.mxu0 0
        %2997 = vmatpush1.bf16.msra.mxu0 0
        %2998 = vmatprep.subr.bf16.mxu0 0
        %2999 = vmatpush1.bf16.msra.mxu0 0
        %3000 = vmatprep.subr.bf16.mxu0 0
        %3001 = vmatpush1.bf16.msra.mxu0 0
        %3002 = vmatprep.subr.bf16.mxu0 0
        %3003 = vmatpush1.bf16.msra.mxu0 0
        %3004 = vmatprep.subr.bf16.mxu0 0
        %3005 = vmatpush1.bf16.msra.mxu0 0
        %3006 = vmatprep.subr.bf16.mxu0 0
        %3007 = vmatpush1.bf16.msra.mxu0 0
        %3008 = vmatprep.subr.bf16.mxu0 0
        %3009 = vmatpush1.bf16.msra.mxu0 0
        %3010 = vmatprep.subr.bf16.mxu0 0
        %3011 = vmatpush1.bf16.msra.mxu0 0
        %3012 = vmatprep.subr.bf16.mxu0 0
        %3013 = vmatpush1.bf16.msra.mxu0 0
        %3014 = vmatprep.subr.bf16.mxu0 0
        %3015 = vmatpush1.bf16.msra.mxu0 0
        %3016 = vmatprep.subr.bf16.mxu0 0
        %3017 = vmatpush1.bf16.msra.mxu0 0
        %3018 = vmatprep.subr.bf16.mxu0 0
        %3019 = vmatpush1.bf16.msra.mxu0 0
        %3020 = vmatprep.subr.bf16.mxu0 0
        %3021 = vmatpush1.bf16.msra.mxu0 0
        %3022 = vmatprep.subr.bf16.mxu0 0
        %3023 = vmatpush1.bf16.msra.mxu0 0
        %3024 = vmatprep.subr.bf16.mxu0 0
        %3025 = vmatpush1.bf16.msra.mxu0 0
        %3026 = vmatprep.mubr.bf16.mxu0 0
        %3027 = vmatmul.mubr.bf16.gmra.mrb[0].mxu0 %v2992
        %v3028 = vpop.f32.mrb[0].mxu0
        %v3029 = vadd.f32 0.0, %v3028
        %v3030 = vpop.f32.mrb[0].mxu0
        %v3031 = vpop.f32.mrb[0].mxu0
        %v3032 = vpop.f32.mrb[0].mxu0
        %3033 = vdwg.mxu0
        %3035 = vrot.lane.b32.xlu0 %v2811, 8
        %v3036 = vpop.permute.xlu0 %3035
        %3039 = vrot.lane.b32.xlu0 %v2920, 16
        %v3040 = vpop.permute.xlu0 %3039
        %3043 = vrot.lane.b32.xlu0 %v3029, 24
        %v3044 = vpop.permute.xlu0 %3043
        %v3046 = vsel %vm1388, %v2701, %v3036
        %v3047 = vsel %vm1843, %v3046, %v3040
        %v3048 = vsel %vm1845, %v3047, %v3044
        %v3050 = vlaneseq
        %v3051 = vshrl.u32 %v3050, 7
        %v3052 = vsub.s32 0, %v3051
        %v3053 = vrot.slane %v1259, %v3052
        %v3056 = vlaneseq
        %v3057 = vshrl.u32 %v3056, 7
        %v3058 = vsub.s32 0, %v3057
        %v3059 = vrot.slane %v1261, %v3058
        %v3061 = vrot.slane %v2587, 4
        %v3063 = vsel %vm1388, %v3061, 0
        %v3066 = vsel %vm1388, %v2586, 0
        %3068 = vmatprep.subr.bf16.mxu0 0
        %3069 = vmatpush1.bf16.xpose.msra.mxu0 %v3066
        %3070 = vmatprep.subr.bf16.mxu0 0
        %3071 = vmatpush1.bf16.xpose.msra.mxu0 0
        %3072 = vmatprep.subr.bf16.mxu0 0
        %3073 = vmatpush1.bf16.xpose.msra.mxu0 0
        %3074 = vmatprep.subr.bf16.mxu0 0
        %3075 = vmatpush1.bf16.xpose.msra.mxu0 0
        %3076 = vmatprep.subr.bf16.mxu0 0
        %3077 = vmatpush1.bf16.xpose.msra.mxu0 0
        %3078 = vmatprep.subr.bf16.mxu0 0
        %3079 = vmatpush1.bf16.xpose.msra.mxu0 0
        %3080 = vmatprep.subr.bf16.mxu0 0
        %3081 = vmatpush1.bf16.xpose.msra.mxu0 0
        %3082 = vmatprep.subr.bf16.mxu0 0
        %3083 = vmatpush1.bf16.xpose.msra.mxu0 0
        %3084 = vmatprep.subr.bf16.mxu0 0
        %3085 = vmatpush1.bf16.xpose.msra.mxu0 0
        %3086 = vmatprep.subr.bf16.mxu0 0
        %3087 = vmatpush1.bf16.xpose.msra.mxu0 0
        %3088 = vmatprep.subr.bf16.mxu0 0
        %3089 = vmatpush1.bf16.xpose.msra.mxu0 0
        %3090 = vmatprep.subr.bf16.mxu0 0
        %3091 = vmatpush1.bf16.xpose.msra.mxu0 0
        %3092 = vmatprep.subr.bf16.mxu0 0
        %3093 = vmatpush1.bf16.xpose.msra.mxu0 0
        %3094 = vmatprep.subr.bf16.mxu0 0
        %3095 = vmatpush1.bf16.xpose.msra.mxu0 0
        %3096 = vmatprep.subr.bf16.mxu0 0
        %3097 = vmatpush1.bf16.xpose.msra.mxu0 0
        %3098 = vmatprep.subr.bf16.mxu0 0
        %3099 = vmatpush1.bf16.xpose.msra.mxu0 0
        %3100 = vmatprep.mubr.bf16.mxu0 0
        %3101 = vmatmul.mubr.bf16.gmra.mrb[0].mxu0 %v3063
        %v3102 = vpop.f32.mrb[0].mxu0
        %v3103 = vadd.f32 %v3053, %v3102
        %v3104 = vpop.f32.mrb[0].mxu0
        %v3105 = vpop.f32.mrb[0].mxu0
        %v3106 = vpop.f32.mrb[0].mxu0
        %3107 = vdwg.mxu0
        %v3108 = vsel %vm1843, %v3103, -inf
        %3109 = vmax.xlane.f32.xlu0 %v3108
        %v3110 = vpop.xlane.xlu0 %3109
        %v3111 = vsub.f32 %v3103, %v3110
        %v3112 = vmul.f32 %v3111, 1.442695
        %v3113 = vpow.pop %v3112
        %v3114 = vsel %vm1843, %v3113, 0.0
        %3115 = vadd.xlane.f32.xlu0 %v3114
        %v3116 = vpop.xlane.xlu0 %3115
        %v3117 = vrcp.pop %v3116
        %v3118 = vmul.f32 %v3113, %v3117
        %v3119 = vmul.f32 %v3118, %v3059
        %v3120 = vpack.c.bf16 %v3119, %v3119
        %3122 = vrot.lane.b32.xlu0 %v2586, 96
        %v3123 = vpop.permute.xlu0 %3122
        %v3126 = vsel %vm1843, %v3120, 0
        %3128 = vmatprep.subr.bf16.mxu0 0
        %3129 = vmatpush1.bf16.msra.mxu0 %v3123
        %3130 = vmatprep.subr.bf16.mxu0 0
        %3131 = vmatpush1.bf16.msra.mxu0 0
        %3132 = vmatprep.subr.bf16.mxu0 0
        %3133 = vmatpush1.bf16.msra.mxu0 0
        %3134 = vmatprep.subr.bf16.mxu0 0
        %3135 = vmatpush1.bf16.msra.mxu0 0
        %3136 = vmatprep.subr.bf16.mxu0 0
        %3137 = vmatpush1.bf16.msra.mxu0 0
        %3138 = vmatprep.subr.bf16.mxu0 0
        %3139 = vmatpush1.bf16.msra.mxu0 0
        %3140 = vmatprep.subr.bf16.mxu0 0
        %3141 = vmatpush1.bf16.msra.mxu0 0
        %3142 = vmatprep.subr.bf16.mxu0 0
        %3143 = vmatpush1.bf16.msra.mxu0 0
        %3144 = vmatprep.subr.bf16.mxu0 0
        %3145 = vmatpush1.bf16.msra.mxu0 0
        %3146 = vmatprep.subr.bf16.mxu0 0
        %3147 = vmatpush1.bf16.msra.mxu0 0
        %3148 = vmatprep.subr.bf16.mxu0 0
        %3149 = vmatpush1.bf16.msra.mxu0 0
        %3150 = vmatprep.subr.bf16.mxu0 0
        %3151 = vmatpush1.bf16.msra.mxu0 0
        %3152 = vmatprep.subr.bf16.mxu0 0
        %3153 = vmatpush1.bf16.msra.mxu0 0
        %3154 = vmatprep.subr.bf16.mxu0 0
        %3155 = vmatpush1.bf16.msra.mxu0 0
        %3156 = vmatprep.subr.bf16.mxu0 0
        %3157 = vmatpush1.bf16.msra.mxu0 0
        %3158 = vmatprep.subr.bf16.mxu0 0
        %3159 = vmatpush1.bf16.msra.mxu0 0
        %3160 = vmatprep.mubr.bf16.mxu0 0
        %3161 = vmatmul.mubr.bf16.gmra.mrb[0].mxu0 %v3126
        %v3162 = vpop.f32.mrb[0].mxu0
        %v3163 = vadd.f32 0.0, %v3162
        %v3164 = vpop.f32.mrb[0].mxu0
        %v3165 = vpop.f32.mrb[0].mxu0
        %v3166 = vpop.f32.mrb[0].mxu0
        %3167 = vdwg.mxu0
        %3168 = vrot.lane.b32.xlu0 %v3061, 120
        %v3169 = vpop.permute.xlu0 %3168
        %3170 = vrot.lane.b32.xlu0 %v2586, 120
        %v3171 = vpop.permute.xlu0 %3170
        %v3173 = vsel %vm1388, %v3169, 0
        %v3176 = vsel %vm1388, %v3171, 0
        %3178 = vmatprep.subr.bf16.mxu0 0
        %3179 = vmatpush1.bf16.xpose.msra.mxu0 %v3176
        %3180 = vmatprep.subr.bf16.mxu0 0
        %3181 = vmatpush1.bf16.xpose.msra.mxu0 0
        %3182 = vmatprep.subr.bf16.mxu0 0
        %3183 = vmatpush1.bf16.xpose.msra.mxu0 0
        %3184 = vmatprep.subr.bf16.mxu0 0
        %3185 = vmatpush1.bf16.xpose.msra.mxu0 0
        %3186 = vmatprep.subr.bf16.mxu0 0
        %3187 = vmatpush1.bf16.xpose.msra.mxu0 0
        %3188 = vmatprep.subr.bf16.mxu0 0
        %3189 = vmatpush1.bf16.xpose.msra.mxu0 0
        %3190 = vmatprep.subr.bf16.mxu0 0
        %3191 = vmatpush1.bf16.xpose.msra.mxu0 0
        %3192 = vmatprep.subr.bf16.mxu0 0
        %3193 = vmatpush1.bf16.xpose.msra.mxu0 0
        %3194 = vmatprep.subr.bf16.mxu0 0
        %3195 = vmatpush1.bf16.xpose.msra.mxu0 0
        %3196 = vmatprep.subr.bf16.mxu0 0
        %3197 = vmatpush1.bf16.xpose.msra.mxu0 0
        %3198 = vmatprep.subr.bf16.mxu0 0
        %3199 = vmatpush1.bf16.xpose.msra.mxu0 0
        %3200 = vmatprep.subr.bf16.mxu0 0
        %3201 = vmatpush1.bf16.xpose.msra.mxu0 0
        %3202 = vmatprep.subr.bf16.mxu0 0
        %3203 = vmatpush1.bf16.xpose.msra.mxu0 0
        %3204 = vmatprep.subr.bf16.mxu0 0
        %3205 = vmatpush1.bf16.xpose.msra.mxu0 0
        %3206 = vmatprep.subr.bf16.mxu0 0
        %3207 = vmatpush1.bf16.xpose.msra.mxu0 0
        %3208 = vmatprep.subr.bf16.mxu0 0
        %3209 = vmatpush1.bf16.xpose.msra.mxu0 0
        %3210 = vmatprep.mubr.bf16.mxu0 0
        %3211 = vmatmul.mubr.bf16.gmra.mrb[0].mxu0 %v3173
        %v3212 = vpop.f32.mrb[0].mxu0
        %v3213 = vadd.f32 %v3053, %v3212
        %v3214 = vpop.f32.mrb[0].mxu0
        %v3215 = vpop.f32.mrb[0].mxu0
        %v3216 = vpop.f32.mrb[0].mxu0
        %3217 = vdwg.mxu0
        %v3218 = vsel %vm1843, %v3213, -inf
        %3219 = vmax.xlane.f32.xlu0 %v3218
        %v3220 = vpop.xlane.xlu0 %3219
        %v3221 = vsub.f32 %v3213, %v3220
        %v3222 = vmul.f32 %v3221, 1.442695
        %v3223 = vpow.pop %v3222
        %v3224 = vsel %vm1843, %v3223, 0.0
        %3225 = vadd.xlane.f32.xlu0 %v3224
        %v3226 = vpop.xlane.xlu0 %3225
        %v3227 = vrcp.pop %v3226
        %v3228 = vmul.f32 %v3223, %v3227
        %v3229 = vmul.f32 %v3228, %v3059
        %v3230 = vpack.c.bf16 %v3229, %v3229
        %3231 = vrot.lane.b32.xlu0 %v2586, 88
        %v3232 = vpop.permute.xlu0 %3231
        %v3235 = vsel %vm1843, %v3230, 0
        %3237 = vmatprep.subr.bf16.mxu0 0
        %3238 = vmatpush1.bf16.msra.mxu0 %v3232
        %3239 = vmatprep.subr.bf16.mxu0 0
        %3240 = vmatpush1.bf16.msra.mxu0 0
        %3241 = vmatprep.subr.bf16.mxu0 0
        %3242 = vmatpush1.bf16.msra.mxu0 0
        %3243 = vmatprep.subr.bf16.mxu0 0
        %3244 = vmatpush1.bf16.msra.mxu0 0
        %3245 = vmatprep.subr.bf16.mxu0 0
        %3246 = vmatpush1.bf16.msra.mxu0 0
        %3247 = vmatprep.subr.bf16.mxu0 0
        %3248 = vmatpush1.bf16.msra.mxu0 0
        %3249 = vmatprep.subr.bf16.mxu0 0
        %3250 = vmatpush1.bf16.msra.mxu0 0
        %3251 = vmatprep.subr.bf16.mxu0 0
        %3252 = vmatpush1.bf16.msra.mxu0 0
        %3253 = vmatprep.subr.bf16.mxu0 0
        %3254 = vmatpush1.bf16.msra.mxu0 0
        %3255 = vmatprep.subr.bf16.mxu0 0
        %3256 = vmatpush1.bf16.msra.mxu0 0
        %3257 = vmatprep.subr.bf16.mxu0 0
        %3258 = vmatpush1.bf16.msra.mxu0 0
        %3259 = vmatprep.subr.bf16.mxu0 0
        %3260 = vmatpush1.bf16.msra.mxu0 0
        %3261 = vmatprep.subr.bf16.mxu0 0
        %3262 = vmatpush1.bf16.msra.mxu0 0
        %3263 = vmatprep.subr.bf16.mxu0 0
        %3264 = vmatpush1.bf16.msra.mxu0 0
        %3265 = vmatprep.subr.bf16.mxu0 0
        %3266 = vmatpush1.bf16.msra.mxu0 0
        %3267 = vmatprep.subr.bf16.mxu0 0
        %3268 = vmatpush1.bf16.msra.mxu0 0
        %3269 = vmatprep.mubr.bf16.mxu0 0
        %3270 = vmatmul.mubr.bf16.gmra.mrb[0].mxu0 %v3235
        %v3271 = vpop.f32.mrb[0].mxu0
        %v3272 = vadd.f32 0.0, %v3271
        %v3273 = vpop.f32.mrb[0].mxu0
        %v3274 = vpop.f32.mrb[0].mxu0
        %v3275 = vpop.f32.mrb[0].mxu0
        %3276 = vdwg.mxu0
        %3277 = vrot.lane.b32.xlu0 %v3061, 112
        %v3278 = vpop.permute.xlu0 %3277
        %3279 = vrot.lane.b32.xlu0 %v2586, 112
        %v3280 = vpop.permute.xlu0 %3279
        %v3282 = vsel %vm1388, %v3278, 0
        %v3285 = vsel %vm1388, %v3280, 0
        %3287 = vmatprep.subr.bf16.mxu0 0
        %3288 = vmatpush1.bf16.xpose.msra.mxu0 %v3285
        %3289 = vmatprep.subr.bf16.mxu0 0
        %3290 = vmatpush1.bf16.xpose.msra.mxu0 0
        %3291 = vmatprep.subr.bf16.mxu0 0
        %3292 = vmatpush1.bf16.xpose.msra.mxu0 0
        %3293 = vmatprep.subr.bf16.mxu0 0
        %3294 = vmatpush1.bf16.xpose.msra.mxu0 0
        %3295 = vmatprep.subr.bf16.mxu0 0
        %3296 = vmatpush1.bf16.xpose.msra.mxu0 0
        %3297 = vmatprep.subr.bf16.mxu0 0
        %3298 = vmatpush1.bf16.xpose.msra.mxu0 0
        %3299 = vmatprep.subr.bf16.mxu0 0
        %3300 = vmatpush1.bf16.xpose.msra.mxu0 0
        %3301 = vmatprep.subr.bf16.mxu0 0
        %3302 = vmatpush1.bf16.xpose.msra.mxu0 0
        %3303 = vmatprep.subr.bf16.mxu0 0
        %3304 = vmatpush1.bf16.xpose.msra.mxu0 0
        %3305 = vmatprep.subr.bf16.mxu0 0
        %3306 = vmatpush1.bf16.xpose.msra.mxu0 0
        %3307 = vmatprep.subr.bf16.mxu0 0
        %3308 = vmatpush1.bf16.xpose.msra.mxu0 0
        %3309 = vmatprep.subr.bf16.mxu0 0
        %3310 = vmatpush1.bf16.xpose.msra.mxu0 0
        %3311 = vmatprep.subr.bf16.mxu0 0
        %3312 = vmatpush1.bf16.xpose.msra.mxu0 0
        %3313 = vmatprep.subr.bf16.mxu0 0
        %3314 = vmatpush1.bf16.xpose.msra.mxu0 0
        %3315 = vmatprep.subr.bf16.mxu0 0
        %3316 = vmatpush1.bf16.xpose.msra.mxu0 0
        %3317 = vmatprep.subr.bf16.mxu0 0
        %3318 = vmatpush1.bf16.xpose.msra.mxu0 0
        %3319 = vmatprep.mubr.bf16.mxu0 0
        %3320 = vmatmul.mubr.bf16.gmra.mrb[0].mxu0 %v3282
        %v3321 = vpop.f32.mrb[0].mxu0
        %v3322 = vadd.f32 %v3053, %v3321
        %v3323 = vpop.f32.mrb[0].mxu0
        %v3324 = vpop.f32.mrb[0].mxu0
        %v3325 = vpop.f32.mrb[0].mxu0
        %3326 = vdwg.mxu0
        %v3327 = vsel %vm1843, %v3322, -inf
        %3328 = vmax.xlane.f32.xlu0 %v3327
        %v3329 = vpop.xlane.xlu0 %3328
        %v3330 = vsub.f32 %v3322, %v3329
        %v3331 = vmul.f32 %v3330, 1.442695
        %v3332 = vpow.pop %v3331
        %v3333 = vsel %vm1843, %v3332, 0.0
        %3334 = vadd.xlane.f32.xlu0 %v3333
        %v3335 = vpop.xlane.xlu0 %3334
        %v3336 = vrcp.pop %v3335
        %v3337 = vmul.f32 %v3332, %v3336
        %v3338 = vmul.f32 %v3337, %v3059
        %v3339 = vpack.c.bf16 %v3338, %v3338
        %3340 = vrot.lane.b32.xlu0 %v2586, 80
        %v3341 = vpop.permute.xlu0 %3340
        %v3344 = vsel %vm1843, %v3339, 0
        %3346 = vmatprep.subr.bf16.mxu0 0
        %3347 = vmatpush1.bf16.msra.mxu0 %v3341
        %3348 = vmatprep.subr.bf16.mxu0 0
        %3349 = vmatpush1.bf16.msra.mxu0 0
        %3350 = vmatprep.subr.bf16.mxu0 0
        %3351 = vmatpush1.bf16.msra.mxu0 0
        %3352 = vmatprep.subr.bf16.mxu0 0
        %3353 = vmatpush1.bf16.msra.mxu0 0
        %3354 = vmatprep.subr.bf16.mxu0 0
        %3355 = vmatpush1.bf16.msra.mxu0 0
        %3356 = vmatprep.subr.bf16.mxu0 0
        %3357 = vmatpush1.bf16.msra.mxu0 0
        %3358 = vmatprep.subr.bf16.mxu0 0
        %3359 = vmatpush1.bf16.msra.mxu0 0
        %3360 = vmatprep.subr.bf16.mxu0 0
        %3361 = vmatpush1.bf16.msra.mxu0 0
        %3362 = vmatprep.subr.bf16.mxu0 0
        %3363 = vmatpush1.bf16.msra.mxu0 0
        %3364 = vmatprep.subr.bf16.mxu0 0
        %3365 = vmatpush1.bf16.msra.mxu0 0
        %3366 = vmatprep.subr.bf16.mxu0 0
        %3367 = vmatpush1.bf16.msra.mxu0 0
        %3368 = vmatprep.subr.bf16.mxu0 0
        %3369 = vmatpush1.bf16.msra.mxu0 0
        %3370 = vmatprep.subr.bf16.mxu0 0
        %3371 = vmatpush1.bf16.msra.mxu0 0
        %3372 = vmatprep.subr.bf16.mxu0 0
        %3373 = vmatpush1.bf16.msra.mxu0 0
        %3374 = vmatprep.subr.bf16.mxu0 0
        %3375 = vmatpush1.bf16.msra.mxu0 0
        %3376 = vmatprep.subr.bf16.mxu0 0
        %3377 = vmatpush1.bf16.msra.mxu0 0
        %3378 = vmatprep.mubr.bf16.mxu0 0
        %3379 = vmatmul.mubr.bf16.gmra.mrb[0].mxu0 %v3344
        %v3380 = vpop.f32.mrb[0].mxu0
        %v3381 = vadd.f32 0.0, %v3380
        %v3382 = vpop.f32.mrb[0].mxu0
        %v3383 = vpop.f32.mrb[0].mxu0
        %v3384 = vpop.f32.mrb[0].mxu0
        %3385 = vdwg.mxu0
        %3386 = vrot.lane.b32.xlu0 %v3061, 104
        %v3387 = vpop.permute.xlu0 %3386
        %3388 = vrot.lane.b32.xlu0 %v2586, 104
        %v3389 = vpop.permute.xlu0 %3388
        %v3391 = vsel %vm1388, %v3387, 0
        %v3394 = vsel %vm1388, %v3389, 0
        %3396 = vmatprep.subr.bf16.mxu0 0
        %3397 = vmatpush1.bf16.xpose.msra.mxu0 %v3394
        %3398 = vmatprep.subr.bf16.mxu0 0
        %3399 = vmatpush1.bf16.xpose.msra.mxu0 0
        %3400 = vmatprep.subr.bf16.mxu0 0
        %3401 = vmatpush1.bf16.xpose.msra.mxu0 0
        %3402 = vmatprep.subr.bf16.mxu0 0
        %3403 = vmatpush1.bf16.xpose.msra.mxu0 0
        %3404 = vmatprep.subr.bf16.mxu0 0
        %3405 = vmatpush1.bf16.xpose.msra.mxu0 0
        %3406 = vmatprep.subr.bf16.mxu0 0
        %3407 = vmatpush1.bf16.xpose.msra.mxu0 0
        %3408 = vmatprep.subr.bf16.mxu0 0
        %3409 = vmatpush1.bf16.xpose.msra.mxu0 0
        %3410 = vmatprep.subr.bf16.mxu0 0
        %3411 = vmatpush1.bf16.xpose.msra.mxu0 0
        %3412 = vmatprep.subr.bf16.mxu0 0
        %3413 = vmatpush1.bf16.xpose.msra.mxu0 0
        %3414 = vmatprep.subr.bf16.mxu0 0
        %3415 = vmatpush1.bf16.xpose.msra.mxu0 0
        %3416 = vmatprep.subr.bf16.mxu0 0
        %3417 = vmatpush1.bf16.xpose.msra.mxu0 0
        %3418 = vmatprep.subr.bf16.mxu0 0
        %3419 = vmatpush1.bf16.xpose.msra.mxu0 0
        %3420 = vmatprep.subr.bf16.mxu0 0
        %3421 = vmatpush1.bf16.xpose.msra.mxu0 0
        %3422 = vmatprep.subr.bf16.mxu0 0
        %3423 = vmatpush1.bf16.xpose.msra.mxu0 0
        %3424 = vmatprep.subr.bf16.mxu0 0
        %3425 = vmatpush1.bf16.xpose.msra.mxu0 0
        %3426 = vmatprep.subr.bf16.mxu0 0
        %3427 = vmatpush1.bf16.xpose.msra.mxu0 0
        %3428 = vmatprep.mubr.bf16.mxu0 0
        %3429 = vmatmul.mubr.bf16.gmra.mrb[0].mxu0 %v3391
        %v3430 = vpop.f32.mrb[0].mxu0
        %v3431 = vadd.f32 %v3053, %v3430
        %v3432 = vpop.f32.mrb[0].mxu0
        %v3433 = vpop.f32.mrb[0].mxu0
        %v3434 = vpop.f32.mrb[0].mxu0
        %3435 = vdwg.mxu0
        %v3436 = vsel %vm1843, %v3431, -inf
        %3437 = vmax.xlane.f32.xlu0 %v3436
        %v3438 = vpop.xlane.xlu0 %3437
        %v3439 = vsub.f32 %v3431, %v3438
        %v3440 = vmul.f32 %v3439, 1.442695
        %v3441 = vpow.pop %v3440
        %v3442 = vsel %vm1843, %v3441, 0.0
        %3443 = vadd.xlane.f32.xlu0 %v3442
        %v3444 = vpop.xlane.xlu0 %3443
        %v3445 = vrcp.pop %v3444
        %v3446 = vmul.f32 %v3441, %v3445
        %v3447 = vmul.f32 %v3446, %v3059
        %v3448 = vpack.c.bf16 %v3447, %v3447
        %3449 = vrot.lane.b32.xlu0 %v2586, 72
        %v3450 = vpop.permute.xlu0 %3449
        %v3453 = vsel %vm1843, %v3448, 0
        %3455 = vmatprep.subr.bf16.mxu0 0
        %3456 = vmatpush1.bf16.msra.mxu0 %v3450
        %3457 = vmatprep.subr.bf16.mxu0 0
        %3458 = vmatpush1.bf16.msra.mxu0 0
        %3459 = vmatprep.subr.bf16.mxu0 0
        %3460 = vmatpush1.bf16.msra.mxu0 0
        %3461 = vmatprep.subr.bf16.mxu0 0
        %3462 = vmatpush1.bf16.msra.mxu0 0
        %3463 = vmatprep.subr.bf16.mxu0 0
        %3464 = vmatpush1.bf16.msra.mxu0 0
        %3465 = vmatprep.subr.bf16.mxu0 0
        %3466 = vmatpush1.bf16.msra.mxu0 0
        %3467 = vmatprep.subr.bf16.mxu0 0
        %3468 = vmatpush1.bf16.msra.mxu0 0
        %3469 = vmatprep.subr.bf16.mxu0 0
        %3470 = vmatpush1.bf16.msra.mxu0 0
        %3471 = vmatprep.subr.bf16.mxu0 0
        %3472 = vmatpush1.bf16.msra.mxu0 0
        %3473 = vmatprep.subr.bf16.mxu0 0
        %3474 = vmatpush1.bf16.msra.mxu0 0
        %3475 = vmatprep.subr.bf16.mxu0 0
        %3476 = vmatpush1.bf16.msra.mxu0 0
        %3477 = vmatprep.subr.bf16.mxu0 0
        %3478 = vmatpush1.bf16.msra.mxu0 0
        %3479 = vmatprep.subr.bf16.mxu0 0
        %3480 = vmatpush1.bf16.msra.mxu0 0
        %3481 = vmatprep.subr.bf16.mxu0 0
        %3482 = vmatpush1.bf16.msra.mxu0 0
        %3483 = vmatprep.subr.bf16.mxu0 0
        %3484 = vmatpush1.bf16.msra.mxu0 0
        %3485 = vmatprep.subr.bf16.mxu0 0
        %3486 = vmatpush1.bf16.msra.mxu0 0
        %3487 = vmatprep.mubr.bf16.mxu0 0
        %3488 = vmatmul.mubr.bf16.gmra.mrb[0].mxu0 %v3453
        %v3489 = vpop.f32.mrb[0].mxu0
        %v3490 = vadd.f32 0.0, %v3489
        %v3491 = vpop.f32.mrb[0].mxu0
        %v3492 = vpop.f32.mrb[0].mxu0
        %v3493 = vpop.f32.mrb[0].mxu0
        %3494 = vdwg.mxu0
        %3496 = vrot.lane.b32.xlu0 %v3272, 8
        %v3497 = vpop.permute.xlu0 %3496
        %3500 = vrot.lane.b32.xlu0 %v3381, 16
        %v3501 = vpop.permute.xlu0 %3500
        %3504 = vrot.lane.b32.xlu0 %v3490, 24
        %v3505 = vpop.permute.xlu0 %3504
        %v3507 = vsel %vm1388, %v3163, %v3497
        %v3508 = vsel %vm1843, %v3507, %v3501
        %v3509 = vsel %vm1845, %v3508, %v3505
        %v3510 = vpack.c.bf16 %v3509, %v3048
        %v3511 = vld [vmem:[%s1231] sm:$0xf]
        %v3512 = vld [vmem:[%s1231 + $0x4] sm:$0xf]
        %v3513 = vld [vmem:[%s1231 + $0x8] sm:$0xf]
        %v3514 = vld [vmem:[%s1231 + $0xc] sm:$0xf]
        %v3515 = vld [vmem:[%s1234] sm:$0x1]
        %v3517 = vlaneseq
        %v3518 = vshrl.u32 %v3517, 7
        %v3519 = vsub.s32 0, %v3518
        %v3520 = vrot.slane %v3515, %v3519
        %v3526 = vunpack.c.l.b16 %v3511
        %v3527 = vunpack.c.l.b16 %v3512
        %v3528 = vunpack.c.l.b16 %v3513
        %v3529 = vunpack.c.l.b16 %v3514
        %v3530 = vpack.c.b16 %v3527, %v3526
        %v3531 = vpack.c.b16 %v3529, %v3528
        %v3535 = vsel %vm1264, %v3510, 0
        %3537 = vmatprep.subr.bf16.mxu0 0
        %3538 = vmatpush1.bf16.msra.mxu0 %v3530
        %3539 = vmatprep.subr.bf16.mxu0 0
        %3540 = vmatpush1.bf16.msra.mxu0 %v3531
        %3541 = vmatprep.subr.bf16.mxu0 0
        %3542 = vmatpush1.bf16.msra.mxu0 0
        %3543 = vmatprep.subr.bf16.mxu0 0
        %3544 = vmatpush1.bf16.msra.mxu0 0
        %3545 = vmatprep.subr.bf16.mxu0 0
        %3546 = vmatpush1.bf16.msra.mxu0 0
        %3547 = vmatprep.subr.bf16.mxu0 0
        %3548 = vmatpush1.bf16.msra.mxu0 0
        %3549 = vmatprep.subr.bf16.mxu0 0
        %3550 = vmatpush1.bf16.msra.mxu0 0
        %3551 = vmatprep.subr.bf16.mxu0 0
        %3552 = vmatpush1.bf16.msra.mxu0 0
        %3553 = vmatprep.subr.bf16.mxu0 0
        %3554 = vmatpush1.bf16.msra.mxu0 0
        %3555 = vmatprep.subr.bf16.mxu0 0
        %3556 = vmatpush1.bf16.msra.mxu0 0
        %3557 = vmatprep.subr.bf16.mxu0 0
        %3558 = vmatpush1.bf16.msra.mxu0 0
        %3559 = vmatprep.subr.bf16.mxu0 0
        %3560 = vmatpush1.bf16.msra.mxu0 0
        %3561 = vmatprep.subr.bf16.mxu0 0
        %3562 = vmatpush1.bf16.msra.mxu0 0
        %3563 = vmatprep.subr.bf16.mxu0 0
        %3564 = vmatpush1.bf16.msra.mxu0 0
        %3565 = vmatprep.subr.bf16.mxu0 0
        %3566 = vmatpush1.bf16.msra.mxu0 0
        %3567 = vmatprep.subr.bf16.mxu0 0
        %3568 = vmatpush1.bf16.msra.mxu0 0
        %3569 = vmatprep.mubr.bf16.mxu0 0
        %3570 = vmatmul.mubr.bf16.gmra.mrb[0].mxu0 %v3535
        %v3571 = vpop.f32.mrb[0].mxu0
        %v3572 = vadd.f32 %v3520, %v3571
        %v3573 = vpop.f32.mrb[0].mxu0
        %v3574 = vpop.f32.mrb[0].mxu0
        %v3575 = vadd.f32 %v3520, %v3574
        %v3576 = vpop.f32.mrb[0].mxu0
        %3577 = vdwg.mxu0
        %v3578 = vadd.f32 %v2385, %v3572
        %v3579 = vadd.f32 %v2386, %v3575
        %v3580 = vsel %vm1264, %v3578, 0.0
        %3581 = vadd.xlane.f32.xlu0 %v3580
        %v3582 = vpop.xlane.xlu0 %3581
        %v3583 = vsel %vm1264, %v3579, 0.0
        %3584 = vadd.xlane.f32.xlu0 %v3583
        %v3585 = vpop.xlane.xlu0 %3584
        %v3586 = vmul.f32 %v3582, %v1271
        %v3587 = vmul.f32 %v3585, %v1271
        %v3588 = vsub.f32 %v3578, %v3586
        %v3589 = vsub.f32 %v3579, %v3587
        %v3590 = vmul.f32 %v3588, %v3588
        %v3591 = vmul.f32 %v3589, %v3589
        %v3592 = vsel %vm1264, %v3590, 0.0
        %3593 = vadd.xlane.f32.xlu0 %v3592
        %v3594 = vpop.xlane.xlu0 %3593
        %v3595 = vsel %vm1264, %v3591, 0.0
        %3596 = vadd.xlane.f32.xlu0 %v3595
        %v3597 = vpop.xlane.xlu0 %3596
        %v3598 = vmul.f32 %v3594, %v1271
        %v3599 = vmul.f32 %v3597, %v1271
        %v3600 = vadd.f32 %v3598, 1e-05
        %v3601 = vadd.f32 %v3599, 1e-05
        %v3602 = vrsqrt.pop %v3600
        %v3603 = vrsqrt.pop %v3601
        %v3604 = vmul.f32 %v3588, %v3602
        %v3605 = vmul.f32 %v3589, %v3603
        %v3606 = vlaneseq
        %v3607 = vshrl.u32 %v3606, 7
        %v3608 = vsub.s32 4, %v3607
        %v3609 = vrot.slane %v1253, %v3608
        %v3610 = vmul.f32 %v3604, %v3609
        %v3611 = vmul.f32 %v3605, %v3609
        %v3612 = vlaneseq
        %v3613 = vshrl.u32 %v3612, 7
        %v3614 = vsub.s32 5, %v3613
        %v3615 = vrot.slane %v1253, %v3614
        %v3616 = vadd.f32 %v3610, %v3615
        %v3617 = vadd.f32 %v3611, %v3615
        %v3618 = vpack.c.bf16 %v3617, %v3616
        %v3619 = vld [vmem:[%s988] sm:$0xf]
        %v3620 = vld [vmem:[%s988 + $0x4] sm:$0xf]
        %v3621 = vld [vmem:[%s988 + $0x8] sm:$0xf]
        %v3622 = vld [vmem:[%s988 + $0xc] sm:$0xf]
        %v3623 = vld [vmem:[%s996] sm:$0x1]
        %v3625 = vlaneseq
        %v3626 = vshrl.u32 %v3625, 7
        %v3627 = vsub.s32 0, %v3626
        %v3628 = vrot.slane %v3623, %v3627
        %v3634 = vunpack.c.l.b16 %v3619
        %v3635 = vunpack.c.l.b16 %v3620
        %v3636 = vunpack.c.l.b16 %v3621
        %v3637 = vunpack.c.l.b16 %v3622
        %v3638 = vpack.c.b16 %v3635, %v3634
        %v3639 = vpack.c.b16 %v3637, %v3636
        %v3643 = vsel %vm1264, %v3618, 0
        %3645 = vmatprep.subr.bf16.mxu0 0
        %3646 = vmatpush1.bf16.msra.mxu0 %v3638
        %3647 = vmatprep.subr.bf16.mxu0 0
        %3648 = vmatpush1.bf16.msra.mxu0 %v3639
        %3649 = vmatprep.subr.bf16.mxu0 0
        %3650 = vmatpush1.bf16.msra.mxu0 0
        %3651 = vmatprep.subr.bf16.mxu0 0
        %3652 = vmatpush1.bf16.msra.mxu0 0
        %3653 = vmatprep.subr.bf16.mxu0 0
        %3654 = vmatpush1.bf16.msra.mxu0 0
        %3655 = vmatprep.subr.bf16.mxu0 0
        %3656 = vmatpush1.bf16.msra.mxu0 0
        %3657 = vmatprep.subr.bf16.mxu0 0
        %3658 = vmatpush1.bf16.msra.mxu0 0
        %3659 = vmatprep.subr.bf16.mxu0 0
        %3660 = vmatpush1.bf16.msra.mxu0 0
        %3661 = vmatprep.subr.bf16.mxu0 0
        %3662 = vmatpush1.bf16.msra.mxu0 0
        %3663 = vmatprep.subr.bf16.mxu0 0
        %3664 = vmatpush1.bf16.msra.mxu0 0
        %3665 = vmatprep.subr.bf16.mxu0 0
        %3666 = vmatpush1.bf16.msra.mxu0 0
        %3667 = vmatprep.subr.bf16.mxu0 0
        %3668 = vmatpush1.bf16.msra.mxu0 0
        %3669 = vmatprep.subr.bf16.mxu0 0
        %3670 = vmatpush1.bf16.msra.mxu0 0
        %3671 = vmatprep.subr.bf16.mxu0 0
        %3672 = vmatpush1.bf16.msra.mxu0 0
        %3673 = vmatprep.subr.bf16.mxu0 0
        %3674 = vmatpush1.bf16.msra.mxu0 0
        %3675 = vmatprep.subr.bf16.mxu0 0
        %3676 = vmatpush1.bf16.msra.mxu0 0
        %3677 = vmatprep.mubr.bf16.mxu0 0
        %3678 = vmatmul.mubr.bf16.gmra.mrb[0].mxu0 %v3643
        %v3679 = vpop.f32.mrb[0].mxu0
        %v3680 = vadd.f32 %v3628, %v3679
        %v3681 = vpop.f32.mrb[0].mxu0
        %v3682 = vpop.f32.mrb[0].mxu0
        %v3683 = vadd.f32 %v3628, %v3682
        %v3684 = vpop.f32.mrb[0].mxu0
        %3685 = vdwg.mxu0
        %v3686 = vmax.f32 %v3680, 0.0
        %v3687 = vmax.f32 %v3683, 0.0
        %v3688 = vpack.c.bf16 %v3687, %v3686
        %v3689 = vld [vmem:[%s1239] sm:$0xf]
        %v3690 = vld [vmem:[%s1239 + $0x4] sm:$0xf]
        %v3691 = vld [vmem:[%s1239 + $0x8] sm:$0xf]
        %v3692 = vld [vmem:[%s1239 + $0xc] sm:$0xf]
        %v3693 = vld [vmem:[%s1239 + $0x10] sm:$0xf]
        %v3694 = vld [vmem:[%s1239 + $0x14] sm:$0xf]
        %v3695 = vld [vmem:[%s1239 + $0x18] sm:$0xf]
        %v3696 = vld [vmem:[%s1239 + $0x1c] sm:$0xf]
        %v3697 = vld [vmem:[%s1004] sm:$0x1]
        %v3699 = vlaneseq
        %v3700 = vshrl.u32 %v3699, 7
        %v3701 = vsub.s32 0, %v3700
        %v3702 = vrot.slane %v3697, %v3701
        %v3712 = vunpack.c.l.b16 %v3689
        %v3713 = vunpack.c.l.b16 %v3690
        %v3714 = vunpack.c.l.b16 %v3691
        %v3715 = vunpack.c.l.b16 %v3692
        %v3716 = vunpack.c.l.b16 %v3693
        %v3717 = vunpack.c.l.b16 %v3694
        %v3718 = vunpack.c.l.b16 %v3695
        %v3719 = vunpack.c.l.b16 %v3696
        %v3720 = vpack.c.b16 %v3713, %v3712
        %v3721 = vpack.c.b16 %v3715, %v3714
        %v3722 = vpack.c.b16 %v3717, %v3716
        %v3723 = vpack.c.b16 %v3719, %v3718
        %vm3728 = vcmask 523264
        %v3730 = vsel %vm3728, %v3688, 0
        %3732 = vmatprep.subr.bf16.mxu0 0
        %3733 = vmatpush1.bf16.msra.mxu0 %v3720
        %3734 = vmatprep.subr.bf16.mxu0 0
        %3735 = vmatpush1.bf16.msra.mxu0 %v3721
        %3736 = vmatprep.subr.bf16.mxu0 0
        %3737 = vmatpush1.bf16.msra.mxu0 %v3722
        %3738 = vmatprep.subr.bf16.mxu0 0
        %3739 = vmatpush1.bf16.msra.mxu0 %v3723
        %3740 = vmatprep.subr.bf16.mxu0 0
        %3741 = vmatpush1.bf16.msra.mxu0 0
        %3742 = vmatprep.subr.bf16.mxu0 0
        %3743 = vmatpush1.bf16.msra.mxu0 0
        %3744 = vmatprep.subr.bf16.mxu0 0
        %3745 = vmatpush1.bf16.msra.mxu0 0
        %3746 = vmatprep.subr.bf16.mxu0 0
        %3747 = vmatpush1.bf16.msra.mxu0 0
        %3748 = vmatprep.subr.bf16.mxu0 0
        %3749 = vmatpush1.bf16.msra.mxu0 0
        %3750 = vmatprep.subr.bf16.mxu0 0
        %3751 = vmatpush1.bf16.msra.mxu0 0
        %3752 = vmatprep.subr.bf16.mxu0 0
        %3753 = vmatpush1.bf16.msra.mxu0 0
        %3754 = vmatprep.subr.bf16.mxu0 0
        %3755 = vmatpush1.bf16.msra.mxu0 0
        %3756 = vmatprep.subr.bf16.mxu0 0
        %3757 = vmatpush1.bf16.msra.mxu0 0
        %3758 = vmatprep.subr.bf16.mxu0 0
        %3759 = vmatpush1.bf16.msra.mxu0 0
        %3760 = vmatprep.subr.bf16.mxu0 0
        %3761 = vmatpush1.bf16.msra.mxu0 0
        %3762 = vmatprep.subr.bf16.mxu0 0
        %3763 = vmatpush1.bf16.msra.mxu0 0
        %3764 = vmatprep.mubr.bf16.mxu0 0
        %3765 = vmatmul.mubr.bf16.gmra.mrb[0].mxu0 %v3730
        %v3766 = vpop.f32.mrb[0].mxu0
        %v3767 = vadd.f32 %v3702, %v3766
        %v3768 = vpop.f32.mrb[0].mxu0
        %v3769 = vpop.f32.mrb[0].mxu0
        %v3770 = vadd.f32 %v3702, %v3769
        %v3771 = vpop.f32.mrb[0].mxu0
        %3772 = vdwg.mxu0
        %v3773 = vadd.f32 %v3578, %v3767
        %v3774 = vadd.f32 %v3579, %v3770
        %3775 = vst.msk [vmem:[#allocation2] sm:$0xff] %vm1264, %v3773
        %3776 = vst.msk [vmem:[#allocation2 + $0x8] sm:$0xff] %vm1264, %v3774
        %p3777 = scmp.eq.s32.totalorder %s54, 1
        // Predicated region
        $region153: #{cif_decoder_san_forward.1} parent=115 // pred_check
          %p3778 = pneg %p3777
        $region154: #{cif_decoder_san_forward.1} parent=115 // pred_check_branch
          %3780 = sbr.rel (%p3778) target = $region156
        $region155: #{cif_decoder_san_forward.1} parent=115 // pred_region
          %v3781 = vld [vmem:[#allocation14] sm:$0x1]
          %v3782 = vld [vmem:[#allocation14 + $0x1] sm:$0x1]
          %v3783 = vsel %vm1264, %v3773, 0.0
          %3784 = vadd.xlane.f32.xlu0 %v3783
          %v3785 = vpop.xlane.xlu0 %3784
          %v3786 = vsel %vm1264, %v3774, 0.0
          %3787 = vadd.xlane.f32.xlu0 %v3786
          %v3788 = vpop.xlane.xlu0 %3787
          %v3789 = vmul.f32 %v3785, %v1271
          %v3790 = vmul.f32 %v3788, %v1271
          %v3791 = vsub.f32 %v3773, %v3789
          %v3792 = vsub.f32 %v3774, %v3790
          %v3793 = vmul.f32 %v3791, %v3791
          %v3794 = vmul.f32 %v3792, %v3792
          %v3795 = vsel %vm1264, %v3793, 0.0
          %3796 = vadd.xlane.f32.xlu0 %v3795
          %v3797 = vpop.xlane.xlu0 %3796
          %v3798 = vsel %vm1264, %v3794, 0.0
          %3799 = vadd.xlane.f32.xlu0 %v3798
          %v3800 = vpop.xlane.xlu0 %3799
          %v3801 = vmul.f32 %v3797, %v1271
          %v3802 = vmul.f32 %v3800, %v1271
          %v3803 = vadd.f32 %v3801, 1e-12
          %v3804 = vadd.f32 %v3802, 1e-12
          %v3805 = vrsqrt.pop %v3803
          %v3806 = vrsqrt.pop %v3804
          %v3807 = vmul.f32 %v3791, %v3805
          %v3808 = vmul.f32 %v3792, %v3806
          %v3809 = vlaneseq
          %v3810 = vshrl.u32 %v3809, 7
          %v3811 = vsub.s32 0, %v3810
          %v3812 = vrot.slane %v3781, %v3811
          %v3813 = vmul.f32 %v3807, %v3812
          %v3814 = vmul.f32 %v3808, %v3812
          %v3815 = vlaneseq
          %v3816 = vshrl.u32 %v3815, 7
          %v3817 = vsub.s32 0, %v3816
          %v3818 = vrot.slane %v3782, %v3817
          %v3819 = vadd.f32 %v3813, %v3818
          %v3820 = vadd.f32 %v3814, %v3818
          %v3821 = vpack.c.bf16 %v3820, %v3819
          %v3822 = vld [vmem:[#allocation15] sm:$0xf]
          %v3823 = vld [vmem:[#allocation15 + $0x4] sm:$0xf]
          %v3824 = vld [vmem:[#allocation15 + $0x8] sm:$0xf]
          %v3825 = vld [vmem:[#allocation15 + $0xc] sm:$0xf]
          %v3826 = vld [vmem:[%s23] sm:$0x1]
          %v3828 = vlaneseq
          %v3829 = vshrl.u32 %v3828, 7
          %v3830 = vsub.s32 0, %v3829
          %v3831 = vrot.slane %v3826, %v3830
          %v3837 = vunpack.c.l.b16 %v3822
          %v3838 = vunpack.c.l.b16 %v3823
          %v3839 = vunpack.c.l.b16 %v3824
          %v3840 = vunpack.c.l.b16 %v3825
          %v3841 = vpack.c.b16 %v3838, %v3837
          %v3842 = vpack.c.b16 %v3840, %v3839
          %v3846 = vsel %vm1264, %v3821, 0
          %3848 = vmatprep.subr.bf16.mxu0 0
          %3849 = vmatpush1.bf16.msra.mxu0 %v3841
          %3850 = vmatprep.subr.bf16.mxu0 0
          %3851 = vmatpush1.bf16.msra.mxu0 %v3842
          %3852 = vmatprep.subr.bf16.mxu0 0
          %3853 = vmatpush1.bf16.msra.mxu0 0
          %3854 = vmatprep.subr.bf16.mxu0 0
          %3855 = vmatpush1.bf16.msra.mxu0 0
          %3856 = vmatprep.subr.bf16.mxu0 0
          %3857 = vmatpush1.bf16.msra.mxu0 0
          %3858 = vmatprep.subr.bf16.mxu0 0
          %3859 = vmatpush1.bf16.msra.mxu0 0
          %3860 = vmatprep.subr.bf16.mxu0 0
          %3861 = vmatpush1.bf16.msra.mxu0 0
          %3862 = vmatprep.subr.bf16.mxu0 0
          %3863 = vmatpush1.bf16.msra.mxu0 0
          %3864 = vmatprep.subr.bf16.mxu0 0
          %3865 = vmatpush1.bf16.msra.mxu0 0
          %3866 = vmatprep.subr.bf16.mxu0 0
          %3867 = vmatpush1.bf16.msra.mxu0 0
          %3868 = vmatprep.subr.bf16.mxu0 0
          %3869 = vmatpush1.bf16.msra.mxu0 0
          %3870 = vmatprep.subr.bf16.mxu0 0
          %3871 = vmatpush1.bf16.msra.mxu0 0
          %3872 = vmatprep.subr.bf16.mxu0 0
          %3873 = vmatpush1.bf16.msra.mxu0 0
          %3874 = vmatprep.subr.bf16.mxu0 0
          %3875 = vmatpush1.bf16.msra.mxu0 0
          %3876 = vmatprep.subr.bf16.mxu0 0
          %3877 = vmatpush1.bf16.msra.mxu0 0
          %3878 = vmatprep.subr.bf16.mxu0 0
          %3879 = vmatpush1.bf16.msra.mxu0 0
          %3880 = vmatprep.mubr.bf16.mxu0 0
          %3881 = vmatmul.mubr.bf16.gmra.mrb[0].mxu0 %v3846
          %v3882 = vpop.f32.mrb[0].mxu0
          %v3883 = vadd.f32 %v3831, %v3882
          %v3884 = vpop.f32.mrb[0].mxu0
          %v3885 = vpop.f32.mrb[0].mxu0
          %v3886 = vadd.f32 %v3831, %v3885
          %v3887 = vpop.f32.mrb[0].mxu0
          %3888 = vdwg.mxu0
          %3889 = vst [vmem:[#allocation17] sm:$0xff] %v3883
          %3890 = vst [vmem:[#allocation17 + $0x8] sm:$0xff] %v3886
        $region156: #{cif_decoder_san_forward.1} parent=115 // pred_fallthru
          _
        // Predicated region
        $region157: #{cif_decoder_san_forward.1} parent=115 // pred_check
          %p3891 = pneg %p688
        $region158: #{cif_decoder_san_forward.1} parent=115 // pred_check_branch
          %3893 = sbr.rel (%p3891) target = $region160
        $region159: #{cif_decoder_san_forward.1} parent=115 // pred_region
          %s3894 = smul.u32 2, %s53
          %s3896 = ssub.s32 256, 256
          %3897 = vsyncadd [#allocation5], %s3896
          %s3898 = smul.addr %s3894, 128
          %s3899 = scalar_lea.hbm %s24, %s3898
          %s3900 = sshll.u32 [#allocation17], 4
          %s3901 = int_to_ptr.vmem [resolvable:$true] %s3900
          %3906 = dma.vmem_to_hbm [thread:$0]  %s3901, 256, %s3899, [#allocation5], 128, 128, 8
        $region160: #{cif_decoder_san_forward.1} parent=115 // pred_fallthru
          _
        // Predicated region
        $region161: #{cif_decoder_san_forward.1} parent=115 // pred_check
          %p3907 = pneg %p688
        $region162: #{cif_decoder_san_forward.1} parent=115 // pred_check_branch
          %3909 = sbr.rel (%p3907) target = $region164
        $region163: #{cif_decoder_san_forward.1} parent=115 // pred_region
          %3910 = dma.done [#allocation5], 256
        $region164: #{cif_decoder_san_forward.1} parent=115 // pred_fallthru
          _
      $region116: #{cif_decoder_san_forward.1} parent=5 // pred_fallthru
        _
      %p3911 = scmp.le.s32.totalorder 2, %s44
      // Predicated region
      $region165: #{cif_decoder_san_forward.1} parent=5 // pred_check
        %p3912 = pneg %p3911
      $region166: #{cif_decoder_san_forward.1} parent=5 // pred_check_branch
        %3914 = sbr.rel (%p3912) target = $region168
      $region167: #{cif_decoder_san_forward.1} parent=5 // pred_region
        %s3915 = ssub.s32 %s44, 2
      $region168: #{cif_decoder_san_forward.1} parent=5 // pred_fallthru
        _
    $region6: #{cif_decoder_san_forward.1} parent=1 // loop_footer
      %s48 = sadd.s32 1, %s44
    $region7: #{cif_decoder_san_forward.1} parent=1 // loop_footer_branch
      %43 = sbr.rel target = $region3
    $region8: #{cif_decoder_san_forward.1} parent=1 // loop_exit
      _
    %3916 = vsyncpa [#allocation4], 1
    %s3917 = scalar_lea.sflag [#allocation4], 1
    %3918 = vsyncpa %s3917, 1
    %3919 = vsyncpa [#allocation7], 1
    %s3920 = scalar_lea.sflag [#allocation7], 1
    %3921 = vsyncpa %s3920, 1
    %3922 = vsyncpa [#allocation10], 1
    %s3923 = scalar_lea.sflag [#allocation10], 1
    %3924 = vsyncpa %s3923, 1
    %3925 = vsyncpa [#allocation13], 1
    %s3926 = scalar_lea.sflag [#allocation13], 1
    %3927 = vsyncpa %s3926, 1
    %3928 = vsyncpa [#allocation16], 1
    %3929 = vsyncpa [#allocation5], 1
    %s3930 = scalar_lea.sflag [#allocation5], 1
    %3931 = vsyncpa %s3930, 1

</llo_original>
